<compile_context>
chip_gen: v7x
topology: tpu7x:2x2x1
jax: 0.10.0
libtpu: 0.0.40
codegen_flags: <defaults>
</compile_context>

<pallas_src>
import jax
import jax.numpy as jnp
from jax.experimental import pallas as pl
from jax.experimental.pallas import tpu as pltpu


# ------------------------------ fused kernel ------------------------------

def dnn5_fused_kernel(x_ref, a1_ref, b1_ref, a2_ref, b2_ref, w1r_ref, bf1_ref,
                      w2_ref, bf2_ref, w3_ref, bf3_ref, out_ref, h1buf):
    f32 = jnp.float32

    # ---- conv1 + ReLU: rows y (14), lanes c1*14 + x (224) ----
    # x_ref is the per-image input with one zero row above/below (16, 14);
    # the dy in {-1,0,+1} shift is a static-offset read of it.
    acc1 = jnp.zeros((14, 224), f32)
    for dy in range(3):
        xs = x_ref[dy:dy + 14, :]                                    # (14, 14)
        acc1 = acc1 + jnp.dot(xs, a1_ref[dy], preferred_element_type=f32)
    h1 = jnp.maximum(acc1 + b1_ref[...], 0.0)                        # (14, 224)

    # Stash h1 with one zero row above/below (single aligned full-tile store)
    # so conv2's dy shifts are static-offset reads.
    h1buf[...] = jnp.pad(h1, ((1, 1), (0, 0)))                       # (16, 224)

    # ---- conv2 + ReLU: lanes (x % 2)*256 + c2*7 + x//2 (512) ----
    acc2 = jnp.zeros((14, 512), f32)
    for dy in range(3):
        hs = h1buf[dy:dy + 14, :]                                    # (14, 224)
        acc2 = acc2 + jnp.dot(hs, a2_ref[dy].astype(f32),
                              preferred_element_type=f32)
    h2 = jnp.maximum(acc2 + b2_ref[...], 0.0)                        # (14, 512)

    # ---- 2x2 max pool ----
    # x-pool: even-x / odd-x columns were routed to the two 256-lane halves.
    xp = jnp.maximum(h2[:, 0:256], h2[:, 256:512])                   # (14, 256)
    # y-pool folded into the fc1 contraction: one adjacent-row slab per yo.
    # TODO(synk): nn.Dropout(0.25) after the pool is identity in eval mode;
    # training-mode RNG mask is not implemented.
    acc = jnp.zeros((1, 128), f32)
    for yo in range(7):
        slab = jnp.maximum(xp[2 * yo:2 * yo + 1, :],
                           xp[2 * yo + 1:2 * yo + 2, :])             # (1, 256)
        acc = acc + jnp.dot(slab, w1r_ref[yo].astype(f32),
                            preferred_element_type=f32)

    # ---- MLP head: fc1 bias/relu -> fc2 -> relu -> fc3 ----
    h = jnp.maximum(acc + bf1_ref[...], 0.0)                         # (1, 128)
    h = jnp.maximum(jnp.dot(h, w2_ref[...], preferred_element_type=f32)
                    + bf2_ref[...], 0.0)                             # (1, 64)
    out_ref[...] = (jnp.dot(h, w3_ref[...], preferred_element_type=f32)
                    + bf3_ref[...])                                  # (1, 10)


# --------------------------- parameter plumbing ---------------------------

def init_params(key):
    """Deterministic synthetic init (PyTorch-like uniform(-1/sqrt(fan_in), .))."""
    ks = jax.random.split(key, 10)

    def u(k, shape, fan_in):
        bound = 1.0 / float(fan_in) ** 0.5
        return jax.random.uniform(k, shape, jnp.float32, -bound, bound)

    return dict(
        w_c1=u(ks[0], (3, 3, 1, 16), 9),      b_c1=u(ks[1], (16,), 9),     # HWIO
        w_c2=u(ks[2], (3, 3, 16, 32), 144),   b_c2=u(ks[3], (32,), 144),   # HWIO
        w_f1=u(ks[4], (1568, 128), 1568),     b_f1=u(ks[5], (128,), 1568),
        w_f2=u(ks[6], (128, 64), 128),        b_f2=u(ks[7], (64,), 128),
        w_f3=u(ks[8], (64, 10), 64),          b_f3=u(ks[9], (10,), 64),
    )


def _round_bf16(w):
    return w.astype(jnp.bfloat16).astype(jnp.float32)


def prepare_params(params):
    """One-time (init-time) repack of the PyTorch-layout weights into the
    lane-structured constants the fused kernel consumes."""
    f32 = jnp.float32
    xi = jnp.arange(14)
    dxs = jnp.arange(3)
    # S[dx, xp, x] = 1 iff xp == x + dx - 1 (the horizontal tap indicator).
    S = (xi[None, :, None] == (xi[None, None, :] + dxs[:, None, None] - 1)
         ).astype(f32)                                               # (3, 14, 14)

    # conv1 lane-map: A1[dy, xp, c1*14 + x] = w1[dy, dx, 0, c1] for xp = x+dx-1.
    w1 = params["w_c1"]
    A1 = jnp.einsum("apx,dac->dpcx", S, w1[:, :, 0, :]).reshape(3, 14, 224)
    b1l = jnp.broadcast_to(params["b_c1"][:, None], (16, 14)).reshape(1, 224)

    # conv2 lane-map: A2[dy, c1*14 + xp, (x%2)*256 + c2*7 + x//2] = w2[dy,dx,c1,c2].
    w2 = params["w_c2"]
    T = jnp.einsum("apx,dacf->dcpfx", S, w2)         # (3,16,14,32,14) [dy,c1,xp,c2,x]
    T = T.reshape(3, 16, 14, 32, 7, 2)               # x -> (x//2, x%2)
    T = T.transpose(0, 1, 2, 5, 3, 4)                # [dy, c1, xp, x%2, c2, x//2]
    T = T.reshape(3, 224, 2, 224)
    T = jnp.pad(T, ((0, 0), (0, 0), (0, 0), (0, 32)))    # pad each half 224 -> 256
    A2 = T.reshape(3, 224, 512).astype(jnp.bfloat16)
    b2half = jnp.pad(
        jnp.broadcast_to(params["b_c2"][:, None], (32, 7)).reshape(224), (0, 32))
    b2l = jnp.concatenate([b2half, b2half]).reshape(1, 512)

    # fc1 weight: fold the PyTorch NCHW flatten (k = c*49 + yo*7 + xo) into a
    # per-yo, lane-order (c*7 + xo) weight; pad rows 224 -> 256 with zeros.
    W1r = params["w_f1"].reshape(32, 7, 7, 128).transpose(1, 0, 2, 3)
    W1r = W1r.reshape(7, 224, 128)
    W1r = jnp.pad(W1r, ((0, 0), (0, 32), (0, 0))).astype(jnp.bfloat16)

    return dict(
        a1=A1, b1=b1l, a2=A2, b2=b2l, w1r=W1r,
        bf1=params["b_f1"].reshape(1, 128),
        w2=params["w_f2"], bf2=params["b_f2"].reshape(1, 64),
        w3=params["w_f3"], bf3=params["b_f3"].reshape(1, 10),
    )


# -------------------------------- forward --------------------------------

def dnn5_forward(x, kp):
    xin = x.reshape(-1, 14, 14).astype(jnp.float32)       # x.view(-1, 1, 14, 14)
    B = xin.shape[0]
    xpad = jnp.pad(xin, ((0, 0), (1, 1), (0, 0)))          # (B, 16, 14), zero rows

    out = pl.pallas_call(
        dnn5_fused_kernel,
        out_shape=jax.ShapeDtypeStruct((B, 1, 10), jnp.float32),
        grid=(B,),
        in_specs=[
            pl.BlockSpec((None, 16, 14), lambda b: (b, 0, 0)),   # per-image input
            pl.BlockSpec((3, 14, 224), lambda b: (0, 0, 0)),     # conv1 lane-map
            pl.BlockSpec((1, 224), lambda b: (0, 0)),            # conv1 bias
            pl.BlockSpec((3, 224, 512), lambda b: (0, 0, 0)),    # conv2 lane-map (bf16)
            pl.BlockSpec((1, 512), lambda b: (0, 0)),            # conv2 bias
            pl.BlockSpec((7, 256, 128), lambda b: (0, 0, 0)),    # fc1 weight (bf16)
            pl.BlockSpec((1, 128), lambda b: (0, 0)),            # fc1 bias
            pl.BlockSpec((128, 64), lambda b: (0, 0)),           # fc2 weight
            pl.BlockSpec((1, 64), lambda b: (0, 0)),             # fc2 bias
            pl.BlockSpec((64, 10), lambda b: (0, 0)),            # fc3 weight
            pl.BlockSpec((1, 10), lambda b: (0, 0)),             # fc3 bias
        ],
        out_specs=pl.BlockSpec((None, 1, 10), lambda b: (b, 0, 0)),
        scratch_shapes=[pltpu.VMEM((16, 224), jnp.float32)],     # padded conv1 act
        compiler_params=pltpu.CompilerParams(
            dimension_semantics=("parallel",)),
    )(xpad, kp["a1"], kp["b1"], kp["a2"], kp["b2"], kp["w1r"], kp["bf1"],
      kp["w2"], kp["bf2"], kp["w3"], kp["bf3"])

    return out.reshape(B, 10)


# ------------------------- pure-JAX reference (check) ----------------------

def dnn5_reference(x, params):
    hi = jax.lax.Precision.HIGHEST
    dn = ("NCHW", "HWIO", "NCHW")
    xr = x.reshape(-1, 1, 14, 14).astype(jnp.float32)
    h = jax.lax.conv_general_dilated(xr, params["w_c1"], (1, 1),
                                     ((1, 1), (1, 1)), dimension_numbers=dn,
                                     precision=hi)
    h = jax.nn.relu(h + params["b_c1"].reshape(1, 16, 1, 1))
    h = jax.lax.conv_general_dilated(h, _round_bf16(params["w_c2"]), (1, 1),
                                     ((1, 1), (1, 1)), dimension_numbers=dn,
                                     precision=hi)
    h = jax.nn.relu(h + params["b_c2"].reshape(1, 32, 1, 1))
    h = h.reshape(h.shape[0], 32, 7, 2, 7, 2).max(axis=(3, 5))   # MaxPool2d(2, 2)
    h = h.reshape(h.shape[0], 32 * 7 * 7)                        # NCHW flatten
    h = jax.nn.relu(jnp.dot(h, _round_bf16(params["w_f1"]), precision=hi)
                    + params["b_f1"])
    h = jax.nn.relu(jnp.dot(h, params["w_f2"], precision=hi) + params["b_f2"])
    return jnp.dot(h, params["w_f3"], precision=hi) + params["b_f3"]


if __name__ == "__main__":
    key = jax.random.PRNGKey(0)
    kx, kparam = jax.random.split(key)
    x = jax.random.normal(kx, (2, 1, 14, 14), jnp.float32)
    params = init_params(kparam)
    kparams = prepare_params(params)

    out = jax.block_until_ready(jax.jit(dnn5_forward)(x, kparams))

    assert out.shape == (2, 10) and out.dtype == jnp.float32
    assert bool(jnp.all(jnp.isfinite(out)))

    ref = dnn5_reference(x, params)
    max_err = float(jnp.max(jnp.abs(out - ref)))
    tol = 5e-3 + 2e-2 * float(jnp.max(jnp.abs(ref)))
    assert max_err < tol, f"kernel/reference mismatch: {max_err} (tol {tol})"
    print("KERNEL_OK")
</pallas_src>

<mosaic_0001>
module attributes {stable_mosaic.version = 11 : i64} {
  func.func @dnn5_fused_kernel(%arg0: i32, %arg1: memref<1x16x14xf32, #tpu.memory_space<vmem>>, %arg2: memref<3x14x224xf32, #tpu.memory_space<vmem>>, %arg3: memref<1x224xf32, #tpu.memory_space<vmem>>, %arg4: memref<3x224x512xbf16, #tpu.memory_space<vmem>>, %arg5: memref<1x512xf32, #tpu.memory_space<vmem>>, %arg6: memref<7x256x128xbf16, #tpu.memory_space<vmem>>, %arg7: memref<1x128xf32, #tpu.memory_space<vmem>>, %arg8: memref<128x64xf32, #tpu.memory_space<vmem>>, %arg9: memref<1x64xf32, #tpu.memory_space<vmem>>, %arg10: memref<64x10xf32, #tpu.memory_space<vmem>>, %arg11: memref<1x10xf32, #tpu.memory_space<vmem>>, %arg12: memref<1x1x10xf32, #tpu.memory_space<vmem>>, %arg13: memref<16x224xf32, #tpu.memory_space<vmem>>) attributes {dimension_semantics = [#tpu.dimension_semantics<parallel>], iteration_bounds = array<i64: 2>, scalar_prefetch = 0 : i64, scratch_operands = 1 : i64, tpu.core_type = #tpu.core_type<tc>, window_params = [{transform_indices = @transform_0, window_bounds = array<i64: 1, 16, 14>}, {pipeline_mode = #tpu.pipeline_mode<synchronous>, transform_indices = @transform_1, window_bounds = array<i64: 3, 14, 224>}, {pipeline_mode = #tpu.pipeline_mode<synchronous>, transform_indices = @transform_2, window_bounds = array<i64: 1, 224>}, {pipeline_mode = #tpu.pipeline_mode<synchronous>, transform_indices = @transform_3, window_bounds = array<i64: 3, 224, 512>}, {pipeline_mode = #tpu.pipeline_mode<synchronous>, transform_indices = @transform_4, window_bounds = array<i64: 1, 512>}, {pipeline_mode = #tpu.pipeline_mode<synchronous>, transform_indices = @transform_5, window_bounds = array<i64: 7, 256, 128>}, {pipeline_mode = #tpu.pipeline_mode<synchronous>, transform_indices = @transform_6, window_bounds = array<i64: 1, 128>}, {pipeline_mode = #tpu.pipeline_mode<synchronous>, transform_indices = @transform_7, window_bounds = array<i64: 128, 64>}, {pipeline_mode = #tpu.pipeline_mode<synchronous>, transform_indices = @transform_8, window_bounds = array<i64: 1, 64>}, {pipeline_mode = #tpu.pipeline_mode<synchronous>, transform_indices = @transform_9, window_bounds = array<i64: 64, 10>}, {pipeline_mode = #tpu.pipeline_mode<synchronous>, transform_indices = @transform_10, window_bounds = array<i64: 1, 10>}, {transform_indices = @transform_11, window_bounds = array<i64: 1, 1, 10>}]} {
    %cst = arith.constant 0.000000e+00 : f32
    %0 = vector.broadcast %cst : f32 to vector<14x224xf32>
    %c0 = arith.constant 0 : index
    %c0_0 = arith.constant 0 : index
    %c0_1 = arith.constant 0 : index
    %1 = vector.load %arg1[%c0, %c0_0, %c0_1] : memref<1x16x14xf32, #tpu.memory_space<vmem>>, vector<1x14x14xf32>
    %2 = vector.shape_cast %1 : vector<1x14x14xf32> to vector<14x14xf32>
    %c0_2 = arith.constant 0 : index
    %c0_3 = arith.constant 0 : index
    %c0_4 = arith.constant 0 : index
    %3 = vector.load %arg2[%c0_2, %c0_3, %c0_4] : memref<3x14x224xf32, #tpu.memory_space<vmem>>, vector<1x14x224xf32>
    %4 = vector.shape_cast %3 : vector<1x14x224xf32> to vector<14x224xf32>
    %cst_5 = arith.constant dense<0.000000e+00> : vector<14x224xf32>
    %5 = tpu.matmul %2, %4, %cst_5 {dimension_numbers = #tpu.dot_dimension_numbers<[1], [0], [0], [1], [0, 0, 1, 1], [], []>} : vector<14x14xf32>, vector<14x224xf32>, vector<14x224xf32> -> vector<14x224xf32>
    %6 = arith.addf %0, %5 : vector<14x224xf32>
    %c0_6 = arith.constant 0 : index
    %c1 = arith.constant 1 : index
    %c0_7 = arith.constant 0 : index
    %7 = vector.load %arg1[%c0_6, %c1, %c0_7] : memref<1x16x14xf32, #tpu.memory_space<vmem>>, vector<1x14x14xf32>
    %8 = vector.shape_cast %7 : vector<1x14x14xf32> to vector<14x14xf32>
    %c1_8 = arith.constant 1 : index
    %c0_9 = arith.constant 0 : index
    %c0_10 = arith.constant 0 : index
    %9 = vector.load %arg2[%c1_8, %c0_9, %c0_10] : memref<3x14x224xf32, #tpu.memory_space<vmem>>, vector<1x14x224xf32>
    %10 = vector.shape_cast %9 : vector<1x14x224xf32> to vector<14x224xf32>
    %cst_11 = arith.constant dense<0.000000e+00> : vector<14x224xf32>
    %11 = tpu.matmul %8, %10, %cst_11 {dimension_numbers = #tpu.dot_dimension_numbers<[1], [0], [0], [1], [0, 0, 1, 1], [], []>} : vector<14x14xf32>, vector<14x224xf32>, vector<14x224xf32> -> vector<14x224xf32>
    %12 = arith.addf %6, %11 : vector<14x224xf32>
    %c0_12 = arith.constant 0 : index
    %c2 = arith.constant 2 : index
    %c0_13 = arith.constant 0 : index
    %13 = vector.load %arg1[%c0_12, %c2, %c0_13] : memref<1x16x14xf32, #tpu.memory_space<vmem>>, vector<1x14x14xf32>
    %14 = vector.shape_cast %13 : vector<1x14x14xf32> to vector<14x14xf32>
    %c2_14 = arith.constant 2 : index
    %c0_15 = arith.constant 0 : index
    %c0_16 = arith.constant 0 : index
    %15 = vector.load %arg2[%c2_14, %c0_15, %c0_16] : memref<3x14x224xf32, #tpu.memory_space<vmem>>, vector<1x14x224xf32>
    %16 = vector.shape_cast %15 : vector<1x14x224xf32> to vector<14x224xf32>
    %cst_17 = arith.constant dense<0.000000e+00> : vector<14x224xf32>
    %17 = tpu.matmul %14, %16, %cst_17 {dimension_numbers = #tpu.dot_dimension_numbers<[1], [0], [0], [1], [0, 0, 1, 1], [], []>} : vector<14x14xf32>, vector<14x224xf32>, vector<14x224xf32> -> vector<14x224xf32>
    %18 = arith.addf %12, %17 : vector<14x224xf32>
    %c0_18 = arith.constant 0 : index
    %c0_19 = arith.constant 0 : index
    %19 = vector.load %arg3[%c0_18, %c0_19] : memref<1x224xf32, #tpu.memory_space<vmem>>, vector<1x224xf32>
    %20 = vector.broadcast %19 : vector<1x224xf32> to vector<14x224xf32>
    %21 = arith.addf %18, %20 : vector<14x224xf32>
    %cst_20 = arith.constant 0.000000e+00 : f32
    %22 = vector.broadcast %cst_20 : f32 to vector<14x224xf32>
    %23 = arith.maximumf %21, %22 : vector<14x224xf32>
    %c0_i32 = arith.constant 0 : i32
    %24 = arith.sitofp %c0_i32 : i32 to f32
    %25 = vector.broadcast %24 : f32 to vector<1x224xf32>
    %26 = tpu.concatenate %25, %23 in 0 : vector<1x224xf32>, vector<14x224xf32> -> vector<15x224xf32>
    %27 = vector.broadcast %24 : f32 to vector<1x224xf32>
    %28 = tpu.concatenate %26, %27 in 0 : vector<15x224xf32>, vector<1x224xf32> -> vector<16x224xf32>
    %c0_21 = arith.constant 0 : index
    %c0_22 = arith.constant 0 : index
    %29 = vector.load %arg13[%c0_21, %c0_22] : memref<16x224xf32, #tpu.memory_space<vmem>>, vector<16x224xf32>
    tpu.vector_store %arg13[%c0_21, %c0_22], %28 {strides = array<i32>} : memref<16x224xf32, #tpu.memory_space<vmem>>, vector<16x224xf32>,
    %cst_23 = arith.constant 0.000000e+00 : f32
    %30 = vector.broadcast %cst_23 : f32 to vector<14x512xf32>
    %c0_24 = arith.constant 0 : index
    %c0_25 = arith.constant 0 : index
    %31 = vector.load %arg13[%c0_24, %c0_25] : memref<16x224xf32, #tpu.memory_space<vmem>>, vector<14x224xf32>
    %c0_26 = arith.constant 0 : index
    %c0_27 = arith.constant 0 : index
    %c0_28 = arith.constant 0 : index
    %32 = vector.load %arg4[%c0_26, %c0_27, %c0_28] : memref<3x224x512xbf16, #tpu.memory_space<vmem>>, vector<1x224x512xbf16>
    %33 = vector.shape_cast %32 : vector<1x224x512xbf16> to vector<224x512xbf16>
    %34 = arith.extf %33 : vector<224x512xbf16> to vector<224x512xf32>
    %cst_29 = arith.constant dense<0.000000e+00> : vector<14x512xf32>
    %35 = tpu.matmul %31, %34, %cst_29 {dimension_numbers = #tpu.dot_dimension_numbers<[1], [0], [0], [1], [0, 0, 1, 1], [], []>} : vector<14x224xf32>, vector<224x512xf32>, vector<14x512xf32> -> vector<14x512xf32>
    %36 = arith.addf %30, %35 : vector<14x512xf32>
    %c1_30 = arith.constant 1 : index
    %c0_31 = arith.constant 0 : index
    %37 = vector.load %arg13[%c1_30, %c0_31] : memref<16x224xf32, #tpu.memory_space<vmem>>, vector<14x224xf32>
    %c1_32 = arith.constant 1 : index
    %c0_33 = arith.constant 0 : index
    %c0_34 = arith.constant 0 : index
    %38 = vector.load %arg4[%c1_32, %c0_33, %c0_34] : memref<3x224x512xbf16, #tpu.memory_space<vmem>>, vector<1x224x512xbf16>
    %39 = vector.shape_cast %38 : vector<1x224x512xbf16> to vector<224x512xbf16>
    %40 = arith.extf %39 : vector<224x512xbf16> to vector<224x512xf32>
    %cst_35 = arith.constant dense<0.000000e+00> : vector<14x512xf32>
    %41 = tpu.matmul %37, %40, %cst_35 {dimension_numbers = #tpu.dot_dimension_numbers<[1], [0], [0], [1], [0, 0, 1, 1], [], []>} : vector<14x224xf32>, vector<224x512xf32>, vector<14x512xf32> -> vector<14x512xf32>
    %42 = arith.addf %36, %41 : vector<14x512xf32>
    %c2_36 = arith.constant 2 : index
    %c0_37 = arith.constant 0 : index
    %43 = vector.load %arg13[%c2_36, %c0_37] : memref<16x224xf32, #tpu.memory_space<vmem>>, vector<14x224xf32>
    %c2_38 = arith.constant 2 : index
    %c0_39 = arith.constant 0 : index
    %c0_40 = arith.constant 0 : index
    %44 = vector.load %arg4[%c2_38, %c0_39, %c0_40] : memref<3x224x512xbf16, #tpu.memory_space<vmem>>, vector<1x224x512xbf16>
    %45 = vector.shape_cast %44 : vector<1x224x512xbf16> to vector<224x512xbf16>
    %46 = arith.extf %45 : vector<224x512xbf16> to vector<224x512xf32>
    %cst_41 = arith.constant dense<0.000000e+00> : vector<14x512xf32>
    %47 = tpu.matmul %43, %46, %cst_41 {dimension_numbers = #tpu.dot_dimension_numbers<[1], [0], [0], [1], [0, 0, 1, 1], [], []>} : vector<14x224xf32>, vector<224x512xf32>, vector<14x512xf32> -> vector<14x512xf32>
    %48 = arith.addf %42, %47 : vector<14x512xf32>
    %c0_42 = arith.constant 0 : index
    %c0_43 = arith.constant 0 : index
    %49 = vector.load %arg5[%c0_42, %c0_43] : memref<1x512xf32, #tpu.memory_space<vmem>>, vector<1x512xf32>
    %50 = vector.broadcast %49 : vector<1x512xf32> to vector<14x512xf32>
    %51 = arith.addf %48, %50 : vector<14x512xf32>
    %cst_44 = arith.constant 0.000000e+00 : f32
    %52 = vector.broadcast %cst_44 : f32 to vector<14x512xf32>
    %53 = arith.maximumf %51, %52 : vector<14x512xf32>
    %54 = vector.extract_strided_slice %53 {offsets = [0, 0], sizes = [14, 256], strides = [1, 1]} : vector<14x512xf32> to vector<14x256xf32>
    %55 = vector.extract_strided_slice %53 {offsets = [0, 256], sizes = [14, 256], strides = [1, 1]} : vector<14x512xf32> to vector<14x256xf32>
    %56 = arith.maximumf %54, %55 : vector<14x256xf32>
    %cst_45 = arith.constant 0.000000e+00 : f32
    %57 = vector.broadcast %cst_45 : f32 to vector<1x128xf32>
    %58 = vector.extract_strided_slice %56 {offsets = [0, 0], sizes = [1, 256], strides = [1, 1]} : vector<14x256xf32> to vector<1x256xf32>
    %59 = vector.extract_strided_slice %56 {offsets = [1, 0], sizes = [1, 256], strides = [1, 1]} : vector<14x256xf32> to vector<1x256xf32>
    %60 = arith.maximumf %58, %59 : vector<1x256xf32>
    %c0_46 = arith.constant 0 : index
    %c0_47 = arith.constant 0 : index
    %c0_48 = arith.constant 0 : index
    %61 = vector.load %arg6[%c0_46, %c0_47, %c0_48] : memref<7x256x128xbf16, #tpu.memory_space<vmem>>, vector<1x256x128xbf16>
    %62 = vector.shape_cast %61 : vector<1x256x128xbf16> to vector<256x128xbf16>
    %63 = arith.extf %62 : vector<256x128xbf16> to vector<256x128xf32>
    %cst_49 = arith.constant dense<0.000000e+00> : vector<1x128xf32>
    %64 = tpu.matmul %60, %63, %cst_49 {dimension_numbers = #tpu.dot_dimension_numbers<[1], [0], [0], [1], [0, 0, 1, 1], [], []>} : vector<1x256xf32>, vector<256x128xf32>, vector<1x128xf32> -> vector<1x128xf32>
    %65 = arith.addf %57, %64 : vector<1x128xf32>
    %66 = vector.extract_strided_slice %56 {offsets = [2, 0], sizes = [1, 256], strides = [1, 1]} : vector<14x256xf32> to vector<1x256xf32>
    %67 = vector.extract_strided_slice %56 {offsets = [3, 0], sizes = [1, 256], strides = [1, 1]} : vector<14x256xf32> to vector<1x256xf32>
    %68 = arith.maximumf %66, %67 : vector<1x256xf32>
    %c1_50 = arith.constant 1 : index
    %c0_51 = arith.constant 0 : index
    %c0_52 = arith.constant 0 : index
    %69 = vector.load %arg6[%c1_50, %c0_51, %c0_52] : memref<7x256x128xbf16, #tpu.memory_space<vmem>>, vector<1x256x128xbf16>
    %70 = vector.shape_cast %69 : vector<1x256x128xbf16> to vector<256x128xbf16>
    %71 = arith.extf %70 : vector<256x128xbf16> to vector<256x128xf32>
    %cst_53 = arith.constant dense<0.000000e+00> : vector<1x128xf32>
    %72 = tpu.matmul %68, %71, %cst_53 {dimension_numbers = #tpu.dot_dimension_numbers<[1], [0], [0], [1], [0, 0, 1, 1], [], []>} : vector<1x256xf32>, vector<256x128xf32>, vector<1x128xf32> -> vector<1x128xf32>
    %73 = arith.addf %65, %72 : vector<1x128xf32>
    %74 = vector.extract_strided_slice %56 {offsets = [4, 0], sizes = [1, 256], strides = [1, 1]} : vector<14x256xf32> to vector<1x256xf32>
    %75 = vector.extract_strided_slice %56 {offsets = [5, 0], sizes = [1, 256], strides = [1, 1]} : vector<14x256xf32> to vector<1x256xf32>
    %76 = arith.maximumf %74, %75 : vector<1x256xf32>
    %c2_54 = arith.constant 2 : index
    %c0_55 = arith.constant 0 : index
    %c0_56 = arith.constant 0 : index
    %77 = vector.load %arg6[%c2_54, %c0_55, %c0_56] : memref<7x256x128xbf16, #tpu.memory_space<vmem>>, vector<1x256x128xbf16>
    %78 = vector.shape_cast %77 : vector<1x256x128xbf16> to vector<256x128xbf16>
    %79 = arith.extf %78 : vector<256x128xbf16> to vector<256x128xf32>
    %cst_57 = arith.constant dense<0.000000e+00> : vector<1x128xf32>
    %80 = tpu.matmul %76, %79, %cst_57 {dimension_numbers = #tpu.dot_dimension_numbers<[1], [0], [0], [1], [0, 0, 1, 1], [], []>} : vector<1x256xf32>, vector<256x128xf32>, vector<1x128xf32> -> vector<1x128xf32>
    %81 = arith.addf %73, %80 : vector<1x128xf32>
    %82 = vector.extract_strided_slice %56 {offsets = [6, 0], sizes = [1, 256], strides = [1, 1]} : vector<14x256xf32> to vector<1x256xf32>
    %83 = vector.extract_strided_slice %56 {offsets = [7, 0], sizes = [1, 256], strides = [1, 1]} : vector<14x256xf32> to vector<1x256xf32>
    %84 = arith.maximumf %82, %83 : vector<1x256xf32>
    %c3 = arith.constant 3 : index
    %c0_58 = arith.constant 0 : index
    %c0_59 = arith.constant 0 : index
    %85 = vector.load %arg6[%c3, %c0_58, %c0_59] : memref<7x256x128xbf16, #tpu.memory_space<vmem>>, vector<1x256x128xbf16>
    %86 = vector.shape_cast %85 : vector<1x256x128xbf16> to vector<256x128xbf16>
    %87 = arith.extf %86 : vector<256x128xbf16> to vector<256x128xf32>
    %cst_60 = arith.constant dense<0.000000e+00> : vector<1x128xf32>
    %88 = tpu.matmul %84, %87, %cst_60 {dimension_numbers = #tpu.dot_dimension_numbers<[1], [0], [0], [1], [0, 0, 1, 1], [], []>} : vector<1x256xf32>, vector<256x128xf32>, vector<1x128xf32> -> vector<1x128xf32>
    %89 = arith.addf %81, %88 : vector<1x128xf32>
    %90 = vector.extract_strided_slice %56 {offsets = [8, 0], sizes = [1, 256], strides = [1, 1]} : vector<14x256xf32> to vector<1x256xf32>
    %91 = vector.extract_strided_slice %56 {offsets = [9, 0], sizes = [1, 256], strides = [1, 1]} : vector<14x256xf32> to vector<1x256xf32>
    %92 = arith.maximumf %90, %91 : vector<1x256xf32>
    %c4 = arith.constant 4 : index
    %c0_61 = arith.constant 0 : index
    %c0_62 = arith.constant 0 : index
    %93 = vector.load %arg6[%c4, %c0_61, %c0_62] : memref<7x256x128xbf16, #tpu.memory_space<vmem>>, vector<1x256x128xbf16>
    %94 = vector.shape_cast %93 : vector<1x256x128xbf16> to vector<256x128xbf16>
    %95 = arith.extf %94 : vector<256x128xbf16> to vector<256x128xf32>
    %cst_63 = arith.constant dense<0.000000e+00> : vector<1x128xf32>
    %96 = tpu.matmul %92, %95, %cst_63 {dimension_numbers = #tpu.dot_dimension_numbers<[1], [0], [0], [1], [0, 0, 1, 1], [], []>} : vector<1x256xf32>, vector<256x128xf32>, vector<1x128xf32> -> vector<1x128xf32>
    %97 = arith.addf %89, %96 : vector<1x128xf32>
    %98 = vector.extract_strided_slice %56 {offsets = [10, 0], sizes = [1, 256], strides = [1, 1]} : vector<14x256xf32> to vector<1x256xf32>
    %99 = vector.extract_strided_slice %56 {offsets = [11, 0], sizes = [1, 256], strides = [1, 1]} : vector<14x256xf32> to vector<1x256xf32>
    %100 = arith.maximumf %98, %99 : vector<1x256xf32>
    %c5 = arith.constant 5 : index
    %c0_64 = arith.constant 0 : index
    %c0_65 = arith.constant 0 : index
    %101 = vector.load %arg6[%c5, %c0_64, %c0_65] : memref<7x256x128xbf16, #tpu.memory_space<vmem>>, vector<1x256x128xbf16>
    %102 = vector.shape_cast %101 : vector<1x256x128xbf16> to vector<256x128xbf16>
    %103 = arith.extf %102 : vector<256x128xbf16> to vector<256x128xf32>
    %cst_66 = arith.constant dense<0.000000e+00> : vector<1x128xf32>
    %104 = tpu.matmul %100, %103, %cst_66 {dimension_numbers = #tpu.dot_dimension_numbers<[1], [0], [0], [1], [0, 0, 1, 1], [], []>} : vector<1x256xf32>, vector<256x128xf32>, vector<1x128xf32> -> vector<1x128xf32>
    %105 = arith.addf %97, %104 : vector<1x128xf32>
    %106 = vector.extract_strided_slice %56 {offsets = [12, 0], sizes = [1, 256], strides = [1, 1]} : vector<14x256xf32> to vector<1x256xf32>
    %107 = vector.extract_strided_slice %56 {offsets = [13, 0], sizes = [1, 256], strides = [1, 1]} : vector<14x256xf32> to vector<1x256xf32>
    %108 = arith.maximumf %106, %107 : vector<1x256xf32>
    %c6 = arith.constant 6 : index
    %c0_67 = arith.constant 0 : index
    %c0_68 = arith.constant 0 : index
    %109 = vector.load %arg6[%c6, %c0_67, %c0_68] : memref<7x256x128xbf16, #tpu.memory_space<vmem>>, vector<1x256x128xbf16>
    %110 = vector.shape_cast %109 : vector<1x256x128xbf16> to vector<256x128xbf16>
    %111 = arith.extf %110 : vector<256x128xbf16> to vector<256x128xf32>
    %cst_69 = arith.constant dense<0.000000e+00> : vector<1x128xf32>
    %112 = tpu.matmul %108, %111, %cst_69 {dimension_numbers = #tpu.dot_dimension_numbers<[1], [0], [0], [1], [0, 0, 1, 1], [], []>} : vector<1x256xf32>, vector<256x128xf32>, vector<1x128xf32> -> vector<1x128xf32>
    %113 = arith.addf %105, %112 : vector<1x128xf32>
    %c0_70 = arith.constant 0 : index
    %c0_71 = arith.constant 0 : index
    %114 = vector.load %arg7[%c0_70, %c0_71] : memref<1x128xf32, #tpu.memory_space<vmem>>, vector<1x128xf32>
    %115 = arith.addf %113, %114 : vector<1x128xf32>
    %cst_72 = arith.constant 0.000000e+00 : f32
    %116 = vector.broadcast %cst_72 : f32 to vector<1x128xf32>
    %117 = arith.maximumf %115, %116 : vector<1x128xf32>
    %c0_73 = arith.constant 0 : index
    %c0_74 = arith.constant 0 : index
    %118 = vector.load %arg8[%c0_73, %c0_74] : memref<128x64xf32, #tpu.memory_space<vmem>>, vector<128x64xf32>
    %cst_75 = arith.constant dense<0.000000e+00> : vector<1x64xf32>
    %119 = tpu.matmul %117, %118, %cst_75 {dimension_numbers = #tpu.dot_dimension_numbers<[1], [0], [0], [1], [0, 0, 1, 1], [], []>} : vector<1x128xf32>, vector<128x64xf32>, vector<1x64xf32> -> vector<1x64xf32>
    %c0_76 = arith.constant 0 : index
    %c0_77 = arith.constant 0 : index
    %120 = vector.load %arg9[%c0_76, %c0_77] : memref<1x64xf32, #tpu.memory_space<vmem>>, vector<1x64xf32>
    %121 = arith.addf %119, %120 : vector<1x64xf32>
    %cst_78 = arith.constant 0.000000e+00 : f32
    %122 = vector.broadcast %cst_78 : f32 to vector<1x64xf32>
    %123 = arith.maximumf %121, %122 : vector<1x64xf32>
    %c0_79 = arith.constant 0 : index
    %c0_80 = arith.constant 0 : index
    %124 = vector.load %arg10[%c0_79, %c0_80] : memref<64x10xf32, #tpu.memory_space<vmem>>, vector<64x10xf32>
    %cst_81 = arith.constant dense<0.000000e+00> : vector<1x10xf32>
    %125 = tpu.matmul %123, %124, %cst_81 {dimension_numbers = #tpu.dot_dimension_numbers<[1], [0], [0], [1], [0, 0, 1, 1], [], []>} : vector<1x64xf32>, vector<64x10xf32>, vector<1x10xf32> -> vector<1x10xf32>
    %c0_82 = arith.constant 0 : index
    %c0_83 = arith.constant 0 : index
    %126 = vector.load %arg11[%c0_82, %c0_83] : memref<1x10xf32, #tpu.memory_space<vmem>>, vector<1x10xf32>
    %127 = arith.addf %125, %126 : vector<1x10xf32>
    %c0_84 = arith.constant 0 : index
    %c0_85 = arith.constant 0 : index
    %c0_86 = arith.constant 0 : index
    %128 = vector.load %arg12[%c0_84, %c0_85, %c0_86] : memref<1x1x10xf32, #tpu.memory_space<vmem>>, vector<1x1x10xf32>
    %129 = vector.shape_cast %128 : vector<1x1x10xf32> to vector<1x10xf32>
    %130 = vector.shape_cast %127 : vector<1x10xf32> to vector<1x1x10xf32>
    tpu.vector_store %arg12[%c0_84, %c0_85, %c0_86], %130 {strides = array<i32>} : memref<1x1x10xf32, #tpu.memory_space<vmem>>, vector<1x1x10xf32>,
    return
  }
  func.func @transform_0(%arg0: i32) -> (i32, i32, i32) {
    %c0_i32 = arith.constant 0 : i32
    %c0_i32_0 = arith.constant 0 : i32
    %c0_i32_1 = arith.constant 0 : i32
    return %arg0, %c0_i32, %c0_i32_0 : i32, i32, i32
  }
  func.func @transform_1(%arg0: i32) -> (i32, i32, i32) {
    %c0_i32 = arith.constant 0 : i32
    %c0_i32_0 = arith.constant 0 : i32
    %c0_i32_1 = arith.constant 0 : i32
    %c0_i32_2 = arith.constant 0 : i32
    return %c0_i32, %c0_i32_0, %c0_i32_1 : i32, i32, i32
  }
  func.func @transform_2(%arg0: i32) -> (i32, i32) {
    %c0_i32 = arith.constant 0 : i32
    %c0_i32_0 = arith.constant 0 : i32
    %c0_i32_1 = arith.constant 0 : i32
    return %c0_i32, %c0_i32_0 : i32, i32
  }
  func.func @transform_3(%arg0: i32) -> (i32, i32, i32) {
    %c0_i32 = arith.constant 0 : i32
    %c0_i32_0 = arith.constant 0 : i32
    %c0_i32_1 = arith.constant 0 : i32
    %c0_i32_2 = arith.constant 0 : i32
    return %c0_i32, %c0_i32_0, %c0_i32_1 : i32, i32, i32
  }
  func.func @transform_4(%arg0: i32) -> (i32, i32) {
    %c0_i32 = arith.constant 0 : i32
    %c0_i32_0 = arith.constant 0 : i32
    %c0_i32_1 = arith.constant 0 : i32
    return %c0_i32, %c0_i32_0 : i32, i32
  }
  func.func @transform_5(%arg0: i32) -> (i32, i32, i32) {
    %c0_i32 = arith.constant 0 : i32
    %c0_i32_0 = arith.constant 0 : i32
    %c0_i32_1 = arith.constant 0 : i32
    %c0_i32_2 = arith.constant 0 : i32
    return %c0_i32, %c0_i32_0, %c0_i32_1 : i32, i32, i32
  }
  func.func @transform_6(%arg0: i32) -> (i32, i32) {
    %c0_i32 = arith.constant 0 : i32
    %c0_i32_0 = arith.constant 0 : i32
    %c0_i32_1 = arith.constant 0 : i32
    return %c0_i32, %c0_i32_0 : i32, i32
  }
  func.func @transform_7(%arg0: i32) -> (i32, i32) {
    %c0_i32 = arith.constant 0 : i32
    %c0_i32_0 = arith.constant 0 : i32
    %c0_i32_1 = arith.constant 0 : i32
    return %c0_i32, %c0_i32_0 : i32, i32
  }
  func.func @transform_8(%arg0: i32) -> (i32, i32) {
    %c0_i32 = arith.constant 0 : i32
    %c0_i32_0 = arith.constant 0 : i32
    %c0_i32_1 = arith.constant 0 : i32
    return %c0_i32, %c0_i32_0 : i32, i32
  }
  func.func @transform_9(%arg0: i32) -> (i32, i32) {
    %c0_i32 = arith.constant 0 : i32
    %c0_i32_0 = arith.constant 0 : i32
    %c0_i32_1 = arith.constant 0 : i32
    return %c0_i32, %c0_i32_0 : i32, i32
  }
  func.func @transform_10(%arg0: i32) -> (i32, i32) {
    %c0_i32 = arith.constant 0 : i32
    %c0_i32_0 = arith.constant 0 : i32
    %c0_i32_1 = arith.constant 0 : i32
    return %c0_i32, %c0_i32_0 : i32, i32
  }
  func.func @transform_11(%arg0: i32) -> (i32, i32, i32) {
    %c0_i32 = arith.constant 0 : i32
    %c0_i32_0 = arith.constant 0 : i32
    %c0_i32_1 = arith.constant 0 : i32
    return %arg0, %c0_i32, %c0_i32_0 : i32, i32, i32
  }
}

</mosaic_0001>

<llo_original>
// kernel: dnn5_forward.1
$region0: #{dnn5_forward.1}
  #allocation0 [shape = 'u32[]', space=smem, size = 0x4, offset = 0x4, fixed_abs, tag = 'smem constant byte address 0x4 - core index']
  #allocation1 [shape = 'u32[144,128]{1,0:T(1,128)}', space=vmem, size = 0x12000, scoped, tag = 'internal scratch']
  #allocation2 [shape = 'f32[16,224]{1,0:T(8,128)}', space=vmem, size = 0x4000, scoped, tag = 'scratch operand']
  %s0 = inlined_call_operand.vmem [shape: f32[2,16,14], index: 0, kind: input, shape index: {}]
  %s1 = inlined_call_operand.vmem [shape: f32[3,14,224], index: 1, kind: input, shape index: {}]
  %s2 = inlined_call_operand.vmem [shape: f32[1,224], index: 2, kind: input, shape index: {}]
  %s3 = inlined_call_operand.hbm [shape: bf16[3,224,512], index: 3, kind: input, shape index: {}]
  %s4 = inlined_call_operand.vmem [shape: f32[1,512], index: 4, kind: input, shape index: {}]
  %s5 = inlined_call_operand.hbm [shape: bf16[7,256,128], index: 5, kind: input, shape index: {}]
  %s6 = inlined_call_operand.vmem [shape: f32[1,128], index: 6, kind: input, shape index: {}]
  %s7 = inlined_call_operand.vmem [shape: f32[128,64], index: 7, kind: input, shape index: {}]
  %s8 = inlined_call_operand.vmem [shape: f32[1,64], index: 8, kind: input, shape index: {}]
  %s9 = inlined_call_operand.vmem [shape: f32[64,10], index: 9, kind: input, shape index: {}]
  %s10 = inlined_call_operand.vmem [shape: f32[1,10], index: 10, kind: input, shape index: {}]
  %s11 = inlined_call_operand.hbm [shape: f32[2,1,10], index: 11, kind: output, shape index: {}]
  %s12 = sld [smem:[#allocation0]]
  $region85: #{dnn5_forward.1} parent=0
    _
  %s14 = ssub.s32 1, %s12
  %s15 = scalar_select 0, %s14, %s12
  $region1: #{dnn5_forward.1} parent=0
    #allocation3 [shape = 'u8[688128]{0}', space=vmem, size = 0xa8000, scoped, tag = 'input window, operand 3, single buffered']
    #allocation4 [shape = 's32[2]{0}', space=sflag, size = 0x8, scoped, tag = 'scoped memory for dnn5_forward.1']
    #allocation5 [shape = 's32[2]{0}', space=sflag, size = 0x8, scoped, tag = 'scoped memory for dnn5_forward.1']
    #allocation6 [shape = 'u8[458752]{0}', space=vmem, size = 0x70000, scoped, tag = 'input window, operand 5, single buffered']
    #allocation7 [shape = 's32[1]{0}', space=sflag, size = 0x4, scoped, tag = 'scoped memory for dnn5_forward.1']
    #allocation8 [shape = 'u8[1024]{0}', space=vmem, size = 0x400, scoped, tag = 'output window, operand 0']
    %16 = vsyncpa [#allocation4], 0
    %17 = vsyncpa [#allocation7], 0
    %18 = vsyncpa [#allocation5], 0
    %s19 = scalar_lea.sflag [#allocation5], 1
    %20 = vsyncpa %s19, 0
    loop: start=0, step=1, limit=4
    $region2: #{dnn5_forward.1} parent=1 // loop_pre_header
      _
    $region3: #{dnn5_forward.1} parent=1 // loop_header
      %s22 = sphi 0, %s26
      %p23 = scmp.ge.s32.totalorder %s22, 4
      %s32 = sphi 0, %s34
      %s35 = sphi 0, %s32
      %s36 = sphi 0, %s35
      %s52 = sphi 0, %s36
      %s56 = sphi 0, %s56
      %s58 = sphi 0, %s56
      %s59 = sphi 0, %s58
      %s73 = sphi 0, %s59
      %s77 = sphi 0, %s77
      %s79 = sphi 0, %s77
      %s80 = sphi 0, %s79
      %s94 = sphi 0, %s80
      %s98 = sphi 0, %s98
      %s100 = sphi 0, %s98
      %s101 = sphi 0, %s100
      %s115 = sphi 0, %s101
      %s119 = sphi 0, %s119
      %s121 = sphi 0, %s119
      %s122 = sphi 0, %s121
      %s136 = sphi 0, %s122
      %s140 = sphi 0, %s140
      %s142 = sphi 0, %s140
      %s143 = sphi 0, %s142
      %s157 = sphi 0, %s143
      %s161 = sphi 0, %s161
      %s163 = sphi 0, %s161
      %s164 = sphi 0, %s163
      %s178 = sphi 0, %s164
      %s182 = sphi 0, %s182
      %s184 = sphi 0, %s182
      %s185 = sphi 0, %s184
      %s199 = sphi 0, %s185
      %s203 = sphi 0, %s203
      %s205 = sphi 0, %s203
      %s206 = sphi 0, %s205
      %s220 = sphi 0, %s206
      %s224 = sphi 0, %s224
      %s226 = sphi 0, %s224
      %s227 = sphi 0, %s226
      %s241 = sphi 0, %s227
      %s245 = sphi 0, %s245
      %s247 = sphi 0, %s245
      %s248 = sphi 0, %s247
      %s262 = sphi 0, %s248
      %s268 = sphi 0, %s270
      %s271 = sphi 0, %s268
      %s272 = sphi 0, %s271
      %s288 = sphi 0, %s272
    $region4: #{dnn5_forward.1} parent=1 // loop_header_branch
      %25 = sbr.rel (%p23) target = $region8
    $region5: #{dnn5_forward.1} parent=1 // loop_body
      %s27 = ssub.s32 %s22, 1
      %s28 = ssub.s32 %s22, 2
      %s29 = sadd.s32 %s22, 1
      %s30 = ssub.s32 %s22, %s29
      %p31 = scmp.eq.s32.totalorder %s30, 0
      %s33 = sadd.s32 %s32, 1
      %s34 = scalar_select %p31, %s32, %s33
      %p37 = pneg %p31
      %p38 = scmp.eq.s32.totalorder %s22, 1
      %p39 = por %p37, %p38
      %p40 = scmp.ne.s32.totalorder %s32, %s35
      %p41 = scmp.eq.s32.totalorder %s22, 0
      %p42 = por %p40, %p41
      %p43 = scmp.ne.s32.totalorder %s32, %s35
      %p44 = scmp.eq.s32.totalorder %s27, 1
      %p45 = por %p43, %p44
      %p46 = scmp.ne.s32.totalorder %s35, %s36
      %p47 = scmp.eq.s32.totalorder %s27, 0
      %p48 = por %p46, %p47
      %p49 = scmp.ne.s32.totalorder %s35, %s36
      %p50 = scmp.eq.s32.totalorder %s28, 1
      %p51 = por %p49, %p50
      %p53 = scmp.ne.s32.totalorder %s36, %s52
      %p54 = scmp.eq.s32.totalorder %s28, 0
      %p55 = por %p53, %p54
      %s57 = sadd.s32 %s56, 1
      %p60 = scmp.eq.s32.totalorder %s22, 1
      %p61 = scmp.ne.s32.totalorder %s56, %s58
      %p62 = scmp.eq.s32.totalorder %s22, 0
      %p63 = por %p61, %p62
      %p64 = scmp.ne.s32.totalorder %s56, %s58
      %p65 = scmp.eq.s32.totalorder %s27, 1
      %p66 = por %p64, %p65
      %p67 = scmp.ne.s32.totalorder %s58, %s59
      %p68 = scmp.eq.s32.totalorder %s27, 0
      %p69 = por %p67, %p68
      %p70 = scmp.ne.s32.totalorder %s58, %s59
      %p71 = scmp.eq.s32.totalorder %s28, 1
      %p72 = por %p70, %p71
      %p74 = scmp.ne.s32.totalorder %s59, %s73
      %p75 = scmp.eq.s32.totalorder %s28, 0
      %p76 = por %p74, %p75
      %s78 = sadd.s32 %s77, 1
      %p81 = scmp.eq.s32.totalorder %s22, 1
      %p82 = scmp.ne.s32.totalorder %s77, %s79
      %p83 = scmp.eq.s32.totalorder %s22, 0
      %p84 = por %p82, %p83
      %p85 = scmp.ne.s32.totalorder %s77, %s79
      %p86 = scmp.eq.s32.totalorder %s27, 1
      %p87 = por %p85, %p86
      %p88 = scmp.ne.s32.totalorder %s79, %s80
      %p89 = scmp.eq.s32.totalorder %s27, 0
      %p90 = por %p88, %p89
      %p91 = scmp.ne.s32.totalorder %s79, %s80
      %p92 = scmp.eq.s32.totalorder %s28, 1
      %p93 = por %p91, %p92
      %p95 = scmp.ne.s32.totalorder %s80, %s94
      %p96 = scmp.eq.s32.totalorder %s28, 0
      %p97 = por %p95, %p96
      %s99 = sadd.s32 %s98, 1
      %p102 = scmp.eq.s32.totalorder %s22, 1
      %p103 = scmp.ne.s32.totalorder %s98, %s100
      %p104 = scmp.eq.s32.totalorder %s22, 0
      %p105 = por %p103, %p104
      %p106 = scmp.ne.s32.totalorder %s98, %s100
      %p107 = scmp.eq.s32.totalorder %s27, 1
      %p108 = por %p106, %p107
      %p109 = scmp.ne.s32.totalorder %s100, %s101
      %p110 = scmp.eq.s32.totalorder %s27, 0
      %p111 = por %p109, %p110
      %p112 = scmp.ne.s32.totalorder %s100, %s101
      %p113 = scmp.eq.s32.totalorder %s28, 1
      %p114 = por %p112, %p113
      %p116 = scmp.ne.s32.totalorder %s101, %s115
      %p117 = scmp.eq.s32.totalorder %s28, 0
      %p118 = por %p116, %p117
      %s120 = sadd.s32 %s119, 1
      %p123 = scmp.eq.s32.totalorder %s22, 1
      %p124 = scmp.ne.s32.totalorder %s119, %s121
      %p125 = scmp.eq.s32.totalorder %s22, 0
      %p126 = por %p124, %p125
      %p127 = scmp.ne.s32.totalorder %s119, %s121
      %p128 = scmp.eq.s32.totalorder %s27, 1
      %p129 = por %p127, %p128
      %p130 = scmp.ne.s32.totalorder %s121, %s122
      %p131 = scmp.eq.s32.totalorder %s27, 0
      %p132 = por %p130, %p131
      %p133 = scmp.ne.s32.totalorder %s121, %s122
      %p134 = scmp.eq.s32.totalorder %s28, 1
      %p135 = por %p133, %p134
      %p137 = scmp.ne.s32.totalorder %s122, %s136
      %p138 = scmp.eq.s32.totalorder %s28, 0
      %p139 = por %p137, %p138
      %s141 = sadd.s32 %s140, 1
      %p144 = scmp.eq.s32.totalorder %s22, 1
      %p145 = scmp.ne.s32.totalorder %s140, %s142
      %p146 = scmp.eq.s32.totalorder %s22, 0
      %p147 = por %p145, %p146
      %p148 = scmp.ne.s32.totalorder %s140, %s142
      %p149 = scmp.eq.s32.totalorder %s27, 1
      %p150 = por %p148, %p149
      %p151 = scmp.ne.s32.totalorder %s142, %s143
      %p152 = scmp.eq.s32.totalorder %s27, 0
      %p153 = por %p151, %p152
      %p154 = scmp.ne.s32.totalorder %s142, %s143
      %p155 = scmp.eq.s32.totalorder %s28, 1
      %p156 = por %p154, %p155
      %p158 = scmp.ne.s32.totalorder %s143, %s157
      %p159 = scmp.eq.s32.totalorder %s28, 0
      %p160 = por %p158, %p159
      %s162 = sadd.s32 %s161, 1
      %p165 = scmp.eq.s32.totalorder %s22, 1
      %p166 = scmp.ne.s32.totalorder %s161, %s163
      %p167 = scmp.eq.s32.totalorder %s22, 0
      %p168 = por %p166, %p167
      %p169 = scmp.ne.s32.totalorder %s161, %s163
      %p170 = scmp.eq.s32.totalorder %s27, 1
      %p171 = por %p169, %p170
      %p172 = scmp.ne.s32.totalorder %s163, %s164
      %p173 = scmp.eq.s32.totalorder %s27, 0
      %p174 = por %p172, %p173
      %p175 = scmp.ne.s32.totalorder %s163, %s164
      %p176 = scmp.eq.s32.totalorder %s28, 1
      %p177 = por %p175, %p176
      %p179 = scmp.ne.s32.totalorder %s164, %s178
      %p180 = scmp.eq.s32.totalorder %s28, 0
      %p181 = por %p179, %p180
      %s183 = sadd.s32 %s182, 1
      %p186 = scmp.eq.s32.totalorder %s22, 1
      %p187 = scmp.ne.s32.totalorder %s182, %s184
      %p188 = scmp.eq.s32.totalorder %s22, 0
      %p189 = por %p187, %p188
      %p190 = scmp.ne.s32.totalorder %s182, %s184
      %p191 = scmp.eq.s32.totalorder %s27, 1
      %p192 = por %p190, %p191
      %p193 = scmp.ne.s32.totalorder %s184, %s185
      %p194 = scmp.eq.s32.totalorder %s27, 0
      %p195 = por %p193, %p194
      %p196 = scmp.ne.s32.totalorder %s184, %s185
      %p197 = scmp.eq.s32.totalorder %s28, 1
      %p198 = por %p196, %p197
      %p200 = scmp.ne.s32.totalorder %s185, %s199
      %p201 = scmp.eq.s32.totalorder %s28, 0
      %p202 = por %p200, %p201
      %s204 = sadd.s32 %s203, 1
      %p207 = scmp.eq.s32.totalorder %s22, 1
      %p208 = scmp.ne.s32.totalorder %s203, %s205
      %p209 = scmp.eq.s32.totalorder %s22, 0
      %p210 = por %p208, %p209
      %p211 = scmp.ne.s32.totalorder %s203, %s205
      %p212 = scmp.eq.s32.totalorder %s27, 1
      %p213 = por %p211, %p212
      %p214 = scmp.ne.s32.totalorder %s205, %s206
      %p215 = scmp.eq.s32.totalorder %s27, 0
      %p216 = por %p214, %p215
      %p217 = scmp.ne.s32.totalorder %s205, %s206
      %p218 = scmp.eq.s32.totalorder %s28, 1
      %p219 = por %p217, %p218
      %p221 = scmp.ne.s32.totalorder %s206, %s220
      %p222 = scmp.eq.s32.totalorder %s28, 0
      %p223 = por %p221, %p222
      %s225 = sadd.s32 %s224, 1
      %p228 = scmp.eq.s32.totalorder %s22, 1
      %p229 = scmp.ne.s32.totalorder %s224, %s226
      %p230 = scmp.eq.s32.totalorder %s22, 0
      %p231 = por %p229, %p230
      %p232 = scmp.ne.s32.totalorder %s224, %s226
      %p233 = scmp.eq.s32.totalorder %s27, 1
      %p234 = por %p232, %p233
      %p235 = scmp.ne.s32.totalorder %s226, %s227
      %p236 = scmp.eq.s32.totalorder %s27, 0
      %p237 = por %p235, %p236
      %p238 = scmp.ne.s32.totalorder %s226, %s227
      %p239 = scmp.eq.s32.totalorder %s28, 1
      %p240 = por %p238, %p239
      %p242 = scmp.ne.s32.totalorder %s227, %s241
      %p243 = scmp.eq.s32.totalorder %s28, 0
      %p244 = por %p242, %p243
      %s246 = sadd.s32 %s245, 1
      %p249 = scmp.eq.s32.totalorder %s22, 1
      %p250 = scmp.ne.s32.totalorder %s245, %s247
      %p251 = scmp.eq.s32.totalorder %s22, 0
      %p252 = por %p250, %p251
      %p253 = scmp.ne.s32.totalorder %s245, %s247
      %p254 = scmp.eq.s32.totalorder %s27, 1
      %p255 = por %p253, %p254
      %p256 = scmp.ne.s32.totalorder %s247, %s248
      %p257 = scmp.eq.s32.totalorder %s27, 0
      %p258 = por %p256, %p257
      %p259 = scmp.ne.s32.totalorder %s247, %s248
      %p260 = scmp.eq.s32.totalorder %s28, 1
      %p261 = por %p259, %p260
      %p263 = scmp.ne.s32.totalorder %s248, %s262
      %p264 = scmp.eq.s32.totalorder %s28, 0
      %p265 = por %p263, %p264
      %s266 = ssub.s32 %s22, %s29
      %p267 = scmp.eq.s32.totalorder %s266, 0
      %s269 = sadd.s32 %s268, 1
      %s270 = scalar_select %p267, %s268, %s269
      %p273 = pneg %p267
      %p274 = scmp.eq.s32.totalorder %s22, 1
      %p275 = por %p273, %p274
      %p276 = scmp.ne.s32.totalorder %s268, %s271
      %p277 = scmp.eq.s32.totalorder %s22, 0
      %p278 = por %p276, %p277
      %p279 = scmp.ne.s32.totalorder %s268, %s271
      %p280 = scmp.eq.s32.totalorder %s27, 1
      %p281 = por %p279, %p280
      %p282 = scmp.ne.s32.totalorder %s271, %s272
      %p283 = scmp.eq.s32.totalorder %s27, 0
      %p284 = por %p282, %p283
      %p285 = scmp.ne.s32.totalorder %s271, %s272
      %p286 = scmp.eq.s32.totalorder %s28, 1
      %p287 = por %p285, %p286
      %p289 = scmp.ne.s32.totalorder %s272, %s288
      %p290 = scmp.eq.s32.totalorder %s28, 0
      %p291 = por %p289, %p290
      %p292 = scmp.le.s32.totalorder 1, %s22
      %p293 = scmp.lt.s32.totalorder %s22, 3
      %p294 = pnand %p292, %p293
      %p295 = pneg %p294
      // Predicated region
      $region9: #{dnn5_forward.1} parent=5 // pred_check
        _
      $region10: #{dnn5_forward.1} parent=5 // pred_check_branch
        %297 = sbr.rel (%p294) target = $region12
      $region11: #{dnn5_forward.1} parent=5 // pred_region
        %s298 = ssub.s32 %s22, 1
        // Predicated region
        $region13: #{dnn5_forward.1} parent=11 // pred_check
          %p299 = pneg %p69
        $region14: #{dnn5_forward.1} parent=11 // pred_check_branch
          %301 = sbr.rel (%p299) target = $region16
        $region15: #{dnn5_forward.1} parent=11 // pred_region
          _
        $region16: #{dnn5_forward.1} parent=11 // pred_fallthru
          _
        // Predicated region
        $region17: #{dnn5_forward.1} parent=11 // pred_check
          %p302 = pneg %p90
        $region18: #{dnn5_forward.1} parent=11 // pred_check_branch
          %304 = sbr.rel (%p302) target = $region20
        $region19: #{dnn5_forward.1} parent=11 // pred_region
          _
        $region20: #{dnn5_forward.1} parent=11 // pred_fallthru
          _
        // Predicated region
        $region21: #{dnn5_forward.1} parent=11 // pred_check
          %p305 = pneg %p111
        $region22: #{dnn5_forward.1} parent=11 // pred_check_branch
          %307 = sbr.rel (%p305) target = $region24
        $region23: #{dnn5_forward.1} parent=11 // pred_region
          %s309 = ssub.s32 21504, 21504
          %310 = vsyncadd [#allocation4], %s309
          %s311 = sshll.u32 [#allocation3], 4
          %s312 = int_to_ptr.vmem [resolvable:$true] %s311
          %317 = dma.hbm_to_vmem [thread:$0]  %s3, 21504, %s312, [#allocation4], 256, 256, 16
        $region24: #{dnn5_forward.1} parent=11 // pred_fallthru
          _
        // Predicated region
        $region25: #{dnn5_forward.1} parent=11 // pred_check
          %p318 = pneg %p132
        $region26: #{dnn5_forward.1} parent=11 // pred_check_branch
          %320 = sbr.rel (%p318) target = $region28
        $region27: #{dnn5_forward.1} parent=11 // pred_region
          _
        $region28: #{dnn5_forward.1} parent=11 // pred_fallthru
          _
        // Predicated region
        $region29: #{dnn5_forward.1} parent=11 // pred_check
          %p321 = pneg %p153
        $region30: #{dnn5_forward.1} parent=11 // pred_check_branch
          %323 = sbr.rel (%p321) target = $region32
        $region31: #{dnn5_forward.1} parent=11 // pred_region
          %s325 = ssub.s32 14336, 14336
          %326 = vsyncadd [#allocation7], %s325
          %s327 = sshll.u32 [#allocation6], 4
          %s328 = int_to_ptr.vmem [resolvable:$true] %s327
          %333 = dma.hbm_to_vmem [thread:$0]  %s5, 14336, %s328, [#allocation7], 64, 64, 4
        $region32: #{dnn5_forward.1} parent=11 // pred_fallthru
          _
        // Predicated region
        $region33: #{dnn5_forward.1} parent=11 // pred_check
          %p334 = pneg %p174
        $region34: #{dnn5_forward.1} parent=11 // pred_check_branch
          %336 = sbr.rel (%p334) target = $region36
        $region35: #{dnn5_forward.1} parent=11 // pred_region
          _
        $region36: #{dnn5_forward.1} parent=11 // pred_fallthru
          _
        // Predicated region
        $region37: #{dnn5_forward.1} parent=11 // pred_check
          %p337 = pneg %p195
        $region38: #{dnn5_forward.1} parent=11 // pred_check_branch
          %339 = sbr.rel (%p337) target = $region40
        $region39: #{dnn5_forward.1} parent=11 // pred_region
          _
        $region40: #{dnn5_forward.1} parent=11 // pred_fallthru
          _
        // Predicated region
        $region41: #{dnn5_forward.1} parent=11 // pred_check
          %p340 = pneg %p216
        $region42: #{dnn5_forward.1} parent=11 // pred_check_branch
          %342 = sbr.rel (%p340) target = $region44
        $region43: #{dnn5_forward.1} parent=11 // pred_region
          _
        $region44: #{dnn5_forward.1} parent=11 // pred_fallthru
          _
        // Predicated region
        $region45: #{dnn5_forward.1} parent=11 // pred_check
          %p343 = pneg %p237
        $region46: #{dnn5_forward.1} parent=11 // pred_check_branch
          %345 = sbr.rel (%p343) target = $region48
        $region47: #{dnn5_forward.1} parent=11 // pred_region
          _
        $region48: #{dnn5_forward.1} parent=11 // pred_fallthru
          _
        // Predicated region
        $region49: #{dnn5_forward.1} parent=11 // pred_check
          %p346 = pneg %p258
        $region50: #{dnn5_forward.1} parent=11 // pred_check_branch
          %348 = sbr.rel (%p346) target = $region52
        $region51: #{dnn5_forward.1} parent=11 // pred_region
          _
        $region52: #{dnn5_forward.1} parent=11 // pred_fallthru
          _
      $region12: #{dnn5_forward.1} parent=5 // pred_fallthru
        _
      %p349 = scmp.lt.s32.totalorder %s22, 2
      // Predicated region
      $region53: #{dnn5_forward.1} parent=5 // pred_check
        %p350 = pneg %p349
      $region54: #{dnn5_forward.1} parent=5 // pred_check_branch
        %352 = sbr.rel (%p350) target = $region56
      $region55: #{dnn5_forward.1} parent=5 // pred_region
        // Predicated region
        $region57: #{dnn5_forward.1} parent=55 // pred_check
          %p353 = pneg %p42
        $region58: #{dnn5_forward.1} parent=55 // pred_check_branch
          %355 = sbr.rel (%p353) target = $region60
        $region59: #{dnn5_forward.1} parent=55 // pred_region
          %p356 = scmp.lt.s32.totalorder %s22, 1
          %s357 = scalar_select %p356, %s22, 1
          %s358 = smul.addr %s357, 2
          %s359 = smul.addr %s358, 8
          %s360 = scalar_lea.vmem %s0, %s359
        $region60: #{dnn5_forward.1} parent=55 // pred_fallthru
          _
      $region56: #{dnn5_forward.1} parent=5 // pred_fallthru
        _
      %p361 = scmp.le.s32.totalorder 1, %s22
      %p362 = scmp.lt.s32.totalorder %s22, 3
      %p363 = pnand %p361, %p362
      %p364 = pneg %p363
      // Predicated region
      $region61: #{dnn5_forward.1} parent=5 // pred_check
        _
      $region62: #{dnn5_forward.1} parent=5 // pred_check_branch
        %366 = sbr.rel (%p363) target = $region64
      $region63: #{dnn5_forward.1} parent=5 // pred_region
        %s367 = ssub.s32 %s22, 1
        // Predicated region
        $region65: #{dnn5_forward.1} parent=63 // pred_check
          %p368 = pneg %p111
        $region66: #{dnn5_forward.1} parent=63 // pred_check_branch
          %370 = sbr.rel (%p368) target = $region68
        $region67: #{dnn5_forward.1} parent=63 // pred_region
          %371 = dma.done [#allocation4], 21504
        $region68: #{dnn5_forward.1} parent=63 // pred_fallthru
          _
        // Predicated region
        $region69: #{dnn5_forward.1} parent=63 // pred_check
          %p372 = pneg %p153
        $region70: #{dnn5_forward.1} parent=63 // pred_check_branch
          %374 = sbr.rel (%p372) target = $region72
        $region71: #{dnn5_forward.1} parent=63 // pred_region
          %375 = dma.done [#allocation7], 14336
        $region72: #{dnn5_forward.1} parent=63 // pred_fallthru
          _
        %p376 = scmp.lt.s32.totalorder %s27, 1
        %s377 = scalar_select %p376, %s27, 1
        %s378 = smul.addr %s377, 2
        %s379 = smul.addr %s378, 8
        %s380 = scalar_lea.vmem %s0, %s379
        %p381 = pneg %p48
        %p382 = pneg %p45
        %p383 = pneg %p69
        %p384 = pneg %p66
        %p385 = pneg %p90
        %p386 = pneg %p87
        %p387 = pneg %p111
        %p388 = pneg %p108
        %p389 = pneg %p132
        %p390 = pneg %p129
        %p391 = pneg %p153
        %p392 = pneg %p150
        %p393 = pneg %p174
        %p394 = pneg %p171
        %p395 = pneg %p195
        %p396 = pneg %p192
        %p397 = pneg %p216
        %p398 = pneg %p213
        %p399 = pneg %p237
        %p400 = pneg %p234
        %p401 = pneg %p258
        %p402 = pneg %p255
        %p403 = pneg %p284
        %p404 = pneg %p281
        %s405 = sand.u32 %s271, 1
        %s406 = scalar_lea.sflag [#allocation5], %s405
        %s407 = sand.u32 %s271, 1
        %s408 = scalar_lea.vmem [#allocation8], %s407
        %p409 = scmp.lt.s32.totalorder %s27, 1
        %s410 = scalar_select %p409, %s27, 1
        %s411 = smul.addr %s410, 2
        %s412 = smul.addr %s411, 8
        %s413 = scalar_lea.vmem %s0, %s412
        %v414 = vld [vmem:[%s413] sm:$0xff]
        %v415 = vld [vmem:[%s413 + $0x8] sm:$0x3f]
        %v416 = vld [vmem:[%s1] sm:$0xff]
        %v417 = vld [vmem:[%s1 + $0x8] sm:$0xff]
        %v418 = vld [vmem:[%s1 + $0x10] sm:$0x3f]
        %v419 = vld [vmem:[%s1 + $0x18] sm:$0x3f]
        %v420 = vld [vmem:[%s413 + $0x1] sm:$0xff]
        %v421 = vld [vmem:[%s413 + $0x9] sm:$0x3f]
        %s422 = scalar_lea.vmem %s1, 32
        %v423 = vld [vmem:[%s422] sm:$0xff]
        %v424 = vld [vmem:[%s422 + $0x8] sm:$0xff]
        %v425 = vld [vmem:[%s422 + $0x10] sm:$0x3f]
        %v426 = vld [vmem:[%s422 + $0x18] sm:$0x3f]
        %vm427 = vcmask 113664
        %v429 = vsel %vm427, %v420, 0
        %v432 = vsel %vm427, %v421, 0
        %vm434 = vcmask 1045504
        %v436 = vsel %vm434, %v425, 0
        %v439 = vsel %vm434, %v426, 0
        %441 = vmatprep.subr.mxu0 %v424
        %442 = vmatpush1.msra.mxu0 %v423
        %443 = vmatprep.subr.mxu0 %v439
        %444 = vmatpush1.msra.mxu0 %v436
        %445 = vmatprep.subr.mxu0 0.0
        %446 = vmatpush1.msra.mxu0 0.0
        %447 = vmatprep.subr.mxu0 0.0
        %448 = vmatpush1.msra.mxu0 0.0
        %449 = vmatprep.subr.mxu0 0.0
        %450 = vmatpush1.msra.mxu0 0.0
        %451 = vmatprep.subr.mxu0 0.0
        %452 = vmatpush1.msra.mxu0 0.0
        %453 = vmatprep.subr.mxu0 0.0
        %454 = vmatpush1.msra.mxu0 0.0
        %455 = vmatprep.subr.mxu0 0.0
        %456 = vmatpush1.msra.mxu0 0.0
        %457 = vmatprep.subr.mxu0 0.0
        %458 = vmatpush1.msra.mxu0 0.0
        %459 = vmatprep.subr.mxu0 0.0
        %460 = vmatpush1.msra.mxu0 0.0
        %461 = vmatprep.subr.mxu0 0.0
        %462 = vmatpush1.msra.mxu0 0.0
        %463 = vmatprep.subr.mxu0 0.0
        %464 = vmatpush1.msra.mxu0 0.0
        %465 = vmatprep.subr.mxu0 0.0
        %466 = vmatpush1.msra.mxu0 0.0
        %467 = vmatprep.subr.mxu0 0.0
        %468 = vmatpush1.msra.mxu0 0.0
        %469 = vmatprep.subr.mxu0 0.0
        %470 = vmatpush1.msra.mxu0 0.0
        %471 = vmatprep.subr.mxu0 0.0
        %472 = vmatpush1.msra.mxu0 0.0
        %473 = vmatprep.subr.mxu0 0.0
        %474 = vmatpush1.msra.mxu0 0.0
        %475 = vmatprep.subr.mxu0 0.0
        %476 = vmatpush1.msra.mxu0 0.0
        %477 = vmatprep.subr.mxu0 0.0
        %478 = vmatpush1.msra.mxu0 0.0
        %479 = vmatprep.subr.mxu0 0.0
        %480 = vmatpush1.msra.mxu0 0.0
        %481 = vmatprep.subr.mxu0 0.0
        %482 = vmatpush1.msra.mxu0 0.0
        %483 = vmatprep.subr.mxu0 0.0
        %484 = vmatpush1.msra.mxu0 0.0
        %485 = vmatprep.subr.mxu0 0.0
        %486 = vmatpush1.msra.mxu0 0.0
        %487 = vmatprep.subr.mxu0 0.0
        %488 = vmatpush1.msra.mxu0 0.0
        %489 = vmatprep.subr.mxu0 0.0
        %490 = vmatpush1.msra.mxu0 0.0
        %491 = vmatprep.subr.mxu0 0.0
        %492 = vmatpush1.msra.mxu0 0.0
        %493 = vmatprep.subr.mxu0 0.0
        %494 = vmatpush1.msra.mxu0 0.0
        %495 = vmatprep.subr.mxu0 0.0
        %496 = vmatpush1.msra.mxu0 0.0
        %497 = vmatprep.subr.mxu0 0.0
        %498 = vmatpush1.msra.mxu0 0.0
        %499 = vmatprep.subr.mxu0 0.0
        %500 = vmatpush1.msra.mxu0 0.0
        %501 = vmatprep.subr.mxu0 0.0
        %502 = vmatpush1.msra.mxu0 0.0
        %503 = vmatprep.subr.mxu0 0.0
        %504 = vmatpush1.msra.mxu0 0.0
        %505 = vmatprep.mubr.f32.mxu0 0.0
        %506 = vmatmul.mubr.f32.gmra.mrb[0].mxu0 %v429
        %v507 = vpop.f32.mrb[0].mxu0
        %v508 = vadd.f32 0.0, %v507
        %v509 = vpop.f32.mrb[0].mxu0
        %v510 = vadd.f32 0.0, %v509
        %511 = vmatprep.mubr.f32.mxu0 0.0
        %512 = vmatmul.mubr.f32.gmra.mrb[0].mxu0 %v432
        %v513 = vpop.f32.mrb[0].mxu0
        %v514 = vadd.f32 0.0, %v513
        %v515 = vpop.f32.mrb[0].mxu0
        %v516 = vadd.f32 0.0, %v515
        %517 = vdwg.mxu0
        %v519 = vsel %vm427, %v414, 0
        %v522 = vsel %vm427, %v415, 0
        %v525 = vsel %vm434, %v418, 0
        %v528 = vsel %vm434, %v419, 0
        %530 = vmatprep.subr.mxu0 %v417
        %531 = vmatpush1.msra.mxu0 %v416
        %532 = vmatprep.subr.mxu0 %v528
        %533 = vmatpush1.msra.mxu0 %v525
        %534 = vmatprep.subr.mxu0 0.0
        %535 = vmatpush1.msra.mxu0 0.0
        %536 = vmatprep.subr.mxu0 0.0
        %537 = vmatpush1.msra.mxu0 0.0
        %538 = vmatprep.subr.mxu0 0.0
        %539 = vmatpush1.msra.mxu0 0.0
        %540 = vmatprep.subr.mxu0 0.0
        %541 = vmatpush1.msra.mxu0 0.0
        %542 = vmatprep.subr.mxu0 0.0
        %543 = vmatpush1.msra.mxu0 0.0
        %544 = vmatprep.subr.mxu0 0.0
        %545 = vmatpush1.msra.mxu0 0.0
        %546 = vmatprep.subr.mxu0 0.0
        %547 = vmatpush1.msra.mxu0 0.0
        %548 = vmatprep.subr.mxu0 0.0
        %549 = vmatpush1.msra.mxu0 0.0
        %550 = vmatprep.subr.mxu0 0.0
        %551 = vmatpush1.msra.mxu0 0.0
        %552 = vmatprep.subr.mxu0 0.0
        %553 = vmatpush1.msra.mxu0 0.0
        %554 = vmatprep.subr.mxu0 0.0
        %555 = vmatpush1.msra.mxu0 0.0
        %556 = vmatprep.subr.mxu0 0.0
        %557 = vmatpush1.msra.mxu0 0.0
        %558 = vmatprep.subr.mxu0 0.0
        %559 = vmatpush1.msra.mxu0 0.0
        %560 = vmatprep.subr.mxu0 0.0
        %561 = vmatpush1.msra.mxu0 0.0
        %562 = vmatprep.subr.mxu0 0.0
        %563 = vmatpush1.msra.mxu0 0.0
        %564 = vmatprep.subr.mxu0 0.0
        %565 = vmatpush1.msra.mxu0 0.0
        %566 = vmatprep.subr.mxu0 0.0
        %567 = vmatpush1.msra.mxu0 0.0
        %568 = vmatprep.subr.mxu0 0.0
        %569 = vmatpush1.msra.mxu0 0.0
        %570 = vmatprep.subr.mxu0 0.0
        %571 = vmatpush1.msra.mxu0 0.0
        %572 = vmatprep.subr.mxu0 0.0
        %573 = vmatpush1.msra.mxu0 0.0
        %574 = vmatprep.subr.mxu0 0.0
        %575 = vmatpush1.msra.mxu0 0.0
        %576 = vmatprep.subr.mxu0 0.0
        %577 = vmatpush1.msra.mxu0 0.0
        %578 = vmatprep.subr.mxu0 0.0
        %579 = vmatpush1.msra.mxu0 0.0
        %580 = vmatprep.subr.mxu0 0.0
        %581 = vmatpush1.msra.mxu0 0.0
        %582 = vmatprep.subr.mxu0 0.0
        %583 = vmatpush1.msra.mxu0 0.0
        %584 = vmatprep.subr.mxu0 0.0
        %585 = vmatpush1.msra.mxu0 0.0
        %586 = vmatprep.subr.mxu0 0.0
        %587 = vmatpush1.msra.mxu0 0.0
        %588 = vmatprep.subr.mxu0 0.0
        %589 = vmatpush1.msra.mxu0 0.0
        %590 = vmatprep.subr.mxu0 0.0
        %591 = vmatpush1.msra.mxu0 0.0
        %592 = vmatprep.subr.mxu0 0.0
        %593 = vmatpush1.msra.mxu0 0.0
        %594 = vmatprep.mubr.f32.mxu0 0.0
        %595 = vmatmul.mubr.f32.gmra.mrb[0].mxu0 %v519
        %v596 = vpop.f32.mrb[0].mxu0
        %v597 = vadd.f32 %v508, %v596
        %v598 = vpop.f32.mrb[0].mxu0
        %v599 = vadd.f32 %v510, %v598
        %600 = vmatprep.mubr.f32.mxu0 0.0
        %601 = vmatmul.mubr.f32.gmra.mrb[0].mxu0 %v522
        %v602 = vpop.f32.mrb[0].mxu0
        %v603 = vadd.f32 %v514, %v602
        %v604 = vpop.f32.mrb[0].mxu0
        %v605 = vadd.f32 %v516, %v604
        %606 = vdwg.mxu0
        %v607 = vld [vmem:[%s413 + $0x2] sm:$0xff]
        %v608 = vld [vmem:[%s413 + $0xa] sm:$0x3f]
        %s609 = scalar_lea.vmem %s1, 64
        %v610 = vld [vmem:[%s609] sm:$0xff]
        %v611 = vld [vmem:[%s609 + $0x8] sm:$0xff]
        %v612 = vld [vmem:[%s609 + $0x10] sm:$0x3f]
        %v613 = vld [vmem:[%s609 + $0x18] sm:$0x3f]
        %v615 = vsel %vm427, %v607, 0
        %v618 = vsel %vm427, %v608, 0
        %v621 = vsel %vm434, %v612, 0
        %v624 = vsel %vm434, %v613, 0
        %626 = vmatprep.subr.mxu0 %v611
        %627 = vmatpush1.msra.mxu0 %v610
        %628 = vmatprep.subr.mxu0 %v624
        %629 = vmatpush1.msra.mxu0 %v621
        %630 = vmatprep.subr.mxu0 0.0
        %631 = vmatpush1.msra.mxu0 0.0
        %632 = vmatprep.subr.mxu0 0.0
        %633 = vmatpush1.msra.mxu0 0.0
        %634 = vmatprep.subr.mxu0 0.0
        %635 = vmatpush1.msra.mxu0 0.0
        %636 = vmatprep.subr.mxu0 0.0
        %637 = vmatpush1.msra.mxu0 0.0
        %638 = vmatprep.subr.mxu0 0.0
        %639 = vmatpush1.msra.mxu0 0.0
        %640 = vmatprep.subr.mxu0 0.0
        %641 = vmatpush1.msra.mxu0 0.0
        %642 = vmatprep.subr.mxu0 0.0
        %643 = vmatpush1.msra.mxu0 0.0
        %644 = vmatprep.subr.mxu0 0.0
        %645 = vmatpush1.msra.mxu0 0.0
        %646 = vmatprep.subr.mxu0 0.0
        %647 = vmatpush1.msra.mxu0 0.0
        %648 = vmatprep.subr.mxu0 0.0
        %649 = vmatpush1.msra.mxu0 0.0
        %650 = vmatprep.subr.mxu0 0.0
        %651 = vmatpush1.msra.mxu0 0.0
        %652 = vmatprep.subr.mxu0 0.0
        %653 = vmatpush1.msra.mxu0 0.0
        %654 = vmatprep.subr.mxu0 0.0
        %655 = vmatpush1.msra.mxu0 0.0
        %656 = vmatprep.subr.mxu0 0.0
        %657 = vmatpush1.msra.mxu0 0.0
        %658 = vmatprep.subr.mxu0 0.0
        %659 = vmatpush1.msra.mxu0 0.0
        %660 = vmatprep.subr.mxu0 0.0
        %661 = vmatpush1.msra.mxu0 0.0
        %662 = vmatprep.subr.mxu0 0.0
        %663 = vmatpush1.msra.mxu0 0.0
        %664 = vmatprep.subr.mxu0 0.0
        %665 = vmatpush1.msra.mxu0 0.0
        %666 = vmatprep.subr.mxu0 0.0
        %667 = vmatpush1.msra.mxu0 0.0
        %668 = vmatprep.subr.mxu0 0.0
        %669 = vmatpush1.msra.mxu0 0.0
        %670 = vmatprep.subr.mxu0 0.0
        %671 = vmatpush1.msra.mxu0 0.0
        %672 = vmatprep.subr.mxu0 0.0
        %673 = vmatpush1.msra.mxu0 0.0
        %674 = vmatprep.subr.mxu0 0.0
        %675 = vmatpush1.msra.mxu0 0.0
        %676 = vmatprep.subr.mxu0 0.0
        %677 = vmatpush1.msra.mxu0 0.0
        %678 = vmatprep.subr.mxu0 0.0
        %679 = vmatpush1.msra.mxu0 0.0
        %680 = vmatprep.subr.mxu0 0.0
        %681 = vmatpush1.msra.mxu0 0.0
        %682 = vmatprep.subr.mxu0 0.0
        %683 = vmatpush1.msra.mxu0 0.0
        %684 = vmatprep.subr.mxu0 0.0
        %685 = vmatpush1.msra.mxu0 0.0
        %686 = vmatprep.subr.mxu0 0.0
        %687 = vmatpush1.msra.mxu0 0.0
        %688 = vmatprep.subr.mxu0 0.0
        %689 = vmatpush1.msra.mxu0 0.0
        %690 = vmatprep.mubr.f32.mxu0 0.0
        %691 = vmatmul.mubr.f32.gmra.mrb[0].mxu0 %v615
        %v692 = vpop.f32.mrb[0].mxu0
        %v693 = vadd.f32 0.0, %v692
        %v694 = vpop.f32.mrb[0].mxu0
        %v695 = vadd.f32 0.0, %v694
        %696 = vmatprep.mubr.f32.mxu0 0.0
        %697 = vmatmul.mubr.f32.gmra.mrb[0].mxu0 %v618
        %v698 = vpop.f32.mrb[0].mxu0
        %v699 = vadd.f32 0.0, %v698
        %v700 = vpop.f32.mrb[0].mxu0
        %v701 = vadd.f32 0.0, %v700
        %702 = vdwg.mxu0
        %v703 = vadd.f32 %v597, %v693
        %v704 = vadd.f32 %v599, %v695
        %v705 = vadd.f32 %v603, %v699
        %v706 = vadd.f32 %v605, %v701
        %v707 = vld [vmem:[%s2] sm:$0x3]
        %v709 = vlaneseq
        %v710 = vshrl.u32 %v709, 7
        %v711 = vsub.s32 0, %v710
        %v712 = vrot.slane %v707, %v711
        %v713 = vlaneseq
        %v714 = vshrl.u32 %v713, 7
        %v715 = vsub.s32 1, %v714
        %v716 = vrot.slane %v707, %v715
        %v719 = vadd.f32 %v703, %v712
        %v720 = vadd.f32 %v704, %v716
        %v721 = vadd.f32 %v705, %v712
        %v722 = vadd.f32 %v706, %v716
        %v723 = vmax.f32 %v719, 0.0
        %v724 = vmax.f32 %v720, 0.0
        %v725 = vmax.f32 %v721, 0.0
        %v726 = vmax.f32 %v722, 0.0
        %vm731 = vcmask 1040384
        %v732 = vrot.slane %v723, 7
        %v733 = vrot.slane %v724, 7
        %v734 = vrot.slane %v725, 7
        %v735 = vsel %vm731, %v732, %v734
        %v736 = vrot.slane %v726, 7
        %v737 = vsel %vm731, %v733, %v736
        %v742 = vsel %vm731, 0.0, %v732
        %v743 = vsel %vm731, 0.0, %v733
        %vm744 = vcmask 1046528
        %v745 = vsel %vm744, %v735, 0.0
        %v746 = vsel %vm744, %v737, 0.0
        %747 = vst [vmem:[#allocation2] sm:$0xff] %v742
        %vm748 = vcmask 785408
        %749 = vst.msk [vmem:[#allocation2 + $0x8] sm:$0xff] %vm748, %v743
        %750 = vst [vmem:[#allocation2 + $0x10] sm:$0xff] %v745
        %751 = vst.msk [vmem:[#allocation2 + $0x18] sm:$0xff] %vm748, %v746
        %v752 = vld [vmem:[#allocation2] sm:$0xff]
        %v753 = vld [vmem:[#allocation2 + $0x8] sm:$0xff]
        %v754 = vld [vmem:[#allocation2 + $0x10] sm:$0x3f]
        %v755 = vld [vmem:[#allocation2 + $0x18] sm:$0x3f]
        %v756 = vld [vmem:[#allocation3] sm:$0xff]
        %v757 = vld [vmem:[#allocation3 + $0x8] sm:$0xff]
        %v758 = vld [vmem:[#allocation3 + $0x10] sm:$0xff]
        %v759 = vld [vmem:[#allocation3 + $0x18] sm:$0xff]
        %v760 = vld [vmem:[#allocation3 + $0x20] sm:$0xff]
        %v761 = vld [vmem:[#allocation3 + $0x28] sm:$0xff]
        %v762 = vld [vmem:[#allocation3 + $0x30] sm:$0xff]
        %v763 = vld [vmem:[#allocation3 + $0x38] sm:$0xff]
        %v764 = vld [vmem:[#allocation3 + $0x40] sm:$0xff]
        %v765 = vld [vmem:[#allocation3 + $0x48] sm:$0xff]
        %v766 = vld [vmem:[#allocation3 + $0x50] sm:$0xff]
        %v767 = vld [vmem:[#allocation3 + $0x58] sm:$0xff]
        %v768 = vld [vmem:[#allocation3 + $0x60] sm:$0xff]
        %v769 = vld [vmem:[#allocation3 + $0x68] sm:$0xff]
        %v770 = vld [vmem:[#allocation3 + $0x70] sm:$0xff]
        %v771 = vld [vmem:[#allocation3 + $0x78] sm:$0xff]
        %v772 = vld [vmem:[#allocation3 + $0x80] sm:$0xff]
        %v773 = vld [vmem:[#allocation3 + $0x88] sm:$0xff]
        %v774 = vld [vmem:[#allocation3 + $0x90] sm:$0xff]
        %v775 = vld [vmem:[#allocation3 + $0x98] sm:$0xff]
        %v776 = vld [vmem:[#allocation3 + $0xa0] sm:$0xff]
        %v777 = vld [vmem:[#allocation3 + $0xa8] sm:$0xff]
        %v778 = vld [vmem:[#allocation3 + $0xb0] sm:$0xff]
        %v779 = vld [vmem:[#allocation3 + $0xb8] sm:$0xff]
        %v780 = vld [vmem:[#allocation3 + $0xc0] sm:$0xff]
        %v781 = vld [vmem:[#allocation3 + $0xc8] sm:$0xff]
        %v782 = vld [vmem:[#allocation3 + $0xd0] sm:$0xff]
        %v783 = vld [vmem:[#allocation3 + $0xd8] sm:$0xff]
        %v784 = vld [vmem:[#allocation3 + $0xe0] sm:$0xff]
        %v785 = vld [vmem:[#allocation3 + $0xe8] sm:$0xff]
        %v786 = vld [vmem:[#allocation3 + $0xf0] sm:$0xff]
        %v787 = vld [vmem:[#allocation3 + $0xf8] sm:$0xff]
        %v788 = vld [vmem:[#allocation3 + $0x100] sm:$0xff]
        %v789 = vld [vmem:[#allocation3 + $0x108] sm:$0xff]
        %v790 = vld [vmem:[#allocation3 + $0x110] sm:$0xff]
        %v791 = vld [vmem:[#allocation3 + $0x118] sm:$0xff]
        %v792 = vld [vmem:[#allocation3 + $0x120] sm:$0xff]
        %v793 = vld [vmem:[#allocation3 + $0x128] sm:$0xff]
        %v794 = vld [vmem:[#allocation3 + $0x130] sm:$0xff]
        %v795 = vld [vmem:[#allocation3 + $0x138] sm:$0xff]
        %v796 = vld [vmem:[#allocation3 + $0x140] sm:$0xff]
        %v797 = vld [vmem:[#allocation3 + $0x148] sm:$0xff]
        %v798 = vld [vmem:[#allocation3 + $0x150] sm:$0xff]
        %v799 = vld [vmem:[#allocation3 + $0x158] sm:$0xff]
        %v800 = vld [vmem:[#allocation3 + $0x160] sm:$0xff]
        %v801 = vld [vmem:[#allocation3 + $0x168] sm:$0xff]
        %v802 = vld [vmem:[#allocation3 + $0x170] sm:$0xff]
        %v803 = vld [vmem:[#allocation3 + $0x178] sm:$0xff]
        %v804 = vld [vmem:[#allocation3 + $0x180] sm:$0xff]
        %v805 = vld [vmem:[#allocation3 + $0x188] sm:$0xff]
        %v806 = vld [vmem:[#allocation3 + $0x190] sm:$0xff]
        %v807 = vld [vmem:[#allocation3 + $0x198] sm:$0xff]
        %v808 = vld [vmem:[#allocation3 + $0x1a0] sm:$0xff]
        %v809 = vld [vmem:[#allocation3 + $0x1a8] sm:$0xff]
        %v810 = vld [vmem:[#allocation3 + $0x1b0] sm:$0xff]
        %v811 = vld [vmem:[#allocation3 + $0x1b8] sm:$0xff]
        %v812 = vunpack.c.l.bf16 %v756
        %v813 = vunpack.c.h.bf16 %v756
        %v814 = vunpack.c.l.bf16 %v757
        %v815 = vunpack.c.h.bf16 %v757
        %v816 = vunpack.c.l.bf16 %v758
        %v817 = vunpack.c.h.bf16 %v758
        %v818 = vunpack.c.l.bf16 %v759
        %v819 = vunpack.c.h.bf16 %v759
        %v820 = vunpack.c.l.bf16 %v760
        %v821 = vunpack.c.h.bf16 %v760
        %v822 = vunpack.c.l.bf16 %v761
        %v823 = vunpack.c.h.bf16 %v761
        %v824 = vunpack.c.l.bf16 %v762
        %v825 = vunpack.c.h.bf16 %v762
        %v826 = vunpack.c.l.bf16 %v763
        %v827 = vunpack.c.h.bf16 %v763
        %v828 = vunpack.c.l.bf16 %v764
        %v829 = vunpack.c.h.bf16 %v764
        %v830 = vunpack.c.l.bf16 %v765
        %v831 = vunpack.c.h.bf16 %v765
        %v832 = vunpack.c.l.bf16 %v766
        %v833 = vunpack.c.h.bf16 %v766
        %v834 = vunpack.c.l.bf16 %v767
        %v835 = vunpack.c.h.bf16 %v767
        %v836 = vunpack.c.l.bf16 %v768
        %v837 = vunpack.c.h.bf16 %v768
        %v838 = vunpack.c.l.bf16 %v769
        %v839 = vunpack.c.h.bf16 %v769
        %v840 = vunpack.c.l.bf16 %v770
        %v841 = vunpack.c.h.bf16 %v770
        %v842 = vunpack.c.l.bf16 %v771
        %v843 = vunpack.c.h.bf16 %v771
        %v844 = vunpack.c.l.bf16 %v772
        %v845 = vunpack.c.h.bf16 %v772
        %v846 = vunpack.c.l.bf16 %v773
        %v847 = vunpack.c.h.bf16 %v773
        %v848 = vunpack.c.l.bf16 %v774
        %v849 = vunpack.c.h.bf16 %v774
        %v850 = vunpack.c.l.bf16 %v775
        %v851 = vunpack.c.h.bf16 %v775
        %v852 = vunpack.c.l.bf16 %v776
        %v853 = vunpack.c.h.bf16 %v776
        %v854 = vunpack.c.l.bf16 %v777
        %v855 = vunpack.c.h.bf16 %v777
        %v856 = vunpack.c.l.bf16 %v778
        %v857 = vunpack.c.h.bf16 %v778
        %v858 = vunpack.c.l.bf16 %v779
        %v859 = vunpack.c.h.bf16 %v779
        %v860 = vunpack.c.l.bf16 %v780
        %v861 = vunpack.c.h.bf16 %v780
        %v862 = vunpack.c.l.bf16 %v781
        %v863 = vunpack.c.h.bf16 %v781
        %v864 = vunpack.c.l.bf16 %v782
        %v865 = vunpack.c.h.bf16 %v782
        %v866 = vunpack.c.l.bf16 %v783
        %v867 = vunpack.c.h.bf16 %v783
        %v868 = vunpack.c.l.bf16 %v784
        %v869 = vunpack.c.h.bf16 %v784
        %v870 = vunpack.c.l.bf16 %v785
        %v871 = vunpack.c.h.bf16 %v785
        %v872 = vunpack.c.l.bf16 %v786
        %v873 = vunpack.c.h.bf16 %v786
        %v874 = vunpack.c.l.bf16 %v787
        %v875 = vunpack.c.h.bf16 %v787
        %v876 = vunpack.c.l.bf16 %v788
        %v877 = vunpack.c.h.bf16 %v788
        %v878 = vunpack.c.l.bf16 %v789
        %v879 = vunpack.c.h.bf16 %v789
        %v880 = vunpack.c.l.bf16 %v790
        %v881 = vunpack.c.h.bf16 %v790
        %v882 = vunpack.c.l.bf16 %v791
        %v883 = vunpack.c.h.bf16 %v791
        %v884 = vunpack.c.l.bf16 %v792
        %v885 = vunpack.c.h.bf16 %v792
        %v886 = vunpack.c.l.bf16 %v793
        %v887 = vunpack.c.h.bf16 %v793
        %v888 = vunpack.c.l.bf16 %v794
        %v889 = vunpack.c.h.bf16 %v794
        %v890 = vunpack.c.l.bf16 %v795
        %v891 = vunpack.c.h.bf16 %v795
        %v892 = vunpack.c.l.bf16 %v796
        %v893 = vunpack.c.h.bf16 %v796
        %v894 = vunpack.c.l.bf16 %v797
        %v895 = vunpack.c.h.bf16 %v797
        %v896 = vunpack.c.l.bf16 %v798
        %v897 = vunpack.c.h.bf16 %v798
        %v898 = vunpack.c.l.bf16 %v799
        %v899 = vunpack.c.h.bf16 %v799
        %v900 = vunpack.c.l.bf16 %v800
        %v901 = vunpack.c.h.bf16 %v800
        %v902 = vunpack.c.l.bf16 %v801
        %v903 = vunpack.c.h.bf16 %v801
        %v904 = vunpack.c.l.bf16 %v802
        %v905 = vunpack.c.h.bf16 %v802
        %v906 = vunpack.c.l.bf16 %v803
        %v907 = vunpack.c.h.bf16 %v803
        %v908 = vunpack.c.l.bf16 %v804
        %v909 = vunpack.c.h.bf16 %v804
        %v910 = vunpack.c.l.bf16 %v805
        %v911 = vunpack.c.h.bf16 %v805
        %v912 = vunpack.c.l.bf16 %v806
        %v913 = vunpack.c.h.bf16 %v806
        %v914 = vunpack.c.l.bf16 %v807
        %v915 = vunpack.c.h.bf16 %v807
        %v916 = vunpack.c.l.bf16 %v808
        %v917 = vunpack.c.h.bf16 %v808
        %v918 = vunpack.c.l.bf16 %v809
        %v919 = vunpack.c.h.bf16 %v809
        %v920 = vunpack.c.l.bf16 %v810
        %v921 = vunpack.c.h.bf16 %v810
        %v922 = vunpack.c.l.bf16 %v811
        %v923 = vunpack.c.h.bf16 %v811
        %v924 = vld [vmem:[#allocation2] sm:$0xfe]
        %v925 = vld [vmem:[#allocation2 + $0x8] sm:$0xfe]
        %v926 = vld [vmem:[#allocation2 + $0x10] sm:$0x7f]
        %v927 = vld [vmem:[#allocation2 + $0x18] sm:$0x7f]
        %s928 = scalar_lea.vmem [#allocation3], 448
        %v929 = vld [vmem:[%s928] sm:$0xff]
        %v930 = vld [vmem:[%s928 + $0x8] sm:$0xff]
        %v931 = vld [vmem:[%s928 + $0x10] sm:$0xff]
        %v932 = vld [vmem:[%s928 + $0x18] sm:$0xff]
        %v933 = vld [vmem:[%s928 + $0x20] sm:$0xff]
        %v934 = vld [vmem:[%s928 + $0x28] sm:$0xff]
        %v935 = vld [vmem:[%s928 + $0x30] sm:$0xff]
        %v936 = vld [vmem:[%s928 + $0x38] sm:$0xff]
        %v937 = vld [vmem:[%s928 + $0x40] sm:$0xff]
        %v938 = vld [vmem:[%s928 + $0x48] sm:$0xff]
        %v939 = vld [vmem:[%s928 + $0x50] sm:$0xff]
        %v940 = vld [vmem:[%s928 + $0x58] sm:$0xff]
        %v941 = vld [vmem:[%s928 + $0x60] sm:$0xff]
        %v942 = vld [vmem:[%s928 + $0x68] sm:$0xff]
        %v943 = vld [vmem:[%s928 + $0x70] sm:$0xff]
        %v944 = vld [vmem:[%s928 + $0x78] sm:$0xff]
        %v945 = vld [vmem:[%s928 + $0x80] sm:$0xff]
        %v946 = vld [vmem:[%s928 + $0x88] sm:$0xff]
        %v947 = vld [vmem:[%s928 + $0x90] sm:$0xff]
        %v948 = vld [vmem:[%s928 + $0x98] sm:$0xff]
        %v949 = vld [vmem:[%s928 + $0xa0] sm:$0xff]
        %v950 = vld [vmem:[%s928 + $0xa8] sm:$0xff]
        %v951 = vld [vmem:[%s928 + $0xb0] sm:$0xff]
        %v952 = vld [vmem:[%s928 + $0xb8] sm:$0xff]
        %v953 = vld [vmem:[%s928 + $0xc0] sm:$0xff]
        %v954 = vld [vmem:[%s928 + $0xc8] sm:$0xff]
        %v955 = vld [vmem:[%s928 + $0xd0] sm:$0xff]
        %v956 = vld [vmem:[%s928 + $0xd8] sm:$0xff]
        %v957 = vld [vmem:[%s928 + $0xe0] sm:$0xff]
        %v958 = vld [vmem:[%s928 + $0xe8] sm:$0xff]
        %v959 = vld [vmem:[%s928 + $0xf0] sm:$0xff]
        %v960 = vld [vmem:[%s928 + $0xf8] sm:$0xff]
        %v961 = vld [vmem:[%s928 + $0x100] sm:$0xff]
        %v962 = vld [vmem:[%s928 + $0x108] sm:$0xff]
        %v963 = vld [vmem:[%s928 + $0x110] sm:$0xff]
        %v964 = vld [vmem:[%s928 + $0x118] sm:$0xff]
        %v965 = vld [vmem:[%s928 + $0x120] sm:$0xff]
        %v966 = vld [vmem:[%s928 + $0x128] sm:$0xff]
        %v967 = vld [vmem:[%s928 + $0x130] sm:$0xff]
        %v968 = vld [vmem:[%s928 + $0x138] sm:$0xff]
        %v969 = vld [vmem:[%s928 + $0x140] sm:$0xff]
        %v970 = vld [vmem:[%s928 + $0x148] sm:$0xff]
        %v971 = vld [vmem:[%s928 + $0x150] sm:$0xff]
        %v972 = vld [vmem:[%s928 + $0x158] sm:$0xff]
        %v973 = vld [vmem:[%s928 + $0x160] sm:$0xff]
        %v974 = vld [vmem:[%s928 + $0x168] sm:$0xff]
        %v975 = vld [vmem:[%s928 + $0x170] sm:$0xff]
        %v976 = vld [vmem:[%s928 + $0x178] sm:$0xff]
        %v977 = vld [vmem:[%s928 + $0x180] sm:$0xff]
        %v978 = vld [vmem:[%s928 + $0x188] sm:$0xff]
        %v979 = vld [vmem:[%s928 + $0x190] sm:$0xff]
        %v980 = vld [vmem:[%s928 + $0x198] sm:$0xff]
        %v981 = vld [vmem:[%s928 + $0x1a0] sm:$0xff]
        %v982 = vld [vmem:[%s928 + $0x1a8] sm:$0xff]
        %v983 = vld [vmem:[%s928 + $0x1b0] sm:$0xff]
        %v984 = vld [vmem:[%s928 + $0x1b8] sm:$0xff]
        %v985 = vunpack.c.l.bf16 %v929
        %v986 = vunpack.c.h.bf16 %v929
        %v987 = vunpack.c.l.bf16 %v930
        %v988 = vunpack.c.h.bf16 %v930
        %v989 = vunpack.c.l.bf16 %v931
        %v990 = vunpack.c.h.bf16 %v931
        %v991 = vunpack.c.l.bf16 %v932
        %v992 = vunpack.c.h.bf16 %v932
        %v993 = vunpack.c.l.bf16 %v933
        %v994 = vunpack.c.h.bf16 %v933
        %v995 = vunpack.c.l.bf16 %v934
        %v996 = vunpack.c.h.bf16 %v934
        %v997 = vunpack.c.l.bf16 %v935
        %v998 = vunpack.c.h.bf16 %v935
        %v999 = vunpack.c.l.bf16 %v936
        %v1000 = vunpack.c.h.bf16 %v936
        %v1001 = vunpack.c.l.bf16 %v937
        %v1002 = vunpack.c.h.bf16 %v937
        %v1003 = vunpack.c.l.bf16 %v938
        %v1004 = vunpack.c.h.bf16 %v938
        %v1005 = vunpack.c.l.bf16 %v939
        %v1006 = vunpack.c.h.bf16 %v939
        %v1007 = vunpack.c.l.bf16 %v940
        %v1008 = vunpack.c.h.bf16 %v940
        %v1009 = vunpack.c.l.bf16 %v941
        %v1010 = vunpack.c.h.bf16 %v941
        %v1011 = vunpack.c.l.bf16 %v942
        %v1012 = vunpack.c.h.bf16 %v942
        %v1013 = vunpack.c.l.bf16 %v943
        %v1014 = vunpack.c.h.bf16 %v943
        %v1015 = vunpack.c.l.bf16 %v944
        %v1016 = vunpack.c.h.bf16 %v944
        %v1017 = vunpack.c.l.bf16 %v945
        %v1018 = vunpack.c.h.bf16 %v945
        %v1019 = vunpack.c.l.bf16 %v946
        %v1020 = vunpack.c.h.bf16 %v946
        %v1021 = vunpack.c.l.bf16 %v947
        %v1022 = vunpack.c.h.bf16 %v947
        %v1023 = vunpack.c.l.bf16 %v948
        %v1024 = vunpack.c.h.bf16 %v948
        %v1025 = vunpack.c.l.bf16 %v949
        %v1026 = vunpack.c.h.bf16 %v949
        %v1027 = vunpack.c.l.bf16 %v950
        %v1028 = vunpack.c.h.bf16 %v950
        %v1029 = vunpack.c.l.bf16 %v951
        %v1030 = vunpack.c.h.bf16 %v951
        %v1031 = vunpack.c.l.bf16 %v952
        %v1032 = vunpack.c.h.bf16 %v952
        %v1033 = vunpack.c.l.bf16 %v953
        %v1034 = vunpack.c.h.bf16 %v953
        %v1035 = vunpack.c.l.bf16 %v954
        %v1036 = vunpack.c.h.bf16 %v954
        %v1037 = vunpack.c.l.bf16 %v955
        %v1038 = vunpack.c.h.bf16 %v955
        %v1039 = vunpack.c.l.bf16 %v956
        %v1040 = vunpack.c.h.bf16 %v956
        %v1041 = vunpack.c.l.bf16 %v957
        %v1042 = vunpack.c.h.bf16 %v957
        %v1043 = vunpack.c.l.bf16 %v958
        %v1044 = vunpack.c.h.bf16 %v958
        %v1045 = vunpack.c.l.bf16 %v959
        %v1046 = vunpack.c.h.bf16 %v959
        %v1047 = vunpack.c.l.bf16 %v960
        %v1048 = vunpack.c.h.bf16 %v960
        %v1049 = vunpack.c.l.bf16 %v961
        %v1050 = vunpack.c.h.bf16 %v961
        %v1051 = vunpack.c.l.bf16 %v962
        %v1052 = vunpack.c.h.bf16 %v962
        %v1053 = vunpack.c.l.bf16 %v963
        %v1054 = vunpack.c.h.bf16 %v963
        %v1055 = vunpack.c.l.bf16 %v964
        %v1056 = vunpack.c.h.bf16 %v964
        %v1057 = vunpack.c.l.bf16 %v965
        %v1058 = vunpack.c.h.bf16 %v965
        %v1059 = vunpack.c.l.bf16 %v966
        %v1060 = vunpack.c.h.bf16 %v966
        %v1061 = vunpack.c.l.bf16 %v967
        %v1062 = vunpack.c.h.bf16 %v967
        %v1063 = vunpack.c.l.bf16 %v968
        %v1064 = vunpack.c.h.bf16 %v968
        %v1065 = vunpack.c.l.bf16 %v969
        %v1066 = vunpack.c.h.bf16 %v969
        %v1067 = vunpack.c.l.bf16 %v970
        %v1068 = vunpack.c.h.bf16 %v970
        %v1069 = vunpack.c.l.bf16 %v971
        %v1070 = vunpack.c.h.bf16 %v971
        %v1071 = vunpack.c.l.bf16 %v972
        %v1072 = vunpack.c.h.bf16 %v972
        %v1073 = vunpack.c.l.bf16 %v973
        %v1074 = vunpack.c.h.bf16 %v973
        %v1075 = vunpack.c.l.bf16 %v974
        %v1076 = vunpack.c.h.bf16 %v974
        %v1077 = vunpack.c.l.bf16 %v975
        %v1078 = vunpack.c.h.bf16 %v975
        %v1079 = vunpack.c.l.bf16 %v976
        %v1080 = vunpack.c.h.bf16 %v976
        %v1081 = vunpack.c.l.bf16 %v977
        %v1082 = vunpack.c.h.bf16 %v977
        %v1083 = vunpack.c.l.bf16 %v978
        %v1084 = vunpack.c.h.bf16 %v978
        %v1085 = vunpack.c.l.bf16 %v979
        %v1086 = vunpack.c.h.bf16 %v979
        %v1087 = vunpack.c.l.bf16 %v980
        %v1088 = vunpack.c.h.bf16 %v980
        %v1089 = vunpack.c.l.bf16 %v981
        %v1090 = vunpack.c.h.bf16 %v981
        %v1091 = vunpack.c.l.bf16 %v982
        %v1092 = vunpack.c.h.bf16 %v982
        %v1093 = vunpack.c.l.bf16 %v983
        %v1094 = vunpack.c.h.bf16 %v983
        %v1095 = vunpack.c.l.bf16 %v984
        %v1096 = vunpack.c.h.bf16 %v984
        %v1101 = vrot.slane %v924, 1
        %v1102 = vrot.slane %v926, 1
        %v1103 = vsel %vm744, %v1101, %v1102
        %v1104 = vrot.slane %v925, 1
        %v1105 = vrot.slane %v927, 1
        %v1106 = vsel %vm744, %v1104, %v1105
        %v1109 = vsel %vm748, %v1106, 0
        %v1111 = vsel %vm748, %v1105, 0
        %1113 = vmatprep.subr.mxu0 %v986
        %1114 = vmatpush1.msra.mxu0 %v985
        %1115 = vmatprep.subr.mxu0 %v990
        %1116 = vmatpush1.msra.mxu0 %v989
        %1117 = vmatprep.subr.mxu0 %v994
        %1118 = vmatpush1.msra.mxu0 %v993
        %1119 = vmatprep.subr.mxu0 %v998
        %1120 = vmatpush1.msra.mxu0 %v997
        %1121 = vmatprep.subr.mxu0 %v1002
        %1122 = vmatpush1.msra.mxu0 %v1001
        %1123 = vmatprep.subr.mxu0 %v1006
        %1124 = vmatpush1.msra.mxu0 %v1005
        %1125 = vmatprep.subr.mxu0 %v1010
        %1126 = vmatpush1.msra.mxu0 %v1009
        %1127 = vmatprep.subr.mxu0 %v1014
        %1128 = vmatpush1.msra.mxu0 %v1013
        %1129 = vmatprep.subr.mxu0 %v1018
        %1130 = vmatpush1.msra.mxu0 %v1017
        %1131 = vmatprep.subr.mxu0 %v1022
        %1132 = vmatpush1.msra.mxu0 %v1021
        %1133 = vmatprep.subr.mxu0 %v1026
        %1134 = vmatpush1.msra.mxu0 %v1025
        %1135 = vmatprep.subr.mxu0 %v1030
        %1136 = vmatpush1.msra.mxu0 %v1029
        %1137 = vmatprep.subr.mxu0 %v1034
        %1138 = vmatpush1.msra.mxu0 %v1033
        %1139 = vmatprep.subr.mxu0 %v1038
        %1140 = vmatpush1.msra.mxu0 %v1037
        %1141 = vmatprep.subr.mxu0 %v1042
        %1142 = vmatpush1.msra.mxu0 %v1041
        %1143 = vmatprep.subr.mxu0 %v1046
        %1144 = vmatpush1.msra.mxu0 %v1045
        %1145 = vmatprep.subr.mxu0 %v1050
        %1146 = vmatpush1.msra.mxu0 %v1049
        %1147 = vmatprep.subr.mxu0 %v1054
        %1148 = vmatpush1.msra.mxu0 %v1053
        %1149 = vmatprep.subr.mxu0 %v1058
        %1150 = vmatpush1.msra.mxu0 %v1057
        %1151 = vmatprep.subr.mxu0 %v1062
        %1152 = vmatpush1.msra.mxu0 %v1061
        %1153 = vmatprep.subr.mxu0 %v1066
        %1154 = vmatpush1.msra.mxu0 %v1065
        %1155 = vmatprep.subr.mxu0 %v1070
        %1156 = vmatpush1.msra.mxu0 %v1069
        %1157 = vmatprep.subr.mxu0 %v1074
        %1158 = vmatpush1.msra.mxu0 %v1073
        %1159 = vmatprep.subr.mxu0 %v1078
        %1160 = vmatpush1.msra.mxu0 %v1077
        %1161 = vmatprep.subr.mxu0 %v1082
        %1162 = vmatpush1.msra.mxu0 %v1081
        %1163 = vmatprep.subr.mxu0 %v1086
        %1164 = vmatpush1.msra.mxu0 %v1085
        %1165 = vmatprep.subr.mxu0 %v1090
        %1166 = vmatpush1.msra.mxu0 %v1089
        %1167 = vmatprep.subr.mxu0 %v1094
        %1168 = vmatpush1.msra.mxu0 %v1093
        %1169 = vmatprep.subr.mxu0 0.0
        %1170 = vmatpush1.msra.mxu0 0.0
        %1171 = vmatprep.subr.mxu0 0.0
        %1172 = vmatpush1.msra.mxu0 0.0
        %1173 = vmatprep.subr.mxu0 0.0
        %1174 = vmatpush1.msra.mxu0 0.0
        %1175 = vmatprep.subr.mxu0 0.0
        %1176 = vmatpush1.msra.mxu0 0.0
        %1177 = vmatprep.mubr.f32.mxu0 %v1109
        %1178 = vmatmul.mubr.f32.gmra.mrb[0].mxu0 %v1103
        %v1179 = vpop.f32.mrb[0].mxu0
        %v1180 = vadd.f32 0.0, %v1179
        %v1181 = vpop.f32.mrb[0].mxu0
        %v1182 = vadd.f32 0.0, %v1181
        %1183 = vmatprep.mubr.f32.mxu0 %v1111
        %1184 = vmatmul.mubr.f32.gmra.mrb[0].mxu0 %v1102
        %v1185 = vpop.f32.mrb[0].mxu0
        %v1186 = vadd.f32 0.0, %v1185
        %v1187 = vpop.f32.mrb[0].mxu0
        %v1188 = vadd.f32 0.0, %v1187
        %1189 = vdwg.mxu0
        %1190 = vmatprep.subr.mxu0 %v988
        %1191 = vmatpush1.msra.mxu0 %v987
        %1192 = vmatprep.subr.mxu0 %v992
        %1193 = vmatpush1.msra.mxu0 %v991
        %1194 = vmatprep.subr.mxu0 %v996
        %1195 = vmatpush1.msra.mxu0 %v995
        %1196 = vmatprep.subr.mxu0 %v1000
        %1197 = vmatpush1.msra.mxu0 %v999
        %1198 = vmatprep.subr.mxu0 %v1004
        %1199 = vmatpush1.msra.mxu0 %v1003
        %1200 = vmatprep.subr.mxu0 %v1008
        %1201 = vmatpush1.msra.mxu0 %v1007
        %1202 = vmatprep.subr.mxu0 %v1012
        %1203 = vmatpush1.msra.mxu0 %v1011
        %1204 = vmatprep.subr.mxu0 %v1016
        %1205 = vmatpush1.msra.mxu0 %v1015
        %1206 = vmatprep.subr.mxu0 %v1020
        %1207 = vmatpush1.msra.mxu0 %v1019
        %1208 = vmatprep.subr.mxu0 %v1024
        %1209 = vmatpush1.msra.mxu0 %v1023
        %1210 = vmatprep.subr.mxu0 %v1028
        %1211 = vmatpush1.msra.mxu0 %v1027
        %1212 = vmatprep.subr.mxu0 %v1032
        %1213 = vmatpush1.msra.mxu0 %v1031
        %1214 = vmatprep.subr.mxu0 %v1036
        %1215 = vmatpush1.msra.mxu0 %v1035
        %1216 = vmatprep.subr.mxu0 %v1040
        %1217 = vmatpush1.msra.mxu0 %v1039
        %1218 = vmatprep.subr.mxu0 %v1044
        %1219 = vmatpush1.msra.mxu0 %v1043
        %1220 = vmatprep.subr.mxu0 %v1048
        %1221 = vmatpush1.msra.mxu0 %v1047
        %1222 = vmatprep.subr.mxu0 %v1052
        %1223 = vmatpush1.msra.mxu0 %v1051
        %1224 = vmatprep.subr.mxu0 %v1056
        %1225 = vmatpush1.msra.mxu0 %v1055
        %1226 = vmatprep.subr.mxu0 %v1060
        %1227 = vmatpush1.msra.mxu0 %v1059
        %1228 = vmatprep.subr.mxu0 %v1064
        %1229 = vmatpush1.msra.mxu0 %v1063
        %1230 = vmatprep.subr.mxu0 %v1068
        %1231 = vmatpush1.msra.mxu0 %v1067
        %1232 = vmatprep.subr.mxu0 %v1072
        %1233 = vmatpush1.msra.mxu0 %v1071
        %1234 = vmatprep.subr.mxu0 %v1076
        %1235 = vmatpush1.msra.mxu0 %v1075
        %1236 = vmatprep.subr.mxu0 %v1080
        %1237 = vmatpush1.msra.mxu0 %v1079
        %1238 = vmatprep.subr.mxu0 %v1084
        %1239 = vmatpush1.msra.mxu0 %v1083
        %1240 = vmatprep.subr.mxu0 %v1088
        %1241 = vmatpush1.msra.mxu0 %v1087
        %1242 = vmatprep.subr.mxu0 %v1092
        %1243 = vmatpush1.msra.mxu0 %v1091
        %1244 = vmatprep.subr.mxu0 %v1096
        %1245 = vmatpush1.msra.mxu0 %v1095
        %1246 = vmatprep.subr.mxu0 0.0
        %1247 = vmatpush1.msra.mxu0 0.0
        %1248 = vmatprep.subr.mxu0 0.0
        %1249 = vmatpush1.msra.mxu0 0.0
        %1250 = vmatprep.subr.mxu0 0.0
        %1251 = vmatpush1.msra.mxu0 0.0
        %1252 = vmatprep.subr.mxu0 0.0
        %1253 = vmatpush1.msra.mxu0 0.0
        %1254 = vmatprep.mubr.f32.mxu0 %v1109
        %1255 = vmatmul.mubr.f32.gmra.mrb[0].mxu0 %v1103
        %v1256 = vpop.f32.mrb[0].mxu0
        %v1257 = vadd.f32 0.0, %v1256
        %v1258 = vpop.f32.mrb[0].mxu0
        %v1259 = vadd.f32 0.0, %v1258
        %1260 = vmatprep.mubr.f32.mxu0 %v1111
        %1261 = vmatmul.mubr.f32.gmra.mrb[0].mxu0 %v1102
        %v1262 = vpop.f32.mrb[0].mxu0
        %v1263 = vadd.f32 0.0, %v1262
        %v1264 = vpop.f32.mrb[0].mxu0
        %v1265 = vadd.f32 0.0, %v1264
        %1266 = vdwg.mxu0
        %v1268 = vsel %vm748, %v753, 0
        %v1271 = vsel %vm748, %v755, 0
        %1273 = vmatprep.subr.mxu0 %v813
        %1274 = vmatpush1.msra.mxu0 %v812
        %1275 = vmatprep.subr.mxu0 %v817
        %1276 = vmatpush1.msra.mxu0 %v816
        %1277 = vmatprep.subr.mxu0 %v821
        %1278 = vmatpush1.msra.mxu0 %v820
        %1279 = vmatprep.subr.mxu0 %v825
        %1280 = vmatpush1.msra.mxu0 %v824
        %1281 = vmatprep.subr.mxu0 %v829
        %1282 = vmatpush1.msra.mxu0 %v828
        %1283 = vmatprep.subr.mxu0 %v833
        %1284 = vmatpush1.msra.mxu0 %v832
        %1285 = vmatprep.subr.mxu0 %v837
        %1286 = vmatpush1.msra.mxu0 %v836
        %1287 = vmatprep.subr.mxu0 %v841
        %1288 = vmatpush1.msra.mxu0 %v840
        %1289 = vmatprep.subr.mxu0 %v845
        %1290 = vmatpush1.msra.mxu0 %v844
        %1291 = vmatprep.subr.mxu0 %v849
        %1292 = vmatpush1.msra.mxu0 %v848
        %1293 = vmatprep.subr.mxu0 %v853
        %1294 = vmatpush1.msra.mxu0 %v852
        %1295 = vmatprep.subr.mxu0 %v857
        %1296 = vmatpush1.msra.mxu0 %v856
        %1297 = vmatprep.subr.mxu0 %v861
        %1298 = vmatpush1.msra.mxu0 %v860
        %1299 = vmatprep.subr.mxu0 %v865
        %1300 = vmatpush1.msra.mxu0 %v864
        %1301 = vmatprep.subr.mxu0 %v869
        %1302 = vmatpush1.msra.mxu0 %v868
        %1303 = vmatprep.subr.mxu0 %v873
        %1304 = vmatpush1.msra.mxu0 %v872
        %1305 = vmatprep.subr.mxu0 %v877
        %1306 = vmatpush1.msra.mxu0 %v876
        %1307 = vmatprep.subr.mxu0 %v881
        %1308 = vmatpush1.msra.mxu0 %v880
        %1309 = vmatprep.subr.mxu0 %v885
        %1310 = vmatpush1.msra.mxu0 %v884
        %1311 = vmatprep.subr.mxu0 %v889
        %1312 = vmatpush1.msra.mxu0 %v888
        %1313 = vmatprep.subr.mxu0 %v893
        %1314 = vmatpush1.msra.mxu0 %v892
        %1315 = vmatprep.subr.mxu0 %v897
        %1316 = vmatpush1.msra.mxu0 %v896
        %1317 = vmatprep.subr.mxu0 %v901
        %1318 = vmatpush1.msra.mxu0 %v900
        %1319 = vmatprep.subr.mxu0 %v905
        %1320 = vmatpush1.msra.mxu0 %v904
        %1321 = vmatprep.subr.mxu0 %v909
        %1322 = vmatpush1.msra.mxu0 %v908
        %1323 = vmatprep.subr.mxu0 %v913
        %1324 = vmatpush1.msra.mxu0 %v912
        %1325 = vmatprep.subr.mxu0 %v917
        %1326 = vmatpush1.msra.mxu0 %v916
        %1327 = vmatprep.subr.mxu0 %v921
        %1328 = vmatpush1.msra.mxu0 %v920
        %1329 = vmatprep.subr.mxu0 0.0
        %1330 = vmatpush1.msra.mxu0 0.0
        %1331 = vmatprep.subr.mxu0 0.0
        %1332 = vmatpush1.msra.mxu0 0.0
        %1333 = vmatprep.subr.mxu0 0.0
        %1334 = vmatpush1.msra.mxu0 0.0
        %1335 = vmatprep.subr.mxu0 0.0
        %1336 = vmatpush1.msra.mxu0 0.0
        %1337 = vmatprep.mubr.f32.mxu0 %v1268
        %1338 = vmatmul.mubr.f32.gmra.mrb[0].mxu0 %v752
        %v1339 = vpop.f32.mrb[0].mxu0
        %v1340 = vadd.f32 %v1180, %v1339
        %v1341 = vpop.f32.mrb[0].mxu0
        %v1342 = vadd.f32 %v1182, %v1341
        %1343 = vmatprep.mubr.f32.mxu0 %v1271
        %1344 = vmatmul.mubr.f32.gmra.mrb[0].mxu0 %v754
        %v1345 = vpop.f32.mrb[0].mxu0
        %v1346 = vadd.f32 %v1186, %v1345
        %v1347 = vpop.f32.mrb[0].mxu0
        %v1348 = vadd.f32 %v1188, %v1347
        %1349 = vdwg.mxu0
        %1350 = vmatprep.subr.mxu0 %v815
        %1351 = vmatpush1.msra.mxu0 %v814
        %1352 = vmatprep.subr.mxu0 %v819
        %1353 = vmatpush1.msra.mxu0 %v818
        %1354 = vmatprep.subr.mxu0 %v823
        %1355 = vmatpush1.msra.mxu0 %v822
        %1356 = vmatprep.subr.mxu0 %v827
        %1357 = vmatpush1.msra.mxu0 %v826
        %1358 = vmatprep.subr.mxu0 %v831
        %1359 = vmatpush1.msra.mxu0 %v830
        %1360 = vmatprep.subr.mxu0 %v835
        %1361 = vmatpush1.msra.mxu0 %v834
        %1362 = vmatprep.subr.mxu0 %v839
        %1363 = vmatpush1.msra.mxu0 %v838
        %1364 = vmatprep.subr.mxu0 %v843
        %1365 = vmatpush1.msra.mxu0 %v842
        %1366 = vmatprep.subr.mxu0 %v847
        %1367 = vmatpush1.msra.mxu0 %v846
        %1368 = vmatprep.subr.mxu0 %v851
        %1369 = vmatpush1.msra.mxu0 %v850
        %1370 = vmatprep.subr.mxu0 %v855
        %1371 = vmatpush1.msra.mxu0 %v854
        %1372 = vmatprep.subr.mxu0 %v859
        %1373 = vmatpush1.msra.mxu0 %v858
        %1374 = vmatprep.subr.mxu0 %v863
        %1375 = vmatpush1.msra.mxu0 %v862
        %1376 = vmatprep.subr.mxu0 %v867
        %1377 = vmatpush1.msra.mxu0 %v866
        %1378 = vmatprep.subr.mxu0 %v871
        %1379 = vmatpush1.msra.mxu0 %v870
        %1380 = vmatprep.subr.mxu0 %v875
        %1381 = vmatpush1.msra.mxu0 %v874
        %1382 = vmatprep.subr.mxu0 %v879
        %1383 = vmatpush1.msra.mxu0 %v878
        %1384 = vmatprep.subr.mxu0 %v883
        %1385 = vmatpush1.msra.mxu0 %v882
        %1386 = vmatprep.subr.mxu0 %v887
        %1387 = vmatpush1.msra.mxu0 %v886
        %1388 = vmatprep.subr.mxu0 %v891
        %1389 = vmatpush1.msra.mxu0 %v890
        %1390 = vmatprep.subr.mxu0 %v895
        %1391 = vmatpush1.msra.mxu0 %v894
        %1392 = vmatprep.subr.mxu0 %v899
        %1393 = vmatpush1.msra.mxu0 %v898
        %1394 = vmatprep.subr.mxu0 %v903
        %1395 = vmatpush1.msra.mxu0 %v902
        %1396 = vmatprep.subr.mxu0 %v907
        %1397 = vmatpush1.msra.mxu0 %v906
        %1398 = vmatprep.subr.mxu0 %v911
        %1399 = vmatpush1.msra.mxu0 %v910
        %1400 = vmatprep.subr.mxu0 %v915
        %1401 = vmatpush1.msra.mxu0 %v914
        %1402 = vmatprep.subr.mxu0 %v919
        %1403 = vmatpush1.msra.mxu0 %v918
        %1404 = vmatprep.subr.mxu0 %v923
        %1405 = vmatpush1.msra.mxu0 %v922
        %1406 = vmatprep.subr.mxu0 0.0
        %1407 = vmatpush1.msra.mxu0 0.0
        %1408 = vmatprep.subr.mxu0 0.0
        %1409 = vmatpush1.msra.mxu0 0.0
        %1410 = vmatprep.subr.mxu0 0.0
        %1411 = vmatpush1.msra.mxu0 0.0
        %1412 = vmatprep.subr.mxu0 0.0
        %1413 = vmatpush1.msra.mxu0 0.0
        %1414 = vmatprep.mubr.f32.mxu0 %v1268
        %1415 = vmatmul.mubr.f32.gmra.mrb[0].mxu0 %v752
        %v1416 = vpop.f32.mrb[0].mxu0
        %v1417 = vadd.f32 %v1257, %v1416
        %v1418 = vpop.f32.mrb[0].mxu0
        %v1419 = vadd.f32 %v1259, %v1418
        %1420 = vmatprep.mubr.f32.mxu0 %v1271
        %1421 = vmatmul.mubr.f32.gmra.mrb[0].mxu0 %v754
        %v1422 = vpop.f32.mrb[0].mxu0
        %v1423 = vadd.f32 %v1263, %v1422
        %v1424 = vpop.f32.mrb[0].mxu0
        %v1425 = vadd.f32 %v1265, %v1424
        %1426 = vdwg.mxu0
        %v1427 = vld [vmem:[#allocation2] sm:$0xfc]
        %v1428 = vld [vmem:[#allocation2 + $0x8] sm:$0xfc]
        %v1429 = vld [vmem:[#allocation2 + $0x10] sm:$0xff]
        %v1430 = vld [vmem:[#allocation2 + $0x18] sm:$0xff]
        %s1431 = scalar_lea.vmem [#allocation3], 896
        %v1432 = vld [vmem:[%s1431] sm:$0xff]
        %v1433 = vld [vmem:[%s1431 + $0x8] sm:$0xff]
        %v1434 = vld [vmem:[%s1431 + $0x10] sm:$0xff]
        %v1435 = vld [vmem:[%s1431 + $0x18] sm:$0xff]
        %v1436 = vld [vmem:[%s1431 + $0x20] sm:$0xff]
        %v1437 = vld [vmem:[%s1431 + $0x28] sm:$0xff]
        %v1438 = vld [vmem:[%s1431 + $0x30] sm:$0xff]
        %v1439 = vld [vmem:[%s1431 + $0x38] sm:$0xff]
        %v1440 = vld [vmem:[%s1431 + $0x40] sm:$0xff]
        %v1441 = vld [vmem:[%s1431 + $0x48] sm:$0xff]
        %v1442 = vld [vmem:[%s1431 + $0x50] sm:$0xff]
        %v1443 = vld [vmem:[%s1431 + $0x58] sm:$0xff]
        %v1444 = vld [vmem:[%s1431 + $0x60] sm:$0xff]
        %v1445 = vld [vmem:[%s1431 + $0x68] sm:$0xff]
        %v1446 = vld [vmem:[%s1431 + $0x70] sm:$0xff]
        %v1447 = vld [vmem:[%s1431 + $0x78] sm:$0xff]
        %v1448 = vld [vmem:[%s1431 + $0x80] sm:$0xff]
        %v1449 = vld [vmem:[%s1431 + $0x88] sm:$0xff]
        %v1450 = vld [vmem:[%s1431 + $0x90] sm:$0xff]
        %v1451 = vld [vmem:[%s1431 + $0x98] sm:$0xff]
        %v1452 = vld [vmem:[%s1431 + $0xa0] sm:$0xff]
        %v1453 = vld [vmem:[%s1431 + $0xa8] sm:$0xff]
        %v1454 = vld [vmem:[%s1431 + $0xb0] sm:$0xff]
        %v1455 = vld [vmem:[%s1431 + $0xb8] sm:$0xff]
        %v1456 = vld [vmem:[%s1431 + $0xc0] sm:$0xff]
        %v1457 = vld [vmem:[%s1431 + $0xc8] sm:$0xff]
        %v1458 = vld [vmem:[%s1431 + $0xd0] sm:$0xff]
        %v1459 = vld [vmem:[%s1431 + $0xd8] sm:$0xff]
        %v1460 = vld [vmem:[%s1431 + $0xe0] sm:$0xff]
        %v1461 = vld [vmem:[%s1431 + $0xe8] sm:$0xff]
        %v1462 = vld [vmem:[%s1431 + $0xf0] sm:$0xff]
        %v1463 = vld [vmem:[%s1431 + $0xf8] sm:$0xff]
        %v1464 = vld [vmem:[%s1431 + $0x100] sm:$0xff]
        %v1465 = vld [vmem:[%s1431 + $0x108] sm:$0xff]
        %v1466 = vld [vmem:[%s1431 + $0x110] sm:$0xff]
        %v1467 = vld [vmem:[%s1431 + $0x118] sm:$0xff]
        %v1468 = vld [vmem:[%s1431 + $0x120] sm:$0xff]
        %v1469 = vld [vmem:[%s1431 + $0x128] sm:$0xff]
        %v1470 = vld [vmem:[%s1431 + $0x130] sm:$0xff]
        %v1471 = vld [vmem:[%s1431 + $0x138] sm:$0xff]
        %v1472 = vld [vmem:[%s1431 + $0x140] sm:$0xff]
        %v1473 = vld [vmem:[%s1431 + $0x148] sm:$0xff]
        %v1474 = vld [vmem:[%s1431 + $0x150] sm:$0xff]
        %v1475 = vld [vmem:[%s1431 + $0x158] sm:$0xff]
        %v1476 = vld [vmem:[%s1431 + $0x160] sm:$0xff]
        %v1477 = vld [vmem:[%s1431 + $0x168] sm:$0xff]
        %v1478 = vld [vmem:[%s1431 + $0x170] sm:$0xff]
        %v1479 = vld [vmem:[%s1431 + $0x178] sm:$0xff]
        %v1480 = vld [vmem:[%s1431 + $0x180] sm:$0xff]
        %v1481 = vld [vmem:[%s1431 + $0x188] sm:$0xff]
        %v1482 = vld [vmem:[%s1431 + $0x190] sm:$0xff]
        %v1483 = vld [vmem:[%s1431 + $0x198] sm:$0xff]
        %v1484 = vld [vmem:[%s1431 + $0x1a0] sm:$0xff]
        %v1485 = vld [vmem:[%s1431 + $0x1a8] sm:$0xff]
        %v1486 = vld [vmem:[%s1431 + $0x1b0] sm:$0xff]
        %v1487 = vld [vmem:[%s1431 + $0x1b8] sm:$0xff]
        %v1488 = vunpack.c.l.bf16 %v1432
        %v1489 = vunpack.c.h.bf16 %v1432
        %v1490 = vunpack.c.l.bf16 %v1433
        %v1491 = vunpack.c.h.bf16 %v1433
        %v1492 = vunpack.c.l.bf16 %v1434
        %v1493 = vunpack.c.h.bf16 %v1434
        %v1494 = vunpack.c.l.bf16 %v1435
        %v1495 = vunpack.c.h.bf16 %v1435
        %v1496 = vunpack.c.l.bf16 %v1436
        %v1497 = vunpack.c.h.bf16 %v1436
        %v1498 = vunpack.c.l.bf16 %v1437
        %v1499 = vunpack.c.h.bf16 %v1437
        %v1500 = vunpack.c.l.bf16 %v1438
        %v1501 = vunpack.c.h.bf16 %v1438
        %v1502 = vunpack.c.l.bf16 %v1439
        %v1503 = vunpack.c.h.bf16 %v1439
        %v1504 = vunpack.c.l.bf16 %v1440
        %v1505 = vunpack.c.h.bf16 %v1440
        %v1506 = vunpack.c.l.bf16 %v1441
        %v1507 = vunpack.c.h.bf16 %v1441
        %v1508 = vunpack.c.l.bf16 %v1442
        %v1509 = vunpack.c.h.bf16 %v1442
        %v1510 = vunpack.c.l.bf16 %v1443
        %v1511 = vunpack.c.h.bf16 %v1443
        %v1512 = vunpack.c.l.bf16 %v1444
        %v1513 = vunpack.c.h.bf16 %v1444
        %v1514 = vunpack.c.l.bf16 %v1445
        %v1515 = vunpack.c.h.bf16 %v1445
        %v1516 = vunpack.c.l.bf16 %v1446
        %v1517 = vunpack.c.h.bf16 %v1446
        %v1518 = vunpack.c.l.bf16 %v1447
        %v1519 = vunpack.c.h.bf16 %v1447
        %v1520 = vunpack.c.l.bf16 %v1448
        %v1521 = vunpack.c.h.bf16 %v1448
        %v1522 = vunpack.c.l.bf16 %v1449
        %v1523 = vunpack.c.h.bf16 %v1449
        %v1524 = vunpack.c.l.bf16 %v1450
        %v1525 = vunpack.c.h.bf16 %v1450
        %v1526 = vunpack.c.l.bf16 %v1451
        %v1527 = vunpack.c.h.bf16 %v1451
        %v1528 = vunpack.c.l.bf16 %v1452
        %v1529 = vunpack.c.h.bf16 %v1452
        %v1530 = vunpack.c.l.bf16 %v1453
        %v1531 = vunpack.c.h.bf16 %v1453
        %v1532 = vunpack.c.l.bf16 %v1454
        %v1533 = vunpack.c.h.bf16 %v1454
        %v1534 = vunpack.c.l.bf16 %v1455
        %v1535 = vunpack.c.h.bf16 %v1455
        %v1536 = vunpack.c.l.bf16 %v1456
        %v1537 = vunpack.c.h.bf16 %v1456
        %v1538 = vunpack.c.l.bf16 %v1457
        %v1539 = vunpack.c.h.bf16 %v1457
        %v1540 = vunpack.c.l.bf16 %v1458
        %v1541 = vunpack.c.h.bf16 %v1458
        %v1542 = vunpack.c.l.bf16 %v1459
        %v1543 = vunpack.c.h.bf16 %v1459
        %v1544 = vunpack.c.l.bf16 %v1460
        %v1545 = vunpack.c.h.bf16 %v1460
        %v1546 = vunpack.c.l.bf16 %v1461
        %v1547 = vunpack.c.h.bf16 %v1461
        %v1548 = vunpack.c.l.bf16 %v1462
        %v1549 = vunpack.c.h.bf16 %v1462
        %v1550 = vunpack.c.l.bf16 %v1463
        %v1551 = vunpack.c.h.bf16 %v1463
        %v1552 = vunpack.c.l.bf16 %v1464
        %v1553 = vunpack.c.h.bf16 %v1464
        %v1554 = vunpack.c.l.bf16 %v1465
        %v1555 = vunpack.c.h.bf16 %v1465
        %v1556 = vunpack.c.l.bf16 %v1466
        %v1557 = vunpack.c.h.bf16 %v1466
        %v1558 = vunpack.c.l.bf16 %v1467
        %v1559 = vunpack.c.h.bf16 %v1467
        %v1560 = vunpack.c.l.bf16 %v1468
        %v1561 = vunpack.c.h.bf16 %v1468
        %v1562 = vunpack.c.l.bf16 %v1469
        %v1563 = vunpack.c.h.bf16 %v1469
        %v1564 = vunpack.c.l.bf16 %v1470
        %v1565 = vunpack.c.h.bf16 %v1470
        %v1566 = vunpack.c.l.bf16 %v1471
        %v1567 = vunpack.c.h.bf16 %v1471
        %v1568 = vunpack.c.l.bf16 %v1472
        %v1569 = vunpack.c.h.bf16 %v1472
        %v1570 = vunpack.c.l.bf16 %v1473
        %v1571 = vunpack.c.h.bf16 %v1473
        %v1572 = vunpack.c.l.bf16 %v1474
        %v1573 = vunpack.c.h.bf16 %v1474
        %v1574 = vunpack.c.l.bf16 %v1475
        %v1575 = vunpack.c.h.bf16 %v1475
        %v1576 = vunpack.c.l.bf16 %v1476
        %v1577 = vunpack.c.h.bf16 %v1476
        %v1578 = vunpack.c.l.bf16 %v1477
        %v1579 = vunpack.c.h.bf16 %v1477
        %v1580 = vunpack.c.l.bf16 %v1478
        %v1581 = vunpack.c.h.bf16 %v1478
        %v1582 = vunpack.c.l.bf16 %v1479
        %v1583 = vunpack.c.h.bf16 %v1479
        %v1584 = vunpack.c.l.bf16 %v1480
        %v1585 = vunpack.c.h.bf16 %v1480
        %v1586 = vunpack.c.l.bf16 %v1481
        %v1587 = vunpack.c.h.bf16 %v1481
        %v1588 = vunpack.c.l.bf16 %v1482
        %v1589 = vunpack.c.h.bf16 %v1482
        %v1590 = vunpack.c.l.bf16 %v1483
        %v1591 = vunpack.c.h.bf16 %v1483
        %v1592 = vunpack.c.l.bf16 %v1484
        %v1593 = vunpack.c.h.bf16 %v1484
        %v1594 = vunpack.c.l.bf16 %v1485
        %v1595 = vunpack.c.h.bf16 %v1485
        %v1596 = vunpack.c.l.bf16 %v1486
        %v1597 = vunpack.c.h.bf16 %v1486
        %v1598 = vunpack.c.l.bf16 %v1487
        %v1599 = vunpack.c.h.bf16 %v1487
        %v1604 = vrot.slane %v1427, 2
        %v1605 = vrot.slane %v1429, 2
        %v1606 = vsel %vm434, %v1604, %v1605
        %v1607 = vrot.slane %v1428, 2
        %v1608 = vrot.slane %v1430, 2
        %v1609 = vsel %vm434, %v1607, %v1608
        %v1612 = vsel %vm748, %v1609, 0
        %v1614 = vsel %vm748, %v1608, 0
        %1616 = vmatprep.subr.mxu0 %v1489
        %1617 = vmatpush1.msra.mxu0 %v1488
        %1618 = vmatprep.subr.mxu0 %v1493
        %1619 = vmatpush1.msra.mxu0 %v1492
        %1620 = vmatprep.subr.mxu0 %v1497
        %1621 = vmatpush1.msra.mxu0 %v1496
        %1622 = vmatprep.subr.mxu0 %v1501
        %1623 = vmatpush1.msra.mxu0 %v1500
        %1624 = vmatprep.subr.mxu0 %v1505
        %1625 = vmatpush1.msra.mxu0 %v1504
        %1626 = vmatprep.subr.mxu0 %v1509
        %1627 = vmatpush1.msra.mxu0 %v1508
        %1628 = vmatprep.subr.mxu0 %v1513
        %1629 = vmatpush1.msra.mxu0 %v1512
        %1630 = vmatprep.subr.mxu0 %v1517
        %1631 = vmatpush1.msra.mxu0 %v1516
        %1632 = vmatprep.subr.mxu0 %v1521
        %1633 = vmatpush1.msra.mxu0 %v1520
        %1634 = vmatprep.subr.mxu0 %v1525
        %1635 = vmatpush1.msra.mxu0 %v1524
        %1636 = vmatprep.subr.mxu0 %v1529
        %1637 = vmatpush1.msra.mxu0 %v1528
        %1638 = vmatprep.subr.mxu0 %v1533
        %1639 = vmatpush1.msra.mxu0 %v1532
        %1640 = vmatprep.subr.mxu0 %v1537
        %1641 = vmatpush1.msra.mxu0 %v1536
        %1642 = vmatprep.subr.mxu0 %v1541
        %1643 = vmatpush1.msra.mxu0 %v1540
        %1644 = vmatprep.subr.mxu0 %v1545
        %1645 = vmatpush1.msra.mxu0 %v1544
        %1646 = vmatprep.subr.mxu0 %v1549
        %1647 = vmatpush1.msra.mxu0 %v1548
        %1648 = vmatprep.subr.mxu0 %v1553
        %1649 = vmatpush1.msra.mxu0 %v1552
        %1650 = vmatprep.subr.mxu0 %v1557
        %1651 = vmatpush1.msra.mxu0 %v1556
        %1652 = vmatprep.subr.mxu0 %v1561
        %1653 = vmatpush1.msra.mxu0 %v1560
        %1654 = vmatprep.subr.mxu0 %v1565
        %1655 = vmatpush1.msra.mxu0 %v1564
        %1656 = vmatprep.subr.mxu0 %v1569
        %1657 = vmatpush1.msra.mxu0 %v1568
        %1658 = vmatprep.subr.mxu0 %v1573
        %1659 = vmatpush1.msra.mxu0 %v1572
        %1660 = vmatprep.subr.mxu0 %v1577
        %1661 = vmatpush1.msra.mxu0 %v1576
        %1662 = vmatprep.subr.mxu0 %v1581
        %1663 = vmatpush1.msra.mxu0 %v1580
        %1664 = vmatprep.subr.mxu0 %v1585
        %1665 = vmatpush1.msra.mxu0 %v1584
        %1666 = vmatprep.subr.mxu0 %v1589
        %1667 = vmatpush1.msra.mxu0 %v1588
        %1668 = vmatprep.subr.mxu0 %v1593
        %1669 = vmatpush1.msra.mxu0 %v1592
        %1670 = vmatprep.subr.mxu0 %v1597
        %1671 = vmatpush1.msra.mxu0 %v1596
        %1672 = vmatprep.subr.mxu0 0.0
        %1673 = vmatpush1.msra.mxu0 0.0
        %1674 = vmatprep.subr.mxu0 0.0
        %1675 = vmatpush1.msra.mxu0 0.0
        %1676 = vmatprep.subr.mxu0 0.0
        %1677 = vmatpush1.msra.mxu0 0.0
        %1678 = vmatprep.subr.mxu0 0.0
        %1679 = vmatpush1.msra.mxu0 0.0
        %1680 = vmatprep.mubr.f32.mxu0 %v1612
        %1681 = vmatmul.mubr.f32.gmra.mrb[0].mxu0 %v1606
        %v1682 = vpop.f32.mrb[0].mxu0
        %v1683 = vadd.f32 0.0, %v1682
        %v1684 = vpop.f32.mrb[0].mxu0
        %v1685 = vadd.f32 0.0, %v1684
        %1686 = vmatprep.mubr.f32.mxu0 %v1614
        %1687 = vmatmul.mubr.f32.gmra.mrb[0].mxu0 %v1605
        %v1688 = vpop.f32.mrb[0].mxu0
        %v1689 = vadd.f32 0.0, %v1688
        %v1690 = vpop.f32.mrb[0].mxu0
        %v1691 = vadd.f32 0.0, %v1690
        %1692 = vdwg.mxu0
        %1693 = vmatprep.subr.mxu0 %v1491
        %1694 = vmatpush1.msra.mxu0 %v1490
        %1695 = vmatprep.subr.mxu0 %v1495
        %1696 = vmatpush1.msra.mxu0 %v1494
        %1697 = vmatprep.subr.mxu0 %v1499
        %1698 = vmatpush1.msra.mxu0 %v1498
        %1699 = vmatprep.subr.mxu0 %v1503
        %1700 = vmatpush1.msra.mxu0 %v1502
        %1701 = vmatprep.subr.mxu0 %v1507
        %1702 = vmatpush1.msra.mxu0 %v1506
        %1703 = vmatprep.subr.mxu0 %v1511
        %1704 = vmatpush1.msra.mxu0 %v1510
        %1705 = vmatprep.subr.mxu0 %v1515
        %1706 = vmatpush1.msra.mxu0 %v1514
        %1707 = vmatprep.subr.mxu0 %v1519
        %1708 = vmatpush1.msra.mxu0 %v1518
        %1709 = vmatprep.subr.mxu0 %v1523
        %1710 = vmatpush1.msra.mxu0 %v1522
        %1711 = vmatprep.subr.mxu0 %v1527
        %1712 = vmatpush1.msra.mxu0 %v1526
        %1713 = vmatprep.subr.mxu0 %v1531
        %1714 = vmatpush1.msra.mxu0 %v1530
        %1715 = vmatprep.subr.mxu0 %v1535
        %1716 = vmatpush1.msra.mxu0 %v1534
        %1717 = vmatprep.subr.mxu0 %v1539
        %1718 = vmatpush1.msra.mxu0 %v1538
        %1719 = vmatprep.subr.mxu0 %v1543
        %1720 = vmatpush1.msra.mxu0 %v1542
        %1721 = vmatprep.subr.mxu0 %v1547
        %1722 = vmatpush1.msra.mxu0 %v1546
        %1723 = vmatprep.subr.mxu0 %v1551
        %1724 = vmatpush1.msra.mxu0 %v1550
        %1725 = vmatprep.subr.mxu0 %v1555
        %1726 = vmatpush1.msra.mxu0 %v1554
        %1727 = vmatprep.subr.mxu0 %v1559
        %1728 = vmatpush1.msra.mxu0 %v1558
        %1729 = vmatprep.subr.mxu0 %v1563
        %1730 = vmatpush1.msra.mxu0 %v1562
        %1731 = vmatprep.subr.mxu0 %v1567
        %1732 = vmatpush1.msra.mxu0 %v1566
        %1733 = vmatprep.subr.mxu0 %v1571
        %1734 = vmatpush1.msra.mxu0 %v1570
        %1735 = vmatprep.subr.mxu0 %v1575
        %1736 = vmatpush1.msra.mxu0 %v1574
        %1737 = vmatprep.subr.mxu0 %v1579
        %1738 = vmatpush1.msra.mxu0 %v1578
        %1739 = vmatprep.subr.mxu0 %v1583
        %1740 = vmatpush1.msra.mxu0 %v1582
        %1741 = vmatprep.subr.mxu0 %v1587
        %1742 = vmatpush1.msra.mxu0 %v1586
        %1743 = vmatprep.subr.mxu0 %v1591
        %1744 = vmatpush1.msra.mxu0 %v1590
        %1745 = vmatprep.subr.mxu0 %v1595
        %1746 = vmatpush1.msra.mxu0 %v1594
        %1747 = vmatprep.subr.mxu0 %v1599
        %1748 = vmatpush1.msra.mxu0 %v1598
        %1749 = vmatprep.subr.mxu0 0.0
        %1750 = vmatpush1.msra.mxu0 0.0
        %1751 = vmatprep.subr.mxu0 0.0
        %1752 = vmatpush1.msra.mxu0 0.0
        %1753 = vmatprep.subr.mxu0 0.0
        %1754 = vmatpush1.msra.mxu0 0.0
        %1755 = vmatprep.subr.mxu0 0.0
        %1756 = vmatpush1.msra.mxu0 0.0
        %1757 = vmatprep.mubr.f32.mxu0 %v1612
        %1758 = vmatmul.mubr.f32.gmra.mrb[0].mxu0 %v1606
        %v1759 = vpop.f32.mrb[0].mxu0
        %v1760 = vadd.f32 0.0, %v1759
        %v1761 = vpop.f32.mrb[0].mxu0
        %v1762 = vadd.f32 0.0, %v1761
        %1763 = vmatprep.mubr.f32.mxu0 %v1614
        %1764 = vmatmul.mubr.f32.gmra.mrb[0].mxu0 %v1605
        %v1765 = vpop.f32.mrb[0].mxu0
        %v1766 = vadd.f32 0.0, %v1765
        %v1767 = vpop.f32.mrb[0].mxu0
        %v1768 = vadd.f32 0.0, %v1767
        %1769 = vdwg.mxu0
        %v1770 = vadd.f32 %v1340, %v1683
        %v1771 = vadd.f32 %v1342, %v1685
        %v1772 = vadd.f32 %v1417, %v1760
        %v1773 = vadd.f32 %v1419, %v1762
        %v1774 = vadd.f32 %v1346, %v1689
        %v1775 = vadd.f32 %v1348, %v1691
        %v1776 = vadd.f32 %v1423, %v1766
        %v1777 = vadd.f32 %v1425, %v1768
        %v1778 = vld [vmem:[%s4] sm:$0xf]
        %v1780 = vlaneseq
        %v1781 = vshrl.u32 %v1780, 7
        %v1782 = vsub.s32 0, %v1781
        %v1783 = vrot.slane %v1778, %v1782
        %v1784 = vlaneseq
        %v1785 = vshrl.u32 %v1784, 7
        %v1786 = vsub.s32 1, %v1785
        %v1787 = vrot.slane %v1778, %v1786
        %v1788 = vlaneseq
        %v1789 = vshrl.u32 %v1788, 7
        %v1790 = vsub.s32 2, %v1789
        %v1791 = vrot.slane %v1778, %v1790
        %v1792 = vlaneseq
        %v1793 = vshrl.u32 %v1792, 7
        %v1794 = vsub.s32 3, %v1793
        %v1795 = vrot.slane %v1778, %v1794
        %v1800 = vadd.f32 %v1770, %v1783
        %v1801 = vadd.f32 %v1771, %v1787
        %v1802 = vadd.f32 %v1772, %v1791
        %v1803 = vadd.f32 %v1773, %v1795
        %v1804 = vadd.f32 %v1774, %v1783
        %v1805 = vadd.f32 %v1775, %v1787
        %v1806 = vadd.f32 %v1776, %v1791
        %v1807 = vadd.f32 %v1777, %v1795
        %v1808 = vmax.f32 %v1800, 0.0
        %v1809 = vmax.f32 %v1801, 0.0
        %v1810 = vmax.f32 %v1802, 0.0
        %v1811 = vmax.f32 %v1803, 0.0
        %v1812 = vmax.f32 %v1804, 0.0
        %v1813 = vmax.f32 %v1805, 0.0
        %v1814 = vmax.f32 %v1806, 0.0
        %v1815 = vmax.f32 %v1807, 0.0
        %v1816 = vmax.f32 %v1808, %v1810
        %v1817 = vmax.f32 %v1809, %v1811
        %v1818 = vmax.f32 %v1812, %v1814
        %v1819 = vmax.f32 %v1813, %v1815
        %v1822 = vrot.slane %v1816, 1
        %v1823 = vrot.slane %v1817, 1
        %v1826 = vmax.f32 %v1816, %v1822
        %v1827 = vmax.f32 %v1817, %v1823
        %v1828 = vld [vmem:[#allocation6] sm:$0xf]
        %v1829 = vld [vmem:[#allocation6 + $0x4] sm:$0xf]
        %v1830 = vld [vmem:[#allocation6 + $0x8] sm:$0xf]
        %v1831 = vld [vmem:[#allocation6 + $0xc] sm:$0xf]
        %v1832 = vld [vmem:[#allocation6 + $0x10] sm:$0xf]
        %v1833 = vld [vmem:[#allocation6 + $0x14] sm:$0xf]
        %v1834 = vld [vmem:[#allocation6 + $0x18] sm:$0xf]
        %v1835 = vld [vmem:[#allocation6 + $0x1c] sm:$0xf]
        %v1836 = vld [vmem:[#allocation6 + $0x20] sm:$0xf]
        %v1837 = vld [vmem:[#allocation6 + $0x24] sm:$0xf]
        %v1838 = vld [vmem:[#allocation6 + $0x28] sm:$0xf]
        %v1839 = vld [vmem:[#allocation6 + $0x2c] sm:$0xf]
        %v1840 = vld [vmem:[#allocation6 + $0x30] sm:$0xf]
        %v1841 = vld [vmem:[#allocation6 + $0x34] sm:$0xf]
        %v1842 = vld [vmem:[#allocation6 + $0x38] sm:$0xf]
        %v1843 = vld [vmem:[#allocation6 + $0x3c] sm:$0xf]
        %v1844 = vld [vmem:[#allocation6 + $0x40] sm:$0xf]
        %v1845 = vld [vmem:[#allocation6 + $0x44] sm:$0xf]
        %v1846 = vld [vmem:[#allocation6 + $0x48] sm:$0xf]
        %v1847 = vld [vmem:[#allocation6 + $0x4c] sm:$0xf]
        %v1848 = vld [vmem:[#allocation6 + $0x50] sm:$0xf]
        %v1849 = vld [vmem:[#allocation6 + $0x54] sm:$0xf]
        %v1850 = vld [vmem:[#allocation6 + $0x58] sm:$0xf]
        %v1851 = vld [vmem:[#allocation6 + $0x5c] sm:$0xf]
        %v1852 = vld [vmem:[#allocation6 + $0x60] sm:$0xf]
        %v1853 = vld [vmem:[#allocation6 + $0x64] sm:$0xf]
        %v1854 = vld [vmem:[#allocation6 + $0x68] sm:$0xf]
        %v1855 = vld [vmem:[#allocation6 + $0x6c] sm:$0xf]
        %v1856 = vld [vmem:[#allocation6 + $0x70] sm:$0xf]
        %v1857 = vld [vmem:[#allocation6 + $0x74] sm:$0xf]
        %v1858 = vld [vmem:[#allocation6 + $0x78] sm:$0xf]
        %v1859 = vld [vmem:[#allocation6 + $0x7c] sm:$0xf]
        %v1860 = vunpack.c.l.bf16 %v1828
        %v1861 = vunpack.c.l.bf16 %v1829
        %v1862 = vunpack.c.l.bf16 %v1830
        %v1863 = vunpack.c.l.bf16 %v1831
        %v1864 = vunpack.c.l.bf16 %v1832
        %v1865 = vunpack.c.l.bf16 %v1833
        %v1866 = vunpack.c.l.bf16 %v1834
        %v1867 = vunpack.c.l.bf16 %v1835
        %v1868 = vunpack.c.l.bf16 %v1836
        %v1869 = vunpack.c.l.bf16 %v1837
        %v1870 = vunpack.c.l.bf16 %v1838
        %v1871 = vunpack.c.l.bf16 %v1839
        %v1872 = vunpack.c.l.bf16 %v1840
        %v1873 = vunpack.c.l.bf16 %v1841
        %v1874 = vunpack.c.l.bf16 %v1842
        %v1875 = vunpack.c.l.bf16 %v1843
        %v1876 = vunpack.c.l.bf16 %v1844
        %v1877 = vunpack.c.l.bf16 %v1845
        %v1878 = vunpack.c.l.bf16 %v1846
        %v1879 = vunpack.c.l.bf16 %v1847
        %v1880 = vunpack.c.l.bf16 %v1848
        %v1881 = vunpack.c.l.bf16 %v1849
        %v1882 = vunpack.c.l.bf16 %v1850
        %v1883 = vunpack.c.l.bf16 %v1851
        %v1884 = vunpack.c.l.bf16 %v1852
        %v1885 = vunpack.c.l.bf16 %v1853
        %v1886 = vunpack.c.l.bf16 %v1854
        %v1887 = vunpack.c.l.bf16 %v1855
        %v1888 = vunpack.c.l.bf16 %v1856
        %v1889 = vunpack.c.l.bf16 %v1857
        %v1890 = vunpack.c.l.bf16 %v1858
        %v1891 = vunpack.c.l.bf16 %v1859
        %s1892 = scalar_lea.vmem [#allocation6], 128
        %v1893 = vld [vmem:[%s1892] sm:$0xf]
        %v1894 = vld [vmem:[%s1892 + $0x4] sm:$0xf]
        %v1895 = vld [vmem:[%s1892 + $0x8] sm:$0xf]
        %v1896 = vld [vmem:[%s1892 + $0xc] sm:$0xf]
        %v1897 = vld [vmem:[%s1892 + $0x10] sm:$0xf]
        %v1898 = vld [vmem:[%s1892 + $0x14] sm:$0xf]
        %v1899 = vld [vmem:[%s1892 + $0x18] sm:$0xf]
        %v1900 = vld [vmem:[%s1892 + $0x1c] sm:$0xf]
        %v1901 = vld [vmem:[%s1892 + $0x20] sm:$0xf]
        %v1902 = vld [vmem:[%s1892 + $0x24] sm:$0xf]
        %v1903 = vld [vmem:[%s1892 + $0x28] sm:$0xf]
        %v1904 = vld [vmem:[%s1892 + $0x2c] sm:$0xf]
        %v1905 = vld [vmem:[%s1892 + $0x30] sm:$0xf]
        %v1906 = vld [vmem:[%s1892 + $0x34] sm:$0xf]
        %v1907 = vld [vmem:[%s1892 + $0x38] sm:$0xf]
        %v1908 = vld [vmem:[%s1892 + $0x3c] sm:$0xf]
        %v1909 = vld [vmem:[%s1892 + $0x40] sm:$0xf]
        %v1910 = vld [vmem:[%s1892 + $0x44] sm:$0xf]
        %v1911 = vld [vmem:[%s1892 + $0x48] sm:$0xf]
        %v1912 = vld [vmem:[%s1892 + $0x4c] sm:$0xf]
        %v1913 = vld [vmem:[%s1892 + $0x50] sm:$0xf]
        %v1914 = vld [vmem:[%s1892 + $0x54] sm:$0xf]
        %v1915 = vld [vmem:[%s1892 + $0x58] sm:$0xf]
        %v1916 = vld [vmem:[%s1892 + $0x5c] sm:$0xf]
        %v1917 = vld [vmem:[%s1892 + $0x60] sm:$0xf]
        %v1918 = vld [vmem:[%s1892 + $0x64] sm:$0xf]
        %v1919 = vld [vmem:[%s1892 + $0x68] sm:$0xf]
        %v1920 = vld [vmem:[%s1892 + $0x6c] sm:$0xf]
        %v1921 = vld [vmem:[%s1892 + $0x70] sm:$0xf]
        %v1922 = vld [vmem:[%s1892 + $0x74] sm:$0xf]
        %v1923 = vld [vmem:[%s1892 + $0x78] sm:$0xf]
        %v1924 = vld [vmem:[%s1892 + $0x7c] sm:$0xf]
        %v1925 = vunpack.c.l.bf16 %v1893
        %v1926 = vunpack.c.l.bf16 %v1894
        %v1927 = vunpack.c.l.bf16 %v1895
        %v1928 = vunpack.c.l.bf16 %v1896
        %v1929 = vunpack.c.l.bf16 %v1897
        %v1930 = vunpack.c.l.bf16 %v1898
        %v1931 = vunpack.c.l.bf16 %v1899
        %v1932 = vunpack.c.l.bf16 %v1900
        %v1933 = vunpack.c.l.bf16 %v1901
        %v1934 = vunpack.c.l.bf16 %v1902
        %v1935 = vunpack.c.l.bf16 %v1903
        %v1936 = vunpack.c.l.bf16 %v1904
        %v1937 = vunpack.c.l.bf16 %v1905
        %v1938 = vunpack.c.l.bf16 %v1906
        %v1939 = vunpack.c.l.bf16 %v1907
        %v1940 = vunpack.c.l.bf16 %v1908
        %v1941 = vunpack.c.l.bf16 %v1909
        %v1942 = vunpack.c.l.bf16 %v1910
        %v1943 = vunpack.c.l.bf16 %v1911
        %v1944 = vunpack.c.l.bf16 %v1912
        %v1945 = vunpack.c.l.bf16 %v1913
        %v1946 = vunpack.c.l.bf16 %v1914
        %v1947 = vunpack.c.l.bf16 %v1915
        %v1948 = vunpack.c.l.bf16 %v1916
        %v1949 = vunpack.c.l.bf16 %v1917
        %v1950 = vunpack.c.l.bf16 %v1918
        %v1951 = vunpack.c.l.bf16 %v1919
        %v1952 = vunpack.c.l.bf16 %v1920
        %v1953 = vunpack.c.l.bf16 %v1921
        %v1954 = vunpack.c.l.bf16 %v1922
        %v1955 = vunpack.c.l.bf16 %v1923
        %v1956 = vunpack.c.l.bf16 %v1924
        %v1959 = vrot.slane %v1826, 2
        %v1960 = vrot.slane %v1827, 2
        %1963 = vmatprep.subr.mxu0 0.0
        %1964 = vmatpush1.msra.mxu0 %v1925
        %1965 = vmatprep.subr.mxu0 0.0
        %1966 = vmatpush1.msra.mxu0 %v1926
        %1967 = vmatprep.subr.mxu0 0.0
        %1968 = vmatpush1.msra.mxu0 %v1927
        %1969 = vmatprep.subr.mxu0 0.0
        %1970 = vmatpush1.msra.mxu0 %v1928
        %1971 = vmatprep.subr.mxu0 0.0
        %1972 = vmatpush1.msra.mxu0 %v1929
        %1973 = vmatprep.subr.mxu0 0.0
        %1974 = vmatpush1.msra.mxu0 %v1930
        %1975 = vmatprep.subr.mxu0 0.0
        %1976 = vmatpush1.msra.mxu0 %v1931
        %1977 = vmatprep.subr.mxu0 0.0
        %1978 = vmatpush1.msra.mxu0 %v1932
        %1979 = vmatprep.subr.mxu0 0.0
        %1980 = vmatpush1.msra.mxu0 %v1933
        %1981 = vmatprep.subr.mxu0 0.0
        %1982 = vmatpush1.msra.mxu0 %v1934
        %1983 = vmatprep.subr.mxu0 0.0
        %1984 = vmatpush1.msra.mxu0 %v1935
        %1985 = vmatprep.subr.mxu0 0.0
        %1986 = vmatpush1.msra.mxu0 %v1936
        %1987 = vmatprep.subr.mxu0 0.0
        %1988 = vmatpush1.msra.mxu0 %v1937
        %1989 = vmatprep.subr.mxu0 0.0
        %1990 = vmatpush1.msra.mxu0 %v1938
        %1991 = vmatprep.subr.mxu0 0.0
        %1992 = vmatpush1.msra.mxu0 %v1939
        %1993 = vmatprep.subr.mxu0 0.0
        %1994 = vmatpush1.msra.mxu0 %v1940
        %1995 = vmatprep.subr.mxu0 0.0
        %1996 = vmatpush1.msra.mxu0 %v1941
        %1997 = vmatprep.subr.mxu0 0.0
        %1998 = vmatpush1.msra.mxu0 %v1942
        %1999 = vmatprep.subr.mxu0 0.0
        %2000 = vmatpush1.msra.mxu0 %v1943
        %2001 = vmatprep.subr.mxu0 0.0
        %2002 = vmatpush1.msra.mxu0 %v1944
        %2003 = vmatprep.subr.mxu0 0.0
        %2004 = vmatpush1.msra.mxu0 %v1945
        %2005 = vmatprep.subr.mxu0 0.0
        %2006 = vmatpush1.msra.mxu0 %v1946
        %2007 = vmatprep.subr.mxu0 0.0
        %2008 = vmatpush1.msra.mxu0 %v1947
        %2009 = vmatprep.subr.mxu0 0.0
        %2010 = vmatpush1.msra.mxu0 %v1948
        %2011 = vmatprep.subr.mxu0 0.0
        %2012 = vmatpush1.msra.mxu0 %v1949
        %2013 = vmatprep.subr.mxu0 0.0
        %2014 = vmatpush1.msra.mxu0 %v1950
        %2015 = vmatprep.subr.mxu0 0.0
        %2016 = vmatpush1.msra.mxu0 %v1951
        %2017 = vmatprep.subr.mxu0 0.0
        %2018 = vmatpush1.msra.mxu0 %v1952
        %2019 = vmatprep.subr.mxu0 0.0
        %2020 = vmatpush1.msra.mxu0 %v1953
        %2021 = vmatprep.subr.mxu0 0.0
        %2022 = vmatpush1.msra.mxu0 %v1954
        %2023 = vmatprep.subr.mxu0 0.0
        %2024 = vmatpush1.msra.mxu0 %v1955
        %2025 = vmatprep.subr.mxu0 0.0
        %2026 = vmatpush1.msra.mxu0 %v1956
        %2027 = vmatprep.mubr.f32.mxu0 %v1960
        %2028 = vmatmul.mubr.f32.gmra.mrb[0].mxu0 %v1959
        %v2029 = vpop.f32.mrb[0].mxu0
        %v2030 = vadd.f32 0.0, %v2029
        %v2031 = vpop.f32.mrb[0].mxu0
        %2032 = vdwg.mxu0
        %2033 = vmatprep.subr.mxu0 0.0
        %2034 = vmatpush1.msra.mxu0 %v1860
        %2035 = vmatprep.subr.mxu0 0.0
        %2036 = vmatpush1.msra.mxu0 %v1861
        %2037 = vmatprep.subr.mxu0 0.0
        %2038 = vmatpush1.msra.mxu0 %v1862
        %2039 = vmatprep.subr.mxu0 0.0
        %2040 = vmatpush1.msra.mxu0 %v1863
        %2041 = vmatprep.subr.mxu0 0.0
        %2042 = vmatpush1.msra.mxu0 %v1864
        %2043 = vmatprep.subr.mxu0 0.0
        %2044 = vmatpush1.msra.mxu0 %v1865
        %2045 = vmatprep.subr.mxu0 0.0
        %2046 = vmatpush1.msra.mxu0 %v1866
        %2047 = vmatprep.subr.mxu0 0.0
        %2048 = vmatpush1.msra.mxu0 %v1867
        %2049 = vmatprep.subr.mxu0 0.0
        %2050 = vmatpush1.msra.mxu0 %v1868
        %2051 = vmatprep.subr.mxu0 0.0
        %2052 = vmatpush1.msra.mxu0 %v1869
        %2053 = vmatprep.subr.mxu0 0.0
        %2054 = vmatpush1.msra.mxu0 %v1870
        %2055 = vmatprep.subr.mxu0 0.0
        %2056 = vmatpush1.msra.mxu0 %v1871
        %2057 = vmatprep.subr.mxu0 0.0
        %2058 = vmatpush1.msra.mxu0 %v1872
        %2059 = vmatprep.subr.mxu0 0.0
        %2060 = vmatpush1.msra.mxu0 %v1873
        %2061 = vmatprep.subr.mxu0 0.0
        %2062 = vmatpush1.msra.mxu0 %v1874
        %2063 = vmatprep.subr.mxu0 0.0
        %2064 = vmatpush1.msra.mxu0 %v1875
        %2065 = vmatprep.subr.mxu0 0.0
        %2066 = vmatpush1.msra.mxu0 %v1876
        %2067 = vmatprep.subr.mxu0 0.0
        %2068 = vmatpush1.msra.mxu0 %v1877
        %2069 = vmatprep.subr.mxu0 0.0
        %2070 = vmatpush1.msra.mxu0 %v1878
        %2071 = vmatprep.subr.mxu0 0.0
        %2072 = vmatpush1.msra.mxu0 %v1879
        %2073 = vmatprep.subr.mxu0 0.0
        %2074 = vmatpush1.msra.mxu0 %v1880
        %2075 = vmatprep.subr.mxu0 0.0
        %2076 = vmatpush1.msra.mxu0 %v1881
        %2077 = vmatprep.subr.mxu0 0.0
        %2078 = vmatpush1.msra.mxu0 %v1882
        %2079 = vmatprep.subr.mxu0 0.0
        %2080 = vmatpush1.msra.mxu0 %v1883
        %2081 = vmatprep.subr.mxu0 0.0
        %2082 = vmatpush1.msra.mxu0 %v1884
        %2083 = vmatprep.subr.mxu0 0.0
        %2084 = vmatpush1.msra.mxu0 %v1885
        %2085 = vmatprep.subr.mxu0 0.0
        %2086 = vmatpush1.msra.mxu0 %v1886
        %2087 = vmatprep.subr.mxu0 0.0
        %2088 = vmatpush1.msra.mxu0 %v1887
        %2089 = vmatprep.subr.mxu0 0.0
        %2090 = vmatpush1.msra.mxu0 %v1888
        %2091 = vmatprep.subr.mxu0 0.0
        %2092 = vmatpush1.msra.mxu0 %v1889
        %2093 = vmatprep.subr.mxu0 0.0
        %2094 = vmatpush1.msra.mxu0 %v1890
        %2095 = vmatprep.subr.mxu0 0.0
        %2096 = vmatpush1.msra.mxu0 %v1891
        %2097 = vmatprep.mubr.f32.mxu0 %v1827
        %2098 = vmatmul.mubr.f32.gmra.mrb[0].mxu0 %v1826
        %v2099 = vpop.f32.mrb[0].mxu0
        %v2100 = vadd.f32 %v2030, %v2099
        %v2101 = vpop.f32.mrb[0].mxu0
        %2102 = vdwg.mxu0
        %s2103 = scalar_lea.vmem [#allocation6], 256
        %v2104 = vld [vmem:[%s2103] sm:$0xf]
        %v2105 = vld [vmem:[%s2103 + $0x4] sm:$0xf]
        %v2106 = vld [vmem:[%s2103 + $0x8] sm:$0xf]
        %v2107 = vld [vmem:[%s2103 + $0xc] sm:$0xf]
        %v2108 = vld [vmem:[%s2103 + $0x10] sm:$0xf]
        %v2109 = vld [vmem:[%s2103 + $0x14] sm:$0xf]
        %v2110 = vld [vmem:[%s2103 + $0x18] sm:$0xf]
        %v2111 = vld [vmem:[%s2103 + $0x1c] sm:$0xf]
        %v2112 = vld [vmem:[%s2103 + $0x20] sm:$0xf]
        %v2113 = vld [vmem:[%s2103 + $0x24] sm:$0xf]
        %v2114 = vld [vmem:[%s2103 + $0x28] sm:$0xf]
        %v2115 = vld [vmem:[%s2103 + $0x2c] sm:$0xf]
        %v2116 = vld [vmem:[%s2103 + $0x30] sm:$0xf]
        %v2117 = vld [vmem:[%s2103 + $0x34] sm:$0xf]
        %v2118 = vld [vmem:[%s2103 + $0x38] sm:$0xf]
        %v2119 = vld [vmem:[%s2103 + $0x3c] sm:$0xf]
        %v2120 = vld [vmem:[%s2103 + $0x40] sm:$0xf]
        %v2121 = vld [vmem:[%s2103 + $0x44] sm:$0xf]
        %v2122 = vld [vmem:[%s2103 + $0x48] sm:$0xf]
        %v2123 = vld [vmem:[%s2103 + $0x4c] sm:$0xf]
        %v2124 = vld [vmem:[%s2103 + $0x50] sm:$0xf]
        %v2125 = vld [vmem:[%s2103 + $0x54] sm:$0xf]
        %v2126 = vld [vmem:[%s2103 + $0x58] sm:$0xf]
        %v2127 = vld [vmem:[%s2103 + $0x5c] sm:$0xf]
        %v2128 = vld [vmem:[%s2103 + $0x60] sm:$0xf]
        %v2129 = vld [vmem:[%s2103 + $0x64] sm:$0xf]
        %v2130 = vld [vmem:[%s2103 + $0x68] sm:$0xf]
        %v2131 = vld [vmem:[%s2103 + $0x6c] sm:$0xf]
        %v2132 = vld [vmem:[%s2103 + $0x70] sm:$0xf]
        %v2133 = vld [vmem:[%s2103 + $0x74] sm:$0xf]
        %v2134 = vld [vmem:[%s2103 + $0x78] sm:$0xf]
        %v2135 = vld [vmem:[%s2103 + $0x7c] sm:$0xf]
        %v2136 = vunpack.c.l.bf16 %v2104
        %v2137 = vunpack.c.l.bf16 %v2105
        %v2138 = vunpack.c.l.bf16 %v2106
        %v2139 = vunpack.c.l.bf16 %v2107
        %v2140 = vunpack.c.l.bf16 %v2108
        %v2141 = vunpack.c.l.bf16 %v2109
        %v2142 = vunpack.c.l.bf16 %v2110
        %v2143 = vunpack.c.l.bf16 %v2111
        %v2144 = vunpack.c.l.bf16 %v2112
        %v2145 = vunpack.c.l.bf16 %v2113
        %v2146 = vunpack.c.l.bf16 %v2114
        %v2147 = vunpack.c.l.bf16 %v2115
        %v2148 = vunpack.c.l.bf16 %v2116
        %v2149 = vunpack.c.l.bf16 %v2117
        %v2150 = vunpack.c.l.bf16 %v2118
        %v2151 = vunpack.c.l.bf16 %v2119
        %v2152 = vunpack.c.l.bf16 %v2120
        %v2153 = vunpack.c.l.bf16 %v2121
        %v2154 = vunpack.c.l.bf16 %v2122
        %v2155 = vunpack.c.l.bf16 %v2123
        %v2156 = vunpack.c.l.bf16 %v2124
        %v2157 = vunpack.c.l.bf16 %v2125
        %v2158 = vunpack.c.l.bf16 %v2126
        %v2159 = vunpack.c.l.bf16 %v2127
        %v2160 = vunpack.c.l.bf16 %v2128
        %v2161 = vunpack.c.l.bf16 %v2129
        %v2162 = vunpack.c.l.bf16 %v2130
        %v2163 = vunpack.c.l.bf16 %v2131
        %v2164 = vunpack.c.l.bf16 %v2132
        %v2165 = vunpack.c.l.bf16 %v2133
        %v2166 = vunpack.c.l.bf16 %v2134
        %v2167 = vunpack.c.l.bf16 %v2135
        %v2168 = vrot.slane %v1826, 4
        %v2169 = vrot.slane %v1827, 4
        %2172 = vmatprep.subr.mxu0 0.0
        %2173 = vmatpush1.msra.mxu0 %v2136
        %2174 = vmatprep.subr.mxu0 0.0
        %2175 = vmatpush1.msra.mxu0 %v2137
        %2176 = vmatprep.subr.mxu0 0.0
        %2177 = vmatpush1.msra.mxu0 %v2138
        %2178 = vmatprep.subr.mxu0 0.0
        %2179 = vmatpush1.msra.mxu0 %v2139
        %2180 = vmatprep.subr.mxu0 0.0
        %2181 = vmatpush1.msra.mxu0 %v2140
        %2182 = vmatprep.subr.mxu0 0.0
        %2183 = vmatpush1.msra.mxu0 %v2141
        %2184 = vmatprep.subr.mxu0 0.0
        %2185 = vmatpush1.msra.mxu0 %v2142
        %2186 = vmatprep.subr.mxu0 0.0
        %2187 = vmatpush1.msra.mxu0 %v2143
        %2188 = vmatprep.subr.mxu0 0.0
        %2189 = vmatpush1.msra.mxu0 %v2144
        %2190 = vmatprep.subr.mxu0 0.0
        %2191 = vmatpush1.msra.mxu0 %v2145
        %2192 = vmatprep.subr.mxu0 0.0
        %2193 = vmatpush1.msra.mxu0 %v2146
        %2194 = vmatprep.subr.mxu0 0.0
        %2195 = vmatpush1.msra.mxu0 %v2147
        %2196 = vmatprep.subr.mxu0 0.0
        %2197 = vmatpush1.msra.mxu0 %v2148
        %2198 = vmatprep.subr.mxu0 0.0
        %2199 = vmatpush1.msra.mxu0 %v2149
        %2200 = vmatprep.subr.mxu0 0.0
        %2201 = vmatpush1.msra.mxu0 %v2150
        %2202 = vmatprep.subr.mxu0 0.0
        %2203 = vmatpush1.msra.mxu0 %v2151
        %2204 = vmatprep.subr.mxu0 0.0
        %2205 = vmatpush1.msra.mxu0 %v2152
        %2206 = vmatprep.subr.mxu0 0.0
        %2207 = vmatpush1.msra.mxu0 %v2153
        %2208 = vmatprep.subr.mxu0 0.0
        %2209 = vmatpush1.msra.mxu0 %v2154
        %2210 = vmatprep.subr.mxu0 0.0
        %2211 = vmatpush1.msra.mxu0 %v2155
        %2212 = vmatprep.subr.mxu0 0.0
        %2213 = vmatpush1.msra.mxu0 %v2156
        %2214 = vmatprep.subr.mxu0 0.0
        %2215 = vmatpush1.msra.mxu0 %v2157
        %2216 = vmatprep.subr.mxu0 0.0
        %2217 = vmatpush1.msra.mxu0 %v2158
        %2218 = vmatprep.subr.mxu0 0.0
        %2219 = vmatpush1.msra.mxu0 %v2159
        %2220 = vmatprep.subr.mxu0 0.0
        %2221 = vmatpush1.msra.mxu0 %v2160
        %2222 = vmatprep.subr.mxu0 0.0
        %2223 = vmatpush1.msra.mxu0 %v2161
        %2224 = vmatprep.subr.mxu0 0.0
        %2225 = vmatpush1.msra.mxu0 %v2162
        %2226 = vmatprep.subr.mxu0 0.0
        %2227 = vmatpush1.msra.mxu0 %v2163
        %2228 = vmatprep.subr.mxu0 0.0
        %2229 = vmatpush1.msra.mxu0 %v2164
        %2230 = vmatprep.subr.mxu0 0.0
        %2231 = vmatpush1.msra.mxu0 %v2165
        %2232 = vmatprep.subr.mxu0 0.0
        %2233 = vmatpush1.msra.mxu0 %v2166
        %2234 = vmatprep.subr.mxu0 0.0
        %2235 = vmatpush1.msra.mxu0 %v2167
        %2236 = vmatprep.mubr.f32.mxu0 %v2169
        %2237 = vmatmul.mubr.f32.gmra.mrb[0].mxu0 %v2168
        %v2238 = vpop.f32.mrb[0].mxu0
        %v2239 = vadd.f32 0.0, %v2238
        %v2240 = vpop.f32.mrb[0].mxu0
        %2241 = vdwg.mxu0
        %v2242 = vadd.f32 %v2100, %v2239
        %s2243 = scalar_lea.vmem [#allocation6], 384
        %v2244 = vld [vmem:[%s2243] sm:$0xf]
        %v2245 = vld [vmem:[%s2243 + $0x4] sm:$0xf]
        %v2246 = vld [vmem:[%s2243 + $0x8] sm:$0xf]
        %v2247 = vld [vmem:[%s2243 + $0xc] sm:$0xf]
        %v2248 = vld [vmem:[%s2243 + $0x10] sm:$0xf]
        %v2249 = vld [vmem:[%s2243 + $0x14] sm:$0xf]
        %v2250 = vld [vmem:[%s2243 + $0x18] sm:$0xf]
        %v2251 = vld [vmem:[%s2243 + $0x1c] sm:$0xf]
        %v2252 = vld [vmem:[%s2243 + $0x20] sm:$0xf]
        %v2253 = vld [vmem:[%s2243 + $0x24] sm:$0xf]
        %v2254 = vld [vmem:[%s2243 + $0x28] sm:$0xf]
        %v2255 = vld [vmem:[%s2243 + $0x2c] sm:$0xf]
        %v2256 = vld [vmem:[%s2243 + $0x30] sm:$0xf]
        %v2257 = vld [vmem:[%s2243 + $0x34] sm:$0xf]
        %v2258 = vld [vmem:[%s2243 + $0x38] sm:$0xf]
        %v2259 = vld [vmem:[%s2243 + $0x3c] sm:$0xf]
        %v2260 = vld [vmem:[%s2243 + $0x40] sm:$0xf]
        %v2261 = vld [vmem:[%s2243 + $0x44] sm:$0xf]
        %v2262 = vld [vmem:[%s2243 + $0x48] sm:$0xf]
        %v2263 = vld [vmem:[%s2243 + $0x4c] sm:$0xf]
        %v2264 = vld [vmem:[%s2243 + $0x50] sm:$0xf]
        %v2265 = vld [vmem:[%s2243 + $0x54] sm:$0xf]
        %v2266 = vld [vmem:[%s2243 + $0x58] sm:$0xf]
        %v2267 = vld [vmem:[%s2243 + $0x5c] sm:$0xf]
        %v2268 = vld [vmem:[%s2243 + $0x60] sm:$0xf]
        %v2269 = vld [vmem:[%s2243 + $0x64] sm:$0xf]
        %v2270 = vld [vmem:[%s2243 + $0x68] sm:$0xf]
        %v2271 = vld [vmem:[%s2243 + $0x6c] sm:$0xf]
        %v2272 = vld [vmem:[%s2243 + $0x70] sm:$0xf]
        %v2273 = vld [vmem:[%s2243 + $0x74] sm:$0xf]
        %v2274 = vld [vmem:[%s2243 + $0x78] sm:$0xf]
        %v2275 = vld [vmem:[%s2243 + $0x7c] sm:$0xf]
        %v2276 = vunpack.c.l.bf16 %v2244
        %v2277 = vunpack.c.l.bf16 %v2245
        %v2278 = vunpack.c.l.bf16 %v2246
        %v2279 = vunpack.c.l.bf16 %v2247
        %v2280 = vunpack.c.l.bf16 %v2248
        %v2281 = vunpack.c.l.bf16 %v2249
        %v2282 = vunpack.c.l.bf16 %v2250
        %v2283 = vunpack.c.l.bf16 %v2251
        %v2284 = vunpack.c.l.bf16 %v2252
        %v2285 = vunpack.c.l.bf16 %v2253
        %v2286 = vunpack.c.l.bf16 %v2254
        %v2287 = vunpack.c.l.bf16 %v2255
        %v2288 = vunpack.c.l.bf16 %v2256
        %v2289 = vunpack.c.l.bf16 %v2257
        %v2290 = vunpack.c.l.bf16 %v2258
        %v2291 = vunpack.c.l.bf16 %v2259
        %v2292 = vunpack.c.l.bf16 %v2260
        %v2293 = vunpack.c.l.bf16 %v2261
        %v2294 = vunpack.c.l.bf16 %v2262
        %v2295 = vunpack.c.l.bf16 %v2263
        %v2296 = vunpack.c.l.bf16 %v2264
        %v2297 = vunpack.c.l.bf16 %v2265
        %v2298 = vunpack.c.l.bf16 %v2266
        %v2299 = vunpack.c.l.bf16 %v2267
        %v2300 = vunpack.c.l.bf16 %v2268
        %v2301 = vunpack.c.l.bf16 %v2269
        %v2302 = vunpack.c.l.bf16 %v2270
        %v2303 = vunpack.c.l.bf16 %v2271
        %v2304 = vunpack.c.l.bf16 %v2272
        %v2305 = vunpack.c.l.bf16 %v2273
        %v2306 = vunpack.c.l.bf16 %v2274
        %v2307 = vunpack.c.l.bf16 %v2275
        %v2308 = vrot.slane %v1826, 6
        %v2309 = vrot.slane %v1827, 6
        %2312 = vmatprep.subr.mxu0 0.0
        %2313 = vmatpush1.msra.mxu0 %v2276
        %2314 = vmatprep.subr.mxu0 0.0
        %2315 = vmatpush1.msra.mxu0 %v2277
        %2316 = vmatprep.subr.mxu0 0.0
        %2317 = vmatpush1.msra.mxu0 %v2278
        %2318 = vmatprep.subr.mxu0 0.0
        %2319 = vmatpush1.msra.mxu0 %v2279
        %2320 = vmatprep.subr.mxu0 0.0
        %2321 = vmatpush1.msra.mxu0 %v2280
        %2322 = vmatprep.subr.mxu0 0.0
        %2323 = vmatpush1.msra.mxu0 %v2281
        %2324 = vmatprep.subr.mxu0 0.0
        %2325 = vmatpush1.msra.mxu0 %v2282
        %2326 = vmatprep.subr.mxu0 0.0
        %2327 = vmatpush1.msra.mxu0 %v2283
        %2328 = vmatprep.subr.mxu0 0.0
        %2329 = vmatpush1.msra.mxu0 %v2284
        %2330 = vmatprep.subr.mxu0 0.0
        %2331 = vmatpush1.msra.mxu0 %v2285
        %2332 = vmatprep.subr.mxu0 0.0
        %2333 = vmatpush1.msra.mxu0 %v2286
        %2334 = vmatprep.subr.mxu0 0.0
        %2335 = vmatpush1.msra.mxu0 %v2287
        %2336 = vmatprep.subr.mxu0 0.0
        %2337 = vmatpush1.msra.mxu0 %v2288
        %2338 = vmatprep.subr.mxu0 0.0
        %2339 = vmatpush1.msra.mxu0 %v2289
        %2340 = vmatprep.subr.mxu0 0.0
        %2341 = vmatpush1.msra.mxu0 %v2290
        %2342 = vmatprep.subr.mxu0 0.0
        %2343 = vmatpush1.msra.mxu0 %v2291
        %2344 = vmatprep.subr.mxu0 0.0
        %2345 = vmatpush1.msra.mxu0 %v2292
        %2346 = vmatprep.subr.mxu0 0.0
        %2347 = vmatpush1.msra.mxu0 %v2293
        %2348 = vmatprep.subr.mxu0 0.0
        %2349 = vmatpush1.msra.mxu0 %v2294
        %2350 = vmatprep.subr.mxu0 0.0
        %2351 = vmatpush1.msra.mxu0 %v2295
        %2352 = vmatprep.subr.mxu0 0.0
        %2353 = vmatpush1.msra.mxu0 %v2296
        %2354 = vmatprep.subr.mxu0 0.0
        %2355 = vmatpush1.msra.mxu0 %v2297
        %2356 = vmatprep.subr.mxu0 0.0
        %2357 = vmatpush1.msra.mxu0 %v2298
        %2358 = vmatprep.subr.mxu0 0.0
        %2359 = vmatpush1.msra.mxu0 %v2299
        %2360 = vmatprep.subr.mxu0 0.0
        %2361 = vmatpush1.msra.mxu0 %v2300
        %2362 = vmatprep.subr.mxu0 0.0
        %2363 = vmatpush1.msra.mxu0 %v2301
        %2364 = vmatprep.subr.mxu0 0.0
        %2365 = vmatpush1.msra.mxu0 %v2302
        %2366 = vmatprep.subr.mxu0 0.0
        %2367 = vmatpush1.msra.mxu0 %v2303
        %2368 = vmatprep.subr.mxu0 0.0
        %2369 = vmatpush1.msra.mxu0 %v2304
        %2370 = vmatprep.subr.mxu0 0.0
        %2371 = vmatpush1.msra.mxu0 %v2305
        %2372 = vmatprep.subr.mxu0 0.0
        %2373 = vmatpush1.msra.mxu0 %v2306
        %2374 = vmatprep.subr.mxu0 0.0
        %2375 = vmatpush1.msra.mxu0 %v2307
        %2376 = vmatprep.mubr.f32.mxu0 %v2309
        %2377 = vmatmul.mubr.f32.gmra.mrb[0].mxu0 %v2308
        %v2378 = vpop.f32.mrb[0].mxu0
        %v2379 = vadd.f32 0.0, %v2378
        %v2380 = vpop.f32.mrb[0].mxu0
        %2381 = vdwg.mxu0
        %v2382 = vadd.f32 %v2242, %v2379
        %v2385 = vrot.slane %v1818, 1
        %v2386 = vrot.slane %v1819, 1
        %v2389 = vmax.f32 %v1818, %v2385
        %v2390 = vmax.f32 %v1819, %v2386
        %s2391 = scalar_lea.vmem [#allocation6], 512
        %v2392 = vld [vmem:[%s2391] sm:$0xf]
        %v2393 = vld [vmem:[%s2391 + $0x4] sm:$0xf]
        %v2394 = vld [vmem:[%s2391 + $0x8] sm:$0xf]
        %v2395 = vld [vmem:[%s2391 + $0xc] sm:$0xf]
        %v2396 = vld [vmem:[%s2391 + $0x10] sm:$0xf]
        %v2397 = vld [vmem:[%s2391 + $0x14] sm:$0xf]
        %v2398 = vld [vmem:[%s2391 + $0x18] sm:$0xf]
        %v2399 = vld [vmem:[%s2391 + $0x1c] sm:$0xf]
        %v2400 = vld [vmem:[%s2391 + $0x20] sm:$0xf]
        %v2401 = vld [vmem:[%s2391 + $0x24] sm:$0xf]
        %v2402 = vld [vmem:[%s2391 + $0x28] sm:$0xf]
        %v2403 = vld [vmem:[%s2391 + $0x2c] sm:$0xf]
        %v2404 = vld [vmem:[%s2391 + $0x30] sm:$0xf]
        %v2405 = vld [vmem:[%s2391 + $0x34] sm:$0xf]
        %v2406 = vld [vmem:[%s2391 + $0x38] sm:$0xf]
        %v2407 = vld [vmem:[%s2391 + $0x3c] sm:$0xf]
        %v2408 = vld [vmem:[%s2391 + $0x40] sm:$0xf]
        %v2409 = vld [vmem:[%s2391 + $0x44] sm:$0xf]
        %v2410 = vld [vmem:[%s2391 + $0x48] sm:$0xf]
        %v2411 = vld [vmem:[%s2391 + $0x4c] sm:$0xf]
        %v2412 = vld [vmem:[%s2391 + $0x50] sm:$0xf]
        %v2413 = vld [vmem:[%s2391 + $0x54] sm:$0xf]
        %v2414 = vld [vmem:[%s2391 + $0x58] sm:$0xf]
        %v2415 = vld [vmem:[%s2391 + $0x5c] sm:$0xf]
        %v2416 = vld [vmem:[%s2391 + $0x60] sm:$0xf]
        %v2417 = vld [vmem:[%s2391 + $0x64] sm:$0xf]
        %v2418 = vld [vmem:[%s2391 + $0x68] sm:$0xf]
        %v2419 = vld [vmem:[%s2391 + $0x6c] sm:$0xf]
        %v2420 = vld [vmem:[%s2391 + $0x70] sm:$0xf]
        %v2421 = vld [vmem:[%s2391 + $0x74] sm:$0xf]
        %v2422 = vld [vmem:[%s2391 + $0x78] sm:$0xf]
        %v2423 = vld [vmem:[%s2391 + $0x7c] sm:$0xf]
        %v2424 = vunpack.c.l.bf16 %v2392
        %v2425 = vunpack.c.l.bf16 %v2393
        %v2426 = vunpack.c.l.bf16 %v2394
        %v2427 = vunpack.c.l.bf16 %v2395
        %v2428 = vunpack.c.l.bf16 %v2396
        %v2429 = vunpack.c.l.bf16 %v2397
        %v2430 = vunpack.c.l.bf16 %v2398
        %v2431 = vunpack.c.l.bf16 %v2399
        %v2432 = vunpack.c.l.bf16 %v2400
        %v2433 = vunpack.c.l.bf16 %v2401
        %v2434 = vunpack.c.l.bf16 %v2402
        %v2435 = vunpack.c.l.bf16 %v2403
        %v2436 = vunpack.c.l.bf16 %v2404
        %v2437 = vunpack.c.l.bf16 %v2405
        %v2438 = vunpack.c.l.bf16 %v2406
        %v2439 = vunpack.c.l.bf16 %v2407
        %v2440 = vunpack.c.l.bf16 %v2408
        %v2441 = vunpack.c.l.bf16 %v2409
        %v2442 = vunpack.c.l.bf16 %v2410
        %v2443 = vunpack.c.l.bf16 %v2411
        %v2444 = vunpack.c.l.bf16 %v2412
        %v2445 = vunpack.c.l.bf16 %v2413
        %v2446 = vunpack.c.l.bf16 %v2414
        %v2447 = vunpack.c.l.bf16 %v2415
        %v2448 = vunpack.c.l.bf16 %v2416
        %v2449 = vunpack.c.l.bf16 %v2417
        %v2450 = vunpack.c.l.bf16 %v2418
        %v2451 = vunpack.c.l.bf16 %v2419
        %v2452 = vunpack.c.l.bf16 %v2420
        %v2453 = vunpack.c.l.bf16 %v2421
        %v2454 = vunpack.c.l.bf16 %v2422
        %v2455 = vunpack.c.l.bf16 %v2423
        %2456 = vmatprep.subr.mxu0 0.0
        %2457 = vmatpush1.msra.mxu0 %v2424
        %2458 = vmatprep.subr.mxu0 0.0
        %2459 = vmatpush1.msra.mxu0 %v2425
        %2460 = vmatprep.subr.mxu0 0.0
        %2461 = vmatpush1.msra.mxu0 %v2426
        %2462 = vmatprep.subr.mxu0 0.0
        %2463 = vmatpush1.msra.mxu0 %v2427
        %2464 = vmatprep.subr.mxu0 0.0
        %2465 = vmatpush1.msra.mxu0 %v2428
        %2466 = vmatprep.subr.mxu0 0.0
        %2467 = vmatpush1.msra.mxu0 %v2429
        %2468 = vmatprep.subr.mxu0 0.0
        %2469 = vmatpush1.msra.mxu0 %v2430
        %2470 = vmatprep.subr.mxu0 0.0
        %2471 = vmatpush1.msra.mxu0 %v2431
        %2472 = vmatprep.subr.mxu0 0.0
        %2473 = vmatpush1.msra.mxu0 %v2432
        %2474 = vmatprep.subr.mxu0 0.0
        %2475 = vmatpush1.msra.mxu0 %v2433
        %2476 = vmatprep.subr.mxu0 0.0
        %2477 = vmatpush1.msra.mxu0 %v2434
        %2478 = vmatprep.subr.mxu0 0.0
        %2479 = vmatpush1.msra.mxu0 %v2435
        %2480 = vmatprep.subr.mxu0 0.0
        %2481 = vmatpush1.msra.mxu0 %v2436
        %2482 = vmatprep.subr.mxu0 0.0
        %2483 = vmatpush1.msra.mxu0 %v2437
        %2484 = vmatprep.subr.mxu0 0.0
        %2485 = vmatpush1.msra.mxu0 %v2438
        %2486 = vmatprep.subr.mxu0 0.0
        %2487 = vmatpush1.msra.mxu0 %v2439
        %2488 = vmatprep.subr.mxu0 0.0
        %2489 = vmatpush1.msra.mxu0 %v2440
        %2490 = vmatprep.subr.mxu0 0.0
        %2491 = vmatpush1.msra.mxu0 %v2441
        %2492 = vmatprep.subr.mxu0 0.0
        %2493 = vmatpush1.msra.mxu0 %v2442
        %2494 = vmatprep.subr.mxu0 0.0
        %2495 = vmatpush1.msra.mxu0 %v2443
        %2496 = vmatprep.subr.mxu0 0.0
        %2497 = vmatpush1.msra.mxu0 %v2444
        %2498 = vmatprep.subr.mxu0 0.0
        %2499 = vmatpush1.msra.mxu0 %v2445
        %2500 = vmatprep.subr.mxu0 0.0
        %2501 = vmatpush1.msra.mxu0 %v2446
        %2502 = vmatprep.subr.mxu0 0.0
        %2503 = vmatpush1.msra.mxu0 %v2447
        %2504 = vmatprep.subr.mxu0 0.0
        %2505 = vmatpush1.msra.mxu0 %v2448
        %2506 = vmatprep.subr.mxu0 0.0
        %2507 = vmatpush1.msra.mxu0 %v2449
        %2508 = vmatprep.subr.mxu0 0.0
        %2509 = vmatpush1.msra.mxu0 %v2450
        %2510 = vmatprep.subr.mxu0 0.0
        %2511 = vmatpush1.msra.mxu0 %v2451
        %2512 = vmatprep.subr.mxu0 0.0
        %2513 = vmatpush1.msra.mxu0 %v2452
        %2514 = vmatprep.subr.mxu0 0.0
        %2515 = vmatpush1.msra.mxu0 %v2453
        %2516 = vmatprep.subr.mxu0 0.0
        %2517 = vmatpush1.msra.mxu0 %v2454
        %2518 = vmatprep.subr.mxu0 0.0
        %2519 = vmatpush1.msra.mxu0 %v2455
        %2520 = vmatprep.mubr.f32.mxu0 %v2390
        %2521 = vmatmul.mubr.f32.gmra.mrb[0].mxu0 %v2389
        %v2522 = vpop.f32.mrb[0].mxu0
        %v2523 = vadd.f32 0.0, %v2522
        %v2524 = vpop.f32.mrb[0].mxu0
        %2525 = vdwg.mxu0
        %v2526 = vadd.f32 %v2382, %v2523
        %s2527 = scalar_lea.vmem [#allocation6], 640
        %v2528 = vld [vmem:[%s2527] sm:$0xf]
        %v2529 = vld [vmem:[%s2527 + $0x4] sm:$0xf]
        %v2530 = vld [vmem:[%s2527 + $0x8] sm:$0xf]
        %v2531 = vld [vmem:[%s2527 + $0xc] sm:$0xf]
        %v2532 = vld [vmem:[%s2527 + $0x10] sm:$0xf]
        %v2533 = vld [vmem:[%s2527 + $0x14] sm:$0xf]
        %v2534 = vld [vmem:[%s2527 + $0x18] sm:$0xf]
        %v2535 = vld [vmem:[%s2527 + $0x1c] sm:$0xf]
        %v2536 = vld [vmem:[%s2527 + $0x20] sm:$0xf]
        %v2537 = vld [vmem:[%s2527 + $0x24] sm:$0xf]
        %v2538 = vld [vmem:[%s2527 + $0x28] sm:$0xf]
        %v2539 = vld [vmem:[%s2527 + $0x2c] sm:$0xf]
        %v2540 = vld [vmem:[%s2527 + $0x30] sm:$0xf]
        %v2541 = vld [vmem:[%s2527 + $0x34] sm:$0xf]
        %v2542 = vld [vmem:[%s2527 + $0x38] sm:$0xf]
        %v2543 = vld [vmem:[%s2527 + $0x3c] sm:$0xf]
        %v2544 = vld [vmem:[%s2527 + $0x40] sm:$0xf]
        %v2545 = vld [vmem:[%s2527 + $0x44] sm:$0xf]
        %v2546 = vld [vmem:[%s2527 + $0x48] sm:$0xf]
        %v2547 = vld [vmem:[%s2527 + $0x4c] sm:$0xf]
        %v2548 = vld [vmem:[%s2527 + $0x50] sm:$0xf]
        %v2549 = vld [vmem:[%s2527 + $0x54] sm:$0xf]
        %v2550 = vld [vmem:[%s2527 + $0x58] sm:$0xf]
        %v2551 = vld [vmem:[%s2527 + $0x5c] sm:$0xf]
        %v2552 = vld [vmem:[%s2527 + $0x60] sm:$0xf]
        %v2553 = vld [vmem:[%s2527 + $0x64] sm:$0xf]
        %v2554 = vld [vmem:[%s2527 + $0x68] sm:$0xf]
        %v2555 = vld [vmem:[%s2527 + $0x6c] sm:$0xf]
        %v2556 = vld [vmem:[%s2527 + $0x70] sm:$0xf]
        %v2557 = vld [vmem:[%s2527 + $0x74] sm:$0xf]
        %v2558 = vld [vmem:[%s2527 + $0x78] sm:$0xf]
        %v2559 = vld [vmem:[%s2527 + $0x7c] sm:$0xf]
        %v2560 = vunpack.c.l.bf16 %v2528
        %v2561 = vunpack.c.l.bf16 %v2529
        %v2562 = vunpack.c.l.bf16 %v2530
        %v2563 = vunpack.c.l.bf16 %v2531
        %v2564 = vunpack.c.l.bf16 %v2532
        %v2565 = vunpack.c.l.bf16 %v2533
        %v2566 = vunpack.c.l.bf16 %v2534
        %v2567 = vunpack.c.l.bf16 %v2535
        %v2568 = vunpack.c.l.bf16 %v2536
        %v2569 = vunpack.c.l.bf16 %v2537
        %v2570 = vunpack.c.l.bf16 %v2538
        %v2571 = vunpack.c.l.bf16 %v2539
        %v2572 = vunpack.c.l.bf16 %v2540
        %v2573 = vunpack.c.l.bf16 %v2541
        %v2574 = vunpack.c.l.bf16 %v2542
        %v2575 = vunpack.c.l.bf16 %v2543
        %v2576 = vunpack.c.l.bf16 %v2544
        %v2577 = vunpack.c.l.bf16 %v2545
        %v2578 = vunpack.c.l.bf16 %v2546
        %v2579 = vunpack.c.l.bf16 %v2547
        %v2580 = vunpack.c.l.bf16 %v2548
        %v2581 = vunpack.c.l.bf16 %v2549
        %v2582 = vunpack.c.l.bf16 %v2550
        %v2583 = vunpack.c.l.bf16 %v2551
        %v2584 = vunpack.c.l.bf16 %v2552
        %v2585 = vunpack.c.l.bf16 %v2553
        %v2586 = vunpack.c.l.bf16 %v2554
        %v2587 = vunpack.c.l.bf16 %v2555
        %v2588 = vunpack.c.l.bf16 %v2556
        %v2589 = vunpack.c.l.bf16 %v2557
        %v2590 = vunpack.c.l.bf16 %v2558
        %v2591 = vunpack.c.l.bf16 %v2559
        %v2594 = vrot.slane %v2389, 2
        %v2595 = vrot.slane %v2390, 2
        %2598 = vmatprep.subr.mxu0 0.0
        %2599 = vmatpush1.msra.mxu0 %v2560
        %2600 = vmatprep.subr.mxu0 0.0
        %2601 = vmatpush1.msra.mxu0 %v2561
        %2602 = vmatprep.subr.mxu0 0.0
        %2603 = vmatpush1.msra.mxu0 %v2562
        %2604 = vmatprep.subr.mxu0 0.0
        %2605 = vmatpush1.msra.mxu0 %v2563
        %2606 = vmatprep.subr.mxu0 0.0
        %2607 = vmatpush1.msra.mxu0 %v2564
        %2608 = vmatprep.subr.mxu0 0.0
        %2609 = vmatpush1.msra.mxu0 %v2565
        %2610 = vmatprep.subr.mxu0 0.0
        %2611 = vmatpush1.msra.mxu0 %v2566
        %2612 = vmatprep.subr.mxu0 0.0
        %2613 = vmatpush1.msra.mxu0 %v2567
        %2614 = vmatprep.subr.mxu0 0.0
        %2615 = vmatpush1.msra.mxu0 %v2568
        %2616 = vmatprep.subr.mxu0 0.0
        %2617 = vmatpush1.msra.mxu0 %v2569
        %2618 = vmatprep.subr.mxu0 0.0
        %2619 = vmatpush1.msra.mxu0 %v2570
        %2620 = vmatprep.subr.mxu0 0.0
        %2621 = vmatpush1.msra.mxu0 %v2571
        %2622 = vmatprep.subr.mxu0 0.0
        %2623 = vmatpush1.msra.mxu0 %v2572
        %2624 = vmatprep.subr.mxu0 0.0
        %2625 = vmatpush1.msra.mxu0 %v2573
        %2626 = vmatprep.subr.mxu0 0.0
        %2627 = vmatpush1.msra.mxu0 %v2574
        %2628 = vmatprep.subr.mxu0 0.0
        %2629 = vmatpush1.msra.mxu0 %v2575
        %2630 = vmatprep.subr.mxu0 0.0
        %2631 = vmatpush1.msra.mxu0 %v2576
        %2632 = vmatprep.subr.mxu0 0.0
        %2633 = vmatpush1.msra.mxu0 %v2577
        %2634 = vmatprep.subr.mxu0 0.0
        %2635 = vmatpush1.msra.mxu0 %v2578
        %2636 = vmatprep.subr.mxu0 0.0
        %2637 = vmatpush1.msra.mxu0 %v2579
        %2638 = vmatprep.subr.mxu0 0.0
        %2639 = vmatpush1.msra.mxu0 %v2580
        %2640 = vmatprep.subr.mxu0 0.0
        %2641 = vmatpush1.msra.mxu0 %v2581
        %2642 = vmatprep.subr.mxu0 0.0
        %2643 = vmatpush1.msra.mxu0 %v2582
        %2644 = vmatprep.subr.mxu0 0.0
        %2645 = vmatpush1.msra.mxu0 %v2583
        %2646 = vmatprep.subr.mxu0 0.0
        %2647 = vmatpush1.msra.mxu0 %v2584
        %2648 = vmatprep.subr.mxu0 0.0
        %2649 = vmatpush1.msra.mxu0 %v2585
        %2650 = vmatprep.subr.mxu0 0.0
        %2651 = vmatpush1.msra.mxu0 %v2586
        %2652 = vmatprep.subr.mxu0 0.0
        %2653 = vmatpush1.msra.mxu0 %v2587
        %2654 = vmatprep.subr.mxu0 0.0
        %2655 = vmatpush1.msra.mxu0 %v2588
        %2656 = vmatprep.subr.mxu0 0.0
        %2657 = vmatpush1.msra.mxu0 %v2589
        %2658 = vmatprep.subr.mxu0 0.0
        %2659 = vmatpush1.msra.mxu0 %v2590
        %2660 = vmatprep.subr.mxu0 0.0
        %2661 = vmatpush1.msra.mxu0 %v2591
        %2662 = vmatprep.mubr.f32.mxu0 %v2595
        %2663 = vmatmul.mubr.f32.gmra.mrb[0].mxu0 %v2594
        %v2664 = vpop.f32.mrb[0].mxu0
        %v2665 = vadd.f32 0.0, %v2664
        %v2666 = vpop.f32.mrb[0].mxu0
        %2667 = vdwg.mxu0
        %v2668 = vadd.f32 %v2526, %v2665
        %s2669 = scalar_lea.vmem [#allocation6], 768
        %v2670 = vld [vmem:[%s2669] sm:$0xf]
        %v2671 = vld [vmem:[%s2669 + $0x4] sm:$0xf]
        %v2672 = vld [vmem:[%s2669 + $0x8] sm:$0xf]
        %v2673 = vld [vmem:[%s2669 + $0xc] sm:$0xf]
        %v2674 = vld [vmem:[%s2669 + $0x10] sm:$0xf]
        %v2675 = vld [vmem:[%s2669 + $0x14] sm:$0xf]
        %v2676 = vld [vmem:[%s2669 + $0x18] sm:$0xf]
        %v2677 = vld [vmem:[%s2669 + $0x1c] sm:$0xf]
        %v2678 = vld [vmem:[%s2669 + $0x20] sm:$0xf]
        %v2679 = vld [vmem:[%s2669 + $0x24] sm:$0xf]
        %v2680 = vld [vmem:[%s2669 + $0x28] sm:$0xf]
        %v2681 = vld [vmem:[%s2669 + $0x2c] sm:$0xf]
        %v2682 = vld [vmem:[%s2669 + $0x30] sm:$0xf]
        %v2683 = vld [vmem:[%s2669 + $0x34] sm:$0xf]
        %v2684 = vld [vmem:[%s2669 + $0x38] sm:$0xf]
        %v2685 = vld [vmem:[%s2669 + $0x3c] sm:$0xf]
        %v2686 = vld [vmem:[%s2669 + $0x40] sm:$0xf]
        %v2687 = vld [vmem:[%s2669 + $0x44] sm:$0xf]
        %v2688 = vld [vmem:[%s2669 + $0x48] sm:$0xf]
        %v2689 = vld [vmem:[%s2669 + $0x4c] sm:$0xf]
        %v2690 = vld [vmem:[%s2669 + $0x50] sm:$0xf]
        %v2691 = vld [vmem:[%s2669 + $0x54] sm:$0xf]
        %v2692 = vld [vmem:[%s2669 + $0x58] sm:$0xf]
        %v2693 = vld [vmem:[%s2669 + $0x5c] sm:$0xf]
        %v2694 = vld [vmem:[%s2669 + $0x60] sm:$0xf]
        %v2695 = vld [vmem:[%s2669 + $0x64] sm:$0xf]
        %v2696 = vld [vmem:[%s2669 + $0x68] sm:$0xf]
        %v2697 = vld [vmem:[%s2669 + $0x6c] sm:$0xf]
        %v2698 = vld [vmem:[%s2669 + $0x70] sm:$0xf]
        %v2699 = vld [vmem:[%s2669 + $0x74] sm:$0xf]
        %v2700 = vld [vmem:[%s2669 + $0x78] sm:$0xf]
        %v2701 = vld [vmem:[%s2669 + $0x7c] sm:$0xf]
        %v2702 = vunpack.c.l.bf16 %v2670
        %v2703 = vunpack.c.l.bf16 %v2671
        %v2704 = vunpack.c.l.bf16 %v2672
        %v2705 = vunpack.c.l.bf16 %v2673
        %v2706 = vunpack.c.l.bf16 %v2674
        %v2707 = vunpack.c.l.bf16 %v2675
        %v2708 = vunpack.c.l.bf16 %v2676
        %v2709 = vunpack.c.l.bf16 %v2677
        %v2710 = vunpack.c.l.bf16 %v2678
        %v2711 = vunpack.c.l.bf16 %v2679
        %v2712 = vunpack.c.l.bf16 %v2680
        %v2713 = vunpack.c.l.bf16 %v2681
        %v2714 = vunpack.c.l.bf16 %v2682
        %v2715 = vunpack.c.l.bf16 %v2683
        %v2716 = vunpack.c.l.bf16 %v2684
        %v2717 = vunpack.c.l.bf16 %v2685
        %v2718 = vunpack.c.l.bf16 %v2686
        %v2719 = vunpack.c.l.bf16 %v2687
        %v2720 = vunpack.c.l.bf16 %v2688
        %v2721 = vunpack.c.l.bf16 %v2689
        %v2722 = vunpack.c.l.bf16 %v2690
        %v2723 = vunpack.c.l.bf16 %v2691
        %v2724 = vunpack.c.l.bf16 %v2692
        %v2725 = vunpack.c.l.bf16 %v2693
        %v2726 = vunpack.c.l.bf16 %v2694
        %v2727 = vunpack.c.l.bf16 %v2695
        %v2728 = vunpack.c.l.bf16 %v2696
        %v2729 = vunpack.c.l.bf16 %v2697
        %v2730 = vunpack.c.l.bf16 %v2698
        %v2731 = vunpack.c.l.bf16 %v2699
        %v2732 = vunpack.c.l.bf16 %v2700
        %v2733 = vunpack.c.l.bf16 %v2701
        %v2734 = vrot.slane %v2389, 4
        %v2735 = vrot.slane %v2390, 4
        %2738 = vmatprep.subr.mxu0 0.0
        %2739 = vmatpush1.msra.mxu0 %v2702
        %2740 = vmatprep.subr.mxu0 0.0
        %2741 = vmatpush1.msra.mxu0 %v2703
        %2742 = vmatprep.subr.mxu0 0.0
        %2743 = vmatpush1.msra.mxu0 %v2704
        %2744 = vmatprep.subr.mxu0 0.0
        %2745 = vmatpush1.msra.mxu0 %v2705
        %2746 = vmatprep.subr.mxu0 0.0
        %2747 = vmatpush1.msra.mxu0 %v2706
        %2748 = vmatprep.subr.mxu0 0.0
        %2749 = vmatpush1.msra.mxu0 %v2707
        %2750 = vmatprep.subr.mxu0 0.0
        %2751 = vmatpush1.msra.mxu0 %v2708
        %2752 = vmatprep.subr.mxu0 0.0
        %2753 = vmatpush1.msra.mxu0 %v2709
        %2754 = vmatprep.subr.mxu0 0.0
        %2755 = vmatpush1.msra.mxu0 %v2710
        %2756 = vmatprep.subr.mxu0 0.0
        %2757 = vmatpush1.msra.mxu0 %v2711
        %2758 = vmatprep.subr.mxu0 0.0
        %2759 = vmatpush1.msra.mxu0 %v2712
        %2760 = vmatprep.subr.mxu0 0.0
        %2761 = vmatpush1.msra.mxu0 %v2713
        %2762 = vmatprep.subr.mxu0 0.0
        %2763 = vmatpush1.msra.mxu0 %v2714
        %2764 = vmatprep.subr.mxu0 0.0
        %2765 = vmatpush1.msra.mxu0 %v2715
        %2766 = vmatprep.subr.mxu0 0.0
        %2767 = vmatpush1.msra.mxu0 %v2716
        %2768 = vmatprep.subr.mxu0 0.0
        %2769 = vmatpush1.msra.mxu0 %v2717
        %2770 = vmatprep.subr.mxu0 0.0
        %2771 = vmatpush1.msra.mxu0 %v2718
        %2772 = vmatprep.subr.mxu0 0.0
        %2773 = vmatpush1.msra.mxu0 %v2719
        %2774 = vmatprep.subr.mxu0 0.0
        %2775 = vmatpush1.msra.mxu0 %v2720
        %2776 = vmatprep.subr.mxu0 0.0
        %2777 = vmatpush1.msra.mxu0 %v2721
        %2778 = vmatprep.subr.mxu0 0.0
        %2779 = vmatpush1.msra.mxu0 %v2722
        %2780 = vmatprep.subr.mxu0 0.0
        %2781 = vmatpush1.msra.mxu0 %v2723
        %2782 = vmatprep.subr.mxu0 0.0
        %2783 = vmatpush1.msra.mxu0 %v2724
        %2784 = vmatprep.subr.mxu0 0.0
        %2785 = vmatpush1.msra.mxu0 %v2725
        %2786 = vmatprep.subr.mxu0 0.0
        %2787 = vmatpush1.msra.mxu0 %v2726
        %2788 = vmatprep.subr.mxu0 0.0
        %2789 = vmatpush1.msra.mxu0 %v2727
        %2790 = vmatprep.subr.mxu0 0.0
        %2791 = vmatpush1.msra.mxu0 %v2728
        %2792 = vmatprep.subr.mxu0 0.0
        %2793 = vmatpush1.msra.mxu0 %v2729
        %2794 = vmatprep.subr.mxu0 0.0
        %2795 = vmatpush1.msra.mxu0 %v2730
        %2796 = vmatprep.subr.mxu0 0.0
        %2797 = vmatpush1.msra.mxu0 %v2731
        %2798 = vmatprep.subr.mxu0 0.0
        %2799 = vmatpush1.msra.mxu0 %v2732
        %2800 = vmatprep.subr.mxu0 0.0
        %2801 = vmatpush1.msra.mxu0 %v2733
        %2802 = vmatprep.mubr.f32.mxu0 %v2735
        %2803 = vmatmul.mubr.f32.gmra.mrb[0].mxu0 %v2734
        %v2804 = vpop.f32.mrb[0].mxu0
        %v2805 = vadd.f32 0.0, %v2804
        %v2806 = vpop.f32.mrb[0].mxu0
        %2807 = vdwg.mxu0
        %v2808 = vadd.f32 %v2668, %v2805
        %v2809 = vld [vmem:[%s6] sm:$0x1]
        %v2810 = vadd.f32 %v2808, %v2809
        %v2811 = vmax.f32 %v2810, 0.0
        %v2812 = vld [vmem:[%s7] sm:$0xff]
        %v2813 = vld [vmem:[%s7 + $0x8] sm:$0xff]
        %v2814 = vld [vmem:[%s7 + $0x10] sm:$0xff]
        %v2815 = vld [vmem:[%s7 + $0x18] sm:$0xff]
        %v2816 = vld [vmem:[%s7 + $0x20] sm:$0xff]
        %v2817 = vld [vmem:[%s7 + $0x28] sm:$0xff]
        %v2818 = vld [vmem:[%s7 + $0x30] sm:$0xff]
        %v2819 = vld [vmem:[%s7 + $0x38] sm:$0xff]
        %v2820 = vld [vmem:[%s7 + $0x40] sm:$0xff]
        %v2821 = vld [vmem:[%s7 + $0x48] sm:$0xff]
        %v2822 = vld [vmem:[%s7 + $0x50] sm:$0xff]
        %v2823 = vld [vmem:[%s7 + $0x58] sm:$0xff]
        %v2824 = vld [vmem:[%s7 + $0x60] sm:$0xff]
        %v2825 = vld [vmem:[%s7 + $0x68] sm:$0xff]
        %v2826 = vld [vmem:[%s7 + $0x70] sm:$0xff]
        %v2827 = vld [vmem:[%s7 + $0x78] sm:$0xff]
        %v2828 = vld [vmem:[%s8] sm:$0x1]
        %2829 = vmatprep.subr.mxu0 0.0
        %2830 = vmatpush1.msra.mxu0 %v2812
        %2831 = vmatprep.subr.mxu0 0.0
        %2832 = vmatpush1.msra.mxu0 %v2813
        %2833 = vmatprep.subr.mxu0 0.0
        %2834 = vmatpush1.msra.mxu0 %v2814
        %2835 = vmatprep.subr.mxu0 0.0
        %2836 = vmatpush1.msra.mxu0 %v2815
        %2837 = vmatprep.subr.mxu0 0.0
        %2838 = vmatpush1.msra.mxu0 %v2816
        %2839 = vmatprep.subr.mxu0 0.0
        %2840 = vmatpush1.msra.mxu0 %v2817
        %2841 = vmatprep.subr.mxu0 0.0
        %2842 = vmatpush1.msra.mxu0 %v2818
        %2843 = vmatprep.subr.mxu0 0.0
        %2844 = vmatpush1.msra.mxu0 %v2819
        %2845 = vmatprep.subr.mxu0 0.0
        %2846 = vmatpush1.msra.mxu0 %v2820
        %2847 = vmatprep.subr.mxu0 0.0
        %2848 = vmatpush1.msra.mxu0 %v2821
        %2849 = vmatprep.subr.mxu0 0.0
        %2850 = vmatpush1.msra.mxu0 %v2822
        %2851 = vmatprep.subr.mxu0 0.0
        %2852 = vmatpush1.msra.mxu0 %v2823
        %2853 = vmatprep.subr.mxu0 0.0
        %2854 = vmatpush1.msra.mxu0 %v2824
        %2855 = vmatprep.subr.mxu0 0.0
        %2856 = vmatpush1.msra.mxu0 %v2825
        %2857 = vmatprep.subr.mxu0 0.0
        %2858 = vmatpush1.msra.mxu0 %v2826
        %2859 = vmatprep.subr.mxu0 0.0
        %2860 = vmatpush1.msra.mxu0 %v2827
        %2861 = vmatprep.subr.mxu0 0.0
        %2862 = vmatpush1.msra.mxu0 0.0
        %2863 = vmatprep.subr.mxu0 0.0
        %2864 = vmatpush1.msra.mxu0 0.0
        %2865 = vmatprep.subr.mxu0 0.0
        %2866 = vmatpush1.msra.mxu0 0.0
        %2867 = vmatprep.subr.mxu0 0.0
        %2868 = vmatpush1.msra.mxu0 0.0
        %2869 = vmatprep.subr.mxu0 0.0
        %2870 = vmatpush1.msra.mxu0 0.0
        %2871 = vmatprep.subr.mxu0 0.0
        %2872 = vmatpush1.msra.mxu0 0.0
        %2873 = vmatprep.subr.mxu0 0.0
        %2874 = vmatpush1.msra.mxu0 0.0
        %2875 = vmatprep.subr.mxu0 0.0
        %2876 = vmatpush1.msra.mxu0 0.0
        %2877 = vmatprep.subr.mxu0 0.0
        %2878 = vmatpush1.msra.mxu0 0.0
        %2879 = vmatprep.subr.mxu0 0.0
        %2880 = vmatpush1.msra.mxu0 0.0
        %2881 = vmatprep.subr.mxu0 0.0
        %2882 = vmatpush1.msra.mxu0 0.0
        %2883 = vmatprep.subr.mxu0 0.0
        %2884 = vmatpush1.msra.mxu0 0.0
        %2885 = vmatprep.subr.mxu0 0.0
        %2886 = vmatpush1.msra.mxu0 0.0
        %2887 = vmatprep.subr.mxu0 0.0
        %2888 = vmatpush1.msra.mxu0 0.0
        %2889 = vmatprep.subr.mxu0 0.0
        %2890 = vmatpush1.msra.mxu0 0.0
        %2891 = vmatprep.subr.mxu0 0.0
        %2892 = vmatpush1.msra.mxu0 0.0
        %2893 = vmatprep.mubr.f32.mxu0 0.0
        %2894 = vmatmul.mubr.f32.gmra.mrb[0].mxu0 %v2811
        %v2895 = vpop.f32.mrb[0].mxu0
        %v2896 = vadd.f32 %v2828, %v2895
        %v2897 = vpop.f32.mrb[0].mxu0
        %2898 = vdwg.mxu0
        %v2899 = vmax.f32 %v2896, 0.0
        %v2900 = vld [vmem:[%s9] sm:$0xff]
        %v2901 = vld [vmem:[%s9 + $0x8] sm:$0xff]
        %v2902 = vld [vmem:[%s9 + $0x10] sm:$0xff]
        %v2903 = vld [vmem:[%s9 + $0x18] sm:$0xff]
        %v2904 = vld [vmem:[%s9 + $0x20] sm:$0xff]
        %v2905 = vld [vmem:[%s9 + $0x28] sm:$0xff]
        %v2906 = vld [vmem:[%s9 + $0x30] sm:$0xff]
        %v2907 = vld [vmem:[%s9 + $0x38] sm:$0xff]
        %v2908 = vld [vmem:[%s10] sm:$0x1]
        %vm2909 = vcmask 523264
        %v2911 = vsel %vm2909, %v2899, 0
        %2913 = vmatprep.subr.mxu0 0.0
        %2914 = vmatpush1.msra.mxu0 %v2900
        %2915 = vmatprep.subr.mxu0 0.0
        %2916 = vmatpush1.msra.mxu0 %v2901
        %2917 = vmatprep.subr.mxu0 0.0
        %2918 = vmatpush1.msra.mxu0 %v2902
        %2919 = vmatprep.subr.mxu0 0.0
        %2920 = vmatpush1.msra.mxu0 %v2903
        %2921 = vmatprep.subr.mxu0 0.0
        %2922 = vmatpush1.msra.mxu0 %v2904
        %2923 = vmatprep.subr.mxu0 0.0
        %2924 = vmatpush1.msra.mxu0 %v2905
        %2925 = vmatprep.subr.mxu0 0.0
        %2926 = vmatpush1.msra.mxu0 %v2906
        %2927 = vmatprep.subr.mxu0 0.0
        %2928 = vmatpush1.msra.mxu0 %v2907
        %2929 = vmatprep.subr.mxu0 0.0
        %2930 = vmatpush1.msra.mxu0 0.0
        %2931 = vmatprep.subr.mxu0 0.0
        %2932 = vmatpush1.msra.mxu0 0.0
        %2933 = vmatprep.subr.mxu0 0.0
        %2934 = vmatpush1.msra.mxu0 0.0
        %2935 = vmatprep.subr.mxu0 0.0
        %2936 = vmatpush1.msra.mxu0 0.0
        %2937 = vmatprep.subr.mxu0 0.0
        %2938 = vmatpush1.msra.mxu0 0.0
        %2939 = vmatprep.subr.mxu0 0.0
        %2940 = vmatpush1.msra.mxu0 0.0
        %2941 = vmatprep.subr.mxu0 0.0
        %2942 = vmatpush1.msra.mxu0 0.0
        %2943 = vmatprep.subr.mxu0 0.0
        %2944 = vmatpush1.msra.mxu0 0.0
        %2945 = vmatprep.subr.mxu0 0.0
        %2946 = vmatpush1.msra.mxu0 0.0
        %2947 = vmatprep.subr.mxu0 0.0
        %2948 = vmatpush1.msra.mxu0 0.0
        %2949 = vmatprep.subr.mxu0 0.0
        %2950 = vmatpush1.msra.mxu0 0.0
        %2951 = vmatprep.subr.mxu0 0.0
        %2952 = vmatpush1.msra.mxu0 0.0
        %2953 = vmatprep.subr.mxu0 0.0
        %2954 = vmatpush1.msra.mxu0 0.0
        %2955 = vmatprep.subr.mxu0 0.0
        %2956 = vmatpush1.msra.mxu0 0.0
        %2957 = vmatprep.subr.mxu0 0.0
        %2958 = vmatpush1.msra.mxu0 0.0
        %2959 = vmatprep.subr.mxu0 0.0
        %2960 = vmatpush1.msra.mxu0 0.0
        %2961 = vmatprep.subr.mxu0 0.0
        %2962 = vmatpush1.msra.mxu0 0.0
        %2963 = vmatprep.subr.mxu0 0.0
        %2964 = vmatpush1.msra.mxu0 0.0
        %2965 = vmatprep.subr.mxu0 0.0
        %2966 = vmatpush1.msra.mxu0 0.0
        %2967 = vmatprep.subr.mxu0 0.0
        %2968 = vmatpush1.msra.mxu0 0.0
        %2969 = vmatprep.subr.mxu0 0.0
        %2970 = vmatpush1.msra.mxu0 0.0
        %2971 = vmatprep.subr.mxu0 0.0
        %2972 = vmatpush1.msra.mxu0 0.0
        %2973 = vmatprep.subr.mxu0 0.0
        %2974 = vmatpush1.msra.mxu0 0.0
        %2975 = vmatprep.subr.mxu0 0.0
        %2976 = vmatpush1.msra.mxu0 0.0
        %2977 = vmatprep.mubr.f32.mxu0 0.0
        %2978 = vmatmul.mubr.f32.gmra.mrb[0].mxu0 %v2911
        %v2979 = vpop.f32.mrb[0].mxu0
        %v2980 = vadd.f32 %v2908, %v2979
        %v2981 = vpop.f32.mrb[0].mxu0
        %2982 = vdwg.mxu0
        %vm2983 = vcmask 73728
        %2984 = vst.msk [vmem:[%s408] sm:$0x1] %vm2983, %v2980
        %s2985 = sand.u32 %s271, 1
        %s2986 = scalar_lea.sflag [#allocation5], %s2985
        %s2987 = sand.u32 %s271, 1
        %s2988 = scalar_lea.vmem [#allocation8], %s2987
        // Predicated region
        $region73: #{dnn5_forward.1} parent=63 // pred_check
          %p2989 = pneg %p281
        $region74: #{dnn5_forward.1} parent=63 // pred_check_branch
          %2991 = sbr.rel (%p2989) target = $region76
        $region75: #{dnn5_forward.1} parent=63 // pred_region
          %s2993 = ssub.s32 16, 16
          %2994 = vsyncadd %s2986, %s2993
          %s2995 = smul.addr %s27, 16
          %s2996 = scalar_lea.hbm %s11, %s2995
          %s2998 = sshll.u32 %s2988, 4
          %s2999 = int_to_ptr.vmem [resolvable:$true] %s2998
          %3001 = dma.vmem_to_hbm [thread:$0]  %s2999, 16, %s2996, %s2986
        $region76: #{dnn5_forward.1} parent=63 // pred_fallthru
          _
      $region64: #{dnn5_forward.1} parent=5 // pred_fallthru
        _
      %p3002 = scmp.le.s32.totalorder 2, %s22
      // Predicated region
      $region77: #{dnn5_forward.1} parent=5 // pred_check
        %p3003 = pneg %p3002
      $region78: #{dnn5_forward.1} parent=5 // pred_check_branch
        %3005 = sbr.rel (%p3003) target = $region80
      $region79: #{dnn5_forward.1} parent=5 // pred_region
        %s3006 = ssub.s32 %s22, 2
        // Predicated region
        $region81: #{dnn5_forward.1} parent=79 // pred_check
          %p3007 = pneg %p287
        $region82: #{dnn5_forward.1} parent=79 // pred_check_branch
          %3009 = sbr.rel (%p3007) target = $region84
        $region83: #{dnn5_forward.1} parent=79 // pred_region
          %s3010 = sand.u32 %s272, 1
          %s3011 = scalar_lea.sflag [#allocation5], %s3010
          %s3012 = sand.u32 %s272, 1
          %s3013 = scalar_lea.vmem [#allocation8], %s3012
          %3014 = dma.done %s3011, 16
        $region84: #{dnn5_forward.1} parent=79 // pred_fallthru
          _
      $region80: #{dnn5_forward.1} parent=5 // pred_fallthru
        _
    $region6: #{dnn5_forward.1} parent=1 // loop_footer
      %s26 = sadd.s32 1, %s22
    $region7: #{dnn5_forward.1} parent=1 // loop_footer_branch
      %21 = sbr.rel target = $region3
    $region8: #{dnn5_forward.1} parent=1 // loop_exit
      _
    %3015 = vsyncpa [#allocation4], 1
    %s3016 = scalar_lea.sflag [#allocation4], 1
    %3017 = vsyncpa %s3016, 1
    %3018 = vsyncpa [#allocation7], 1
    %3019 = vsyncpa [#allocation5], 1
    %s3020 = scalar_lea.sflag [#allocation5], 1
    %3021 = vsyncpa %s3020, 1

</llo_original>
